<compile_context>
chip_gen: v6e
topology: v6e:2x2x1
jax: 0.10.0
libtpu: 0.0.40
codegen_flags: <defaults>
</compile_context>

<pallas_src>
import jax
import jax.numpy as jnp
from jax.experimental import pallas as pl
from jax.experimental.pallas import tpu as pltpu

BN_EPS = 1e-5
H1, H2, H3 = 512, 128, 64
H3_PAD = 128      # pad the 64-wide layer-3 output to a full lane width
OUT_PAD = 128     # pad num_classes output to a lane-dense 128-wide block


def _mlp_kernel(x_ref,
                w1_ref, f1_ref,
                w2_ref, f2_ref,
                w3_ref, f3_ref,
                w4_ref, b4_ref,
                o_ref):
    # In-kernel cast: x arrives via a single f32 HBM read; the VPU cast hides under MXU work.
    x = x_ref[...].astype(jnp.bfloat16)
    # Layer 1: Linear(emb_dim, 512) + folded BN + ReLU (Dropout = identity in eval mode)
    h = jnp.dot(x, w1_ref[...], preferred_element_type=jnp.float32)
    h = jnp.maximum(h + f1_ref[...], 0.0).astype(jnp.bfloat16)
    # Layer 2: Linear(512, 128) + folded BN + ReLU
    h = jnp.dot(h, w2_ref[...], preferred_element_type=jnp.float32)
    h = jnp.maximum(h + f2_ref[...], 0.0).astype(jnp.bfloat16)
    # Layer 3: Linear(128, 64 -> padded 128) + folded BN + ReLU (padded cols are exactly 0)
    h = jnp.dot(h, w3_ref[...], preferred_element_type=jnp.float32)
    h = jnp.maximum(h + f3_ref[...], 0.0).astype(jnp.bfloat16)
    # Layer 4: Linear(64 -> 128 padded K, num_classes -> 128 padded N), lane-dense store
    y = jnp.dot(h, w4_ref[...], preferred_element_type=jnp.float32) + b4_ref[...]
    o_ref[...] = y.astype(o_ref.dtype)


def _fold_params(params, num_classes):
    """Fold BN affine + Linear bias into the weights, pad small dims, cast weights to bf16."""
    # relu((x @ w + b) * s + t) == relu(x @ (w * s) + (t + b * s))
    w1 = (params["w1"] * params["s1"]).astype(jnp.bfloat16)
    f1 = (params["t1"] + params["b1"] * params["s1"]).astype(jnp.float32)
    w2 = (params["w2"] * params["s2"]).astype(jnp.bfloat16)
    f2 = (params["t2"] + params["b2"] * params["s2"]).astype(jnp.float32)
    w3 = params["w3"] * params["s3"]
    f3 = params["t3"] + params["b3"] * params["s3"]
    # Pad layer-3 output 64 -> 128 (zero weight cols + zero shift => ReLU output is 0 there).
    w3 = jnp.pad(w3, ((0, 0), (0, H3_PAD - H3))).astype(jnp.bfloat16)
    f3 = jnp.pad(f3, ((0, 0), (0, H3_PAD - H3))).astype(jnp.float32)
    # Pad layer-4: K 64 -> 128 (zero rows), N num_classes -> 128 (zero cols + zero bias).
    w4 = jnp.pad(params["w4"],
                 ((0, H3_PAD - H3), (0, OUT_PAD - num_classes))).astype(jnp.bfloat16)
    b4 = jnp.pad(params["b4"], ((0, 0), (0, OUT_PAD - num_classes))).astype(jnp.float32)
    return w1, f1, w2, f2, w3, f3, w4, b4


def _tensorcores_per_device():
    """Best-effort count of TensorCores a 'parallel' grid axis can be sharded across."""
    try:
        kind = getattr(jax.devices()[0], "device_kind", "").lower()
    except Exception:
        return 1
    if "v7" in kind or "v4" in kind or "v5p" in kind:
        return 2
    return 1


def _per_row_vmem_bytes(E, out_itemsize):
    # double-buffered f32 x block + double-buffered out block + live f32/bf16 intermediates
    return (2 * 4 * E) + (2 * out_itemsize * OUT_PAD) + 6 * (H1 + H2 + H3_PAD)


def _choose_block_b(B, E, weight_bytes, n_cores, out_itemsize,
                    block_budget=16 * 1024 * 1024):
    """One tile per TensorCore, multiple of 8, capped so the block footprint fits VMEM."""
    if B <= 8:
        return B                              # full-extent block is always legal
    per_row = _per_row_vmem_bytes(E, out_itemsize)
    avail = max(block_budget - 2 * weight_bytes, 1 << 20)
    max_rows = max(8, (avail // per_row) // 8 * 8)
    bb = -(-B // max(n_cores, 1))             # cdiv: one tile per core on multi-TC chips
    bb = ((bb + 7) // 8) * 8                  # multiple of 8 -> no ragged last tile, legal sublane
    return int(min(bb, max_rows))


def _resident_spec(shape, single_buffer):
    """BlockSpec for an array that is fully resident and identical for every grid step."""
    index_map = lambda i: (0,) * len(shape)
    if single_buffer and hasattr(pl, "Buffered"):
        try:
            # Constant index_map => never re-DMA'd; double-buffering would only waste VMEM.
            return pl.BlockSpec(shape, index_map, pipeline_mode=pl.Buffered(1))
        except TypeError:
            pass
    return pl.BlockSpec(shape, index_map)


def l3_dense_forward(x, params, *, block_b=None, out_dtype=jnp.bfloat16):
    """Runs the full MLP in one Pallas kernel, tiled over the batch dimension."""
    B, E = x.shape
    num_classes = params["w4"].shape[1]
    x = x.astype(jnp.float32)          # no wrapper-side bf16 pass; cast happens in-kernel

    weight_args = _fold_params(params, num_classes)
    weight_bytes = sum(int(a.size) * a.dtype.itemsize for a in weight_args)
    out_itemsize = jnp.dtype(out_dtype).itemsize

    n_cores = _tensorcores_per_device()
    if block_b is None:
        block_b = _choose_block_b(B, E, weight_bytes, n_cores, out_itemsize)
    block_b = max(1, min(int(block_b), B))
    if block_b != B and block_b % 8 != 0:
        block_b = max(8, (block_b // 8) * 8)   # keep the sublane rule satisfied

    grid = (pl.cdiv(B, block_b),)

    # Explicit VMEM budget derived from the actual block sizes (+ headroom for compiler temps).
    per_row = _per_row_vmem_bytes(E, out_itemsize)
    vmem_limit = 2 * weight_bytes + block_b * per_row + (4 << 20)
    vmem_limit = int(min(64 << 20, max(32 << 20, vmem_limit)))

    flops = 2 * B * (E * H1 + H1 * H2 + H2 * H3_PAD + H3_PAD * OUT_PAD)
    bytes_accessed = int(B * E * 4 + weight_bytes + B * OUT_PAD * out_itemsize)

    def build(single_buffer_weights):
        in_specs = [pl.BlockSpec((block_b, E), lambda i: (i, 0))]
        in_specs += [_resident_spec(a.shape, single_buffer_weights) for a in weight_args]
        return pl.pallas_call(
            _mlp_kernel,
            out_shape=jax.ShapeDtypeStruct((B, OUT_PAD), out_dtype),
            grid_spec=pltpu.PrefetchScalarGridSpec(
                num_scalar_prefetch=0,
                grid=grid,
                in_specs=in_specs,
                out_specs=pl.BlockSpec((block_b, OUT_PAD), lambda i: (i, 0)),
            ),
            compiler_params=pltpu.CompilerParams(
                dimension_semantics=("parallel",),
                vmem_limit_bytes=vmem_limit),
            cost_estimate=pl.CostEstimate(
                flops=flops, transcendentals=0, bytes_accessed=bytes_accessed),
        )

    try:
        out = build(True)(x, *weight_args)
    except Exception:
        # pl.Buffered(1) on resident inputs isn't supported by every jax/Mosaic version for the
        # top-level pipeline; fall back to default double-buffering (correctness unaffected).
        out = build(False)(x, *weight_args)

    # Drop the lane padding on the class dim: a tiny (B, num_classes) bf16 slice that fuses with
    # the consumer under jit (the big padded f32 writeback of the previous version is gone).
    return out[:, :num_classes]


def init_params(key, emb_dim, num_classes):
    """Deterministic synthetic parameters matching l3_dense.__init__ shapes."""
    dims = [(emb_dim, H1), (H1, H2), (H2, H3), (H3, num_classes)]
    keys = jax.random.split(key, 16)
    params = {}
    ki = 0
    for li, (fin, fout) in enumerate(dims, start=1):
        bound = 1.0 / jnp.sqrt(fin)
        # nn.Linear default init: U(-1/sqrt(fin), 1/sqrt(fin)); weight stored transposed (in, out).
        w = jax.random.uniform(keys[ki], (fin, fout), jnp.float32, -bound, bound); ki += 1
        b = jax.random.uniform(keys[ki], (1, fout), jnp.float32, -bound, bound); ki += 1
        params[f"w{li}"] = w
        params[f"b{li}"] = b
        if li < 4:
            # BatchNorm1d params / running stats (synthetic but deterministic & nontrivial).
            gamma = 1.0 + 0.1 * jax.random.normal(keys[ki], (1, fout), jnp.float32); ki += 1
            beta = 0.1 * jax.random.normal(keys[ki], (1, fout), jnp.float32); ki += 1
            running_mean = 0.05 * jnp.arange(fout, dtype=jnp.float32).reshape(1, fout) / fout
            running_var = 1.0 + 0.5 * jnp.cos(jnp.arange(fout, dtype=jnp.float32)).reshape(1, fout) ** 2
            scale = gamma / jnp.sqrt(running_var + BN_EPS)
            shift = beta - running_mean * scale
            params[f"s{li}"] = scale
            params[f"t{li}"] = shift
    return params


def reference_forward(x, params):
    """Pure-JAX f32 reference (inference mode)."""
    h = x @ params["w1"] + params["b1"]
    h = jnp.maximum(h * params["s1"] + params["t1"], 0.0)
    h = h @ params["w2"] + params["b2"]
    h = jnp.maximum(h * params["s2"] + params["t2"], 0.0)
    h = h @ params["w3"] + params["b3"]
    h = jnp.maximum(h * params["s3"] + params["t3"], 0.0)
    return h @ params["w4"] + params["b4"]


if __name__ == "__main__":
    emb_dim, num_classes, batch = 32, 10, 256
    key = jax.random.PRNGKey(0)
    k_x, k_p = jax.random.split(key)
    x = jax.random.normal(k_x, (batch, emb_dim), jnp.float32)
    params = init_params(k_p, emb_dim, num_classes)

    y = l3_dense_forward(x, params)           # block_b chosen automatically per generation
    y = jax.block_until_ready(y)

    y_ref = reference_forward(x, params)
    assert y.shape == (batch, num_classes)
    # bf16 weights/activations/output with f32 accumulation: loosened tolerance vs f32 reference.
    assert jnp.allclose(y.astype(jnp.float32), y_ref, atol=5e-2, rtol=5e-2), \
        "mismatch vs JAX reference"
    print("KERNEL_OK")
</pallas_src>

<mosaic_0001>
module attributes {stable_mosaic.version = 11 : i64} {
  func.func @_mlp_kernel(%arg0: i32, %arg1: memref<256x32xf32, #tpu.memory_space<vmem>>, %arg2: memref<32x512xbf16, #tpu.memory_space<vmem>>, %arg3: memref<1x512xf32, #tpu.memory_space<vmem>>, %arg4: memref<512x128xbf16, #tpu.memory_space<vmem>>, %arg5: memref<1x128xf32, #tpu.memory_space<vmem>>, %arg6: memref<128x128xbf16, #tpu.memory_space<vmem>>, %arg7: memref<1x128xf32, #tpu.memory_space<vmem>>, %arg8: memref<128x128xbf16, #tpu.memory_space<vmem>>, %arg9: memref<1x128xf32, #tpu.memory_space<vmem>>, %arg10: memref<256x128xbf16, #tpu.memory_space<vmem>>) attributes {dimension_semantics = [#tpu.dimension_semantics<parallel>], iteration_bounds = array<i64: 1>, scalar_prefetch = 0 : i64, scratch_operands = 0 : i64, tpu.core_type = #tpu.core_type<tc>, window_params = [{transform_indices = @transform_0, window_bounds = array<i64: 256, 32>}, {pipeline_mode = #tpu.pipeline_mode<synchronous>, transform_indices = @transform_1, window_bounds = array<i64: 32, 512>}, {pipeline_mode = #tpu.pipeline_mode<synchronous>, transform_indices = @transform_2, window_bounds = array<i64: 1, 512>}, {pipeline_mode = #tpu.pipeline_mode<synchronous>, transform_indices = @transform_3, window_bounds = array<i64: 512, 128>}, {pipeline_mode = #tpu.pipeline_mode<synchronous>, transform_indices = @transform_4, window_bounds = array<i64: 1, 128>}, {pipeline_mode = #tpu.pipeline_mode<synchronous>, transform_indices = @transform_5, window_bounds = array<i64: 128, 128>}, {pipeline_mode = #tpu.pipeline_mode<synchronous>, transform_indices = @transform_6, window_bounds = array<i64: 1, 128>}, {pipeline_mode = #tpu.pipeline_mode<synchronous>, transform_indices = @transform_7, window_bounds = array<i64: 128, 128>}, {pipeline_mode = #tpu.pipeline_mode<synchronous>, transform_indices = @transform_8, window_bounds = array<i64: 1, 128>}, {transform_indices = @transform_9, window_bounds = array<i64: 256, 128>}]} {
    %c0 = arith.constant 0 : index
    %c0_0 = arith.constant 0 : index
    %0 = vector.load %arg1[%c0, %c0_0] : memref<256x32xf32, #tpu.memory_space<vmem>>, vector<256x32xf32>
    %1 = arith.truncf %0 : vector<256x32xf32> to vector<256x32xbf16>
    %c0_1 = arith.constant 0 : index
    %c0_2 = arith.constant 0 : index
    %2 = vector.load %arg2[%c0_1, %c0_2] : memref<32x512xbf16, #tpu.memory_space<vmem>>, vector<32x512xbf16>
    %cst = arith.constant dense<0.000000e+00> : vector<256x512xf32>
    %3 = tpu.matmul %1, %2, %cst {dimension_numbers = #tpu.dot_dimension_numbers<[1], [0], [0], [1], [0, 0, 1, 1], [], []>} : vector<256x32xbf16>, vector<32x512xbf16>, vector<256x512xf32> -> vector<256x512xf32>
    %c0_3 = arith.constant 0 : index
    %c0_4 = arith.constant 0 : index
    %4 = vector.load %arg3[%c0_3, %c0_4] : memref<1x512xf32, #tpu.memory_space<vmem>>, vector<1x512xf32>
    %5 = vector.broadcast %4 : vector<1x512xf32> to vector<256x512xf32>
    %6 = arith.addf %3, %5 : vector<256x512xf32>
    %cst_5 = arith.constant 0.000000e+00 : f32
    %7 = vector.broadcast %cst_5 : f32 to vector<256x512xf32>
    %8 = arith.maximumf %6, %7 : vector<256x512xf32>
    %9 = arith.truncf %8 : vector<256x512xf32> to vector<256x512xbf16>
    %c0_6 = arith.constant 0 : index
    %c0_7 = arith.constant 0 : index
    %10 = vector.load %arg4[%c0_6, %c0_7] : memref<512x128xbf16, #tpu.memory_space<vmem>>, vector<512x128xbf16>
    %cst_8 = arith.constant dense<0.000000e+00> : vector<256x128xf32>
    %11 = tpu.matmul %9, %10, %cst_8 {dimension_numbers = #tpu.dot_dimension_numbers<[1], [0], [0], [1], [0, 0, 1, 1], [], []>} : vector<256x512xbf16>, vector<512x128xbf16>, vector<256x128xf32> -> vector<256x128xf32>
    %c0_9 = arith.constant 0 : index
    %c0_10 = arith.constant 0 : index
    %12 = vector.load %arg5[%c0_9, %c0_10] : memref<1x128xf32, #tpu.memory_space<vmem>>, vector<1x128xf32>
    %13 = vector.broadcast %12 : vector<1x128xf32> to vector<256x128xf32>
    %14 = arith.addf %11, %13 : vector<256x128xf32>
    %cst_11 = arith.constant 0.000000e+00 : f32
    %15 = vector.broadcast %cst_11 : f32 to vector<256x128xf32>
    %16 = arith.maximumf %14, %15 : vector<256x128xf32>
    %17 = arith.truncf %16 : vector<256x128xf32> to vector<256x128xbf16>
    %c0_12 = arith.constant 0 : index
    %c0_13 = arith.constant 0 : index
    %18 = vector.load %arg6[%c0_12, %c0_13] : memref<128x128xbf16, #tpu.memory_space<vmem>>, vector<128x128xbf16>
    %cst_14 = arith.constant dense<0.000000e+00> : vector<256x128xf32>
    %19 = tpu.matmul %17, %18, %cst_14 {dimension_numbers = #tpu.dot_dimension_numbers<[1], [0], [0], [1], [0, 0, 1, 1], [], []>} : vector<256x128xbf16>, vector<128x128xbf16>, vector<256x128xf32> -> vector<256x128xf32>
    %c0_15 = arith.constant 0 : index
    %c0_16 = arith.constant 0 : index
    %20 = vector.load %arg7[%c0_15, %c0_16] : memref<1x128xf32, #tpu.memory_space<vmem>>, vector<1x128xf32>
    %21 = vector.broadcast %20 : vector<1x128xf32> to vector<256x128xf32>
    %22 = arith.addf %19, %21 : vector<256x128xf32>
    %cst_17 = arith.constant 0.000000e+00 : f32
    %23 = vector.broadcast %cst_17 : f32 to vector<256x128xf32>
    %24 = arith.maximumf %22, %23 : vector<256x128xf32>
    %25 = arith.truncf %24 : vector<256x128xf32> to vector<256x128xbf16>
    %c0_18 = arith.constant 0 : index
    %c0_19 = arith.constant 0 : index
    %26 = vector.load %arg8[%c0_18, %c0_19] : memref<128x128xbf16, #tpu.memory_space<vmem>>, vector<128x128xbf16>
    %cst_20 = arith.constant dense<0.000000e+00> : vector<256x128xf32>
    %27 = tpu.matmul %25, %26, %cst_20 {dimension_numbers = #tpu.dot_dimension_numbers<[1], [0], [0], [1], [0, 0, 1, 1], [], []>} : vector<256x128xbf16>, vector<128x128xbf16>, vector<256x128xf32> -> vector<256x128xf32>
    %c0_21 = arith.constant 0 : index
    %c0_22 = arith.constant 0 : index
    %28 = vector.load %arg9[%c0_21, %c0_22] : memref<1x128xf32, #tpu.memory_space<vmem>>, vector<1x128xf32>
    %29 = vector.broadcast %28 : vector<1x128xf32> to vector<256x128xf32>
    %30 = arith.addf %27, %29 : vector<256x128xf32>
    %31 = arith.truncf %30 : vector<256x128xf32> to vector<256x128xbf16>
    %c0_23 = arith.constant 0 : index
    %c0_24 = arith.constant 0 : index
    %32 = vector.load %arg10[%c0_23, %c0_24] : memref<256x128xbf16, #tpu.memory_space<vmem>>, vector<256x128xbf16>
    tpu.vector_store %arg10[%c0_23, %c0_24], %31 {strides = array<i32>} : memref<256x128xbf16, #tpu.memory_space<vmem>>, vector<256x128xbf16>,
    return
  }
  func.func @transform_0(%arg0: i32) -> (i32, i32) {
    %c0_i32 = arith.constant 0 : i32
    %c0_i32_0 = arith.constant 0 : i32
    return %arg0, %c0_i32 : i32, i32
  }
  func.func @transform_1(%arg0: i32) -> (i32, i32) {
    %c0_i32 = arith.constant 0 : i32
    %c0_i32_0 = arith.constant 0 : i32
    %c0_i32_1 = arith.constant 0 : i32
    return %c0_i32, %c0_i32_0 : i32, i32
  }
  func.func @transform_2(%arg0: i32) -> (i32, i32) {
    %c0_i32 = arith.constant 0 : i32
    %c0_i32_0 = arith.constant 0 : i32
    %c0_i32_1 = arith.constant 0 : i32
    return %c0_i32, %c0_i32_0 : i32, i32
  }
  func.func @transform_3(%arg0: i32) -> (i32, i32) {
    %c0_i32 = arith.constant 0 : i32
    %c0_i32_0 = arith.constant 0 : i32
    %c0_i32_1 = arith.constant 0 : i32
    return %c0_i32, %c0_i32_0 : i32, i32
  }
  func.func @transform_4(%arg0: i32) -> (i32, i32) {
    %c0_i32 = arith.constant 0 : i32
    %c0_i32_0 = arith.constant 0 : i32
    %c0_i32_1 = arith.constant 0 : i32
    return %c0_i32, %c0_i32_0 : i32, i32
  }
  func.func @transform_5(%arg0: i32) -> (i32, i32) {
    %c0_i32 = arith.constant 0 : i32
    %c0_i32_0 = arith.constant 0 : i32
    %c0_i32_1 = arith.constant 0 : i32
    return %c0_i32, %c0_i32_0 : i32, i32
  }
  func.func @transform_6(%arg0: i32) -> (i32, i32) {
    %c0_i32 = arith.constant 0 : i32
    %c0_i32_0 = arith.constant 0 : i32
    %c0_i32_1 = arith.constant 0 : i32
    return %c0_i32, %c0_i32_0 : i32, i32
  }
  func.func @transform_7(%arg0: i32) -> (i32, i32) {
    %c0_i32 = arith.constant 0 : i32
    %c0_i32_0 = arith.constant 0 : i32
    %c0_i32_1 = arith.constant 0 : i32
    return %c0_i32, %c0_i32_0 : i32, i32
  }
  func.func @transform_8(%arg0: i32) -> (i32, i32) {
    %c0_i32 = arith.constant 0 : i32
    %c0_i32_0 = arith.constant 0 : i32
    %c0_i32_1 = arith.constant 0 : i32
    return %c0_i32, %c0_i32_0 : i32, i32
  }
  func.func @transform_9(%arg0: i32) -> (i32, i32) {
    %c0_i32 = arith.constant 0 : i32
    %c0_i32_0 = arith.constant 0 : i32
    return %arg0, %c0_i32 : i32, i32
  }
}

module attributes {stable_mosaic.version = 11 : i64} {
  func.func @_mlp_kernel(%arg0: i32, %arg1: memref<256x32xf32, #tpu.memory_space<vmem>>, %arg2: memref<32x512xbf16, #tpu.memory_space<vmem>>, %arg3: memref<1x512xf32, #tpu.memory_space<vmem>>, %arg4: memref<512x128xbf16, #tpu.memory_space<vmem>>, %arg5: memref<1x128xf32, #tpu.memory_space<vmem>>, %arg6: memref<128x128xbf16, #tpu.memory_space<vmem>>, %arg7: memref<1x128xf32, #tpu.memory_space<vmem>>, %arg8: memref<128x128xbf16, #tpu.memory_space<vmem>>, %arg9: memref<1x128xf32, #tpu.memory_space<vmem>>, %arg10: memref<256x128xbf16, #tpu.memory_space<vmem>>) attributes {dimension_semantics = [#tpu.dimension_semantics<parallel>], iteration_bounds = array<i64: 1>, scalar_prefetch = 0 : i64, scratch_operands = 0 : i64, tpu.core_type = #tpu.core_type<tc>, window_params = [{transform_indices = @transform_0, window_bounds = array<i64: 256, 32>}, {pipeline_mode = #tpu.pipeline_mode<synchronous>, transform_indices = @transform_1, window_bounds = array<i64: 32, 512>}, {pipeline_mode = #tpu.pipeline_mode<synchronous>, transform_indices = @transform_2, window_bounds = array<i64: 1, 512>}, {pipeline_mode = #tpu.pipeline_mode<synchronous>, transform_indices = @transform_3, window_bounds = array<i64: 512, 128>}, {pipeline_mode = #tpu.pipeline_mode<synchronous>, transform_indices = @transform_4, window_bounds = array<i64: 1, 128>}, {pipeline_mode = #tpu.pipeline_mode<synchronous>, transform_indices = @transform_5, window_bounds = array<i64: 128, 128>}, {pipeline_mode = #tpu.pipeline_mode<synchronous>, transform_indices = @transform_6, window_bounds = array<i64: 1, 128>}, {pipeline_mode = #tpu.pipeline_mode<synchronous>, transform_indices = @transform_7, window_bounds = array<i64: 128, 128>}, {pipeline_mode = #tpu.pipeline_mode<synchronous>, transform_indices = @transform_8, window_bounds = array<i64: 1, 128>}, {transform_indices = @transform_9, window_bounds = array<i64: 256, 128>}]} {
    %c0 = arith.constant 0 : index
    %c0_0 = arith.constant 0 : index
    %0 = vector.load %arg1[%c0, %c0_0] : memref<256x32xf32, #tpu.memory_space<vmem>>, vector<256x32xf32>
    %1 = arith.truncf %0 : vector<256x32xf32> to vector<256x32xbf16>
    %c0_1 = arith.constant 0 : index
    %c0_2 = arith.constant 0 : index
    %2 = vector.load %arg2[%c0_1, %c0_2] : memref<32x512xbf16, #tpu.memory_space<vmem>>, vector<32x512xbf16>
    %cst = arith.constant dense<0.000000e+00> : vector<256x512xf32>
    %3 = tpu.matmul %1, %2, %cst {dimension_numbers = #tpu.dot_dimension_numbers<[1], [0], [0], [1], [0, 0, 1, 1], [], []>} : vector<256x32xbf16>, vector<32x512xbf16>, vector<256x512xf32> -> vector<256x512xf32>
    %c0_3 = arith.constant 0 : index
    %c0_4 = arith.constant 0 : index
    %4 = vector.load %arg3[%c0_3, %c0_4] : memref<1x512xf32, #tpu.memory_space<vmem>>, vector<1x512xf32>
    %5 = vector.broadcast %4 : vector<1x512xf32> to vector<256x512xf32>
    %6 = arith.addf %3, %5 : vector<256x512xf32>
    %cst_5 = arith.constant 0.000000e+00 : f32
    %7 = vector.broadcast %cst_5 : f32 to vector<256x512xf32>
    %8 = arith.maximumf %6, %7 : vector<256x512xf32>
    %9 = arith.truncf %8 : vector<256x512xf32> to vector<256x512xbf16>
    %c0_6 = arith.constant 0 : index
    %c0_7 = arith.constant 0 : index
    %10 = vector.load %arg4[%c0_6, %c0_7] : memref<512x128xbf16, #tpu.memory_space<vmem>>, vector<512x128xbf16>
    %cst_8 = arith.constant dense<0.000000e+00> : vector<256x128xf32>
    %11 = tpu.matmul %9, %10, %cst_8 {dimension_numbers = #tpu.dot_dimension_numbers<[1], [0], [0], [1], [0, 0, 1, 1], [], []>} : vector<256x512xbf16>, vector<512x128xbf16>, vector<256x128xf32> -> vector<256x128xf32>
    %c0_9 = arith.constant 0 : index
    %c0_10 = arith.constant 0 : index
    %12 = vector.load %arg5[%c0_9, %c0_10] : memref<1x128xf32, #tpu.memory_space<vmem>>, vector<1x128xf32>
    %13 = vector.broadcast %12 : vector<1x128xf32> to vector<256x128xf32>
    %14 = arith.addf %11, %13 : vector<256x128xf32>
    %cst_11 = arith.constant 0.000000e+00 : f32
    %15 = vector.broadcast %cst_11 : f32 to vector<256x128xf32>
    %16 = arith.maximumf %14, %15 : vector<256x128xf32>
    %17 = arith.truncf %16 : vector<256x128xf32> to vector<256x128xbf16>
    %c0_12 = arith.constant 0 : index
    %c0_13 = arith.constant 0 : index
    %18 = vector.load %arg6[%c0_12, %c0_13] : memref<128x128xbf16, #tpu.memory_space<vmem>>, vector<128x128xbf16>
    %cst_14 = arith.constant dense<0.000000e+00> : vector<256x128xf32>
    %19 = tpu.matmul %17, %18, %cst_14 {dimension_numbers = #tpu.dot_dimension_numbers<[1], [0], [0], [1], [0, 0, 1, 1], [], []>} : vector<256x128xbf16>, vector<128x128xbf16>, vector<256x128xf32> -> vector<256x128xf32>
    %c0_15 = arith.constant 0 : index
    %c0_16 = arith.constant 0 : index
    %20 = vector.load %arg7[%c0_15, %c0_16] : memref<1x128xf32, #tpu.memory_space<vmem>>, vector<1x128xf32>
    %21 = vector.broadcast %20 : vector<1x128xf32> to vector<256x128xf32>
    %22 = arith.addf %19, %21 : vector<256x128xf32>
    %cst_17 = arith.constant 0.000000e+00 : f32
    %23 = vector.broadcast %cst_17 : f32 to vector<256x128xf32>
    %24 = arith.maximumf %22, %23 : vector<256x128xf32>
    %25 = arith.truncf %24 : vector<256x128xf32> to vector<256x128xbf16>
    %c0_18 = arith.constant 0 : index
    %c0_19 = arith.constant 0 : index
    %26 = vector.load %arg8[%c0_18, %c0_19] : memref<128x128xbf16, #tpu.memory_space<vmem>>, vector<128x128xbf16>
    %cst_20 = arith.constant dense<0.000000e+00> : vector<256x128xf32>
    %27 = tpu.matmul %25, %26, %cst_20 {dimension_numbers = #tpu.dot_dimension_numbers<[1], [0], [0], [1], [0, 0, 1, 1], [], []>} : vector<256x128xbf16>, vector<128x128xbf16>, vector<256x128xf32> -> vector<256x128xf32>
    %c0_21 = arith.constant 0 : index
    %c0_22 = arith.constant 0 : index
    %28 = vector.load %arg9[%c0_21, %c0_22] : memref<1x128xf32, #tpu.memory_space<vmem>>, vector<1x128xf32>
    %29 = vector.broadcast %28 : vector<1x128xf32> to vector<256x128xf32>
    %30 = arith.addf %27, %29 : vector<256x128xf32>
    %31 = arith.truncf %30 : vector<256x128xf32> to vector<256x128xbf16>
    %c0_23 = arith.constant 0 : index
    %c0_24 = arith.constant 0 : index
    %32 = vector.load %arg10[%c0_23, %c0_24] : memref<256x128xbf16, #tpu.memory_space<vmem>>, vector<256x128xbf16>
    tpu.vector_store %arg10[%c0_23, %c0_24], %31 {strides = array<i32>} : memref<256x128xbf16, #tpu.memory_space<vmem>>, vector<256x128xbf16>,
    return
  }
  func.func @transform_0(%arg0: i32) -> (i32, i32) {
    %c0_i32 = arith.constant 0 : i32
    %c0_i32_0 = arith.constant 0 : i32
    return %arg0, %c0_i32 : i32, i32
  }
  func.func @transform_1(%arg0: i32) -> (i32, i32) {
    %c0_i32 = arith.constant 0 : i32
    %c0_i32_0 = arith.constant 0 : i32
    %c0_i32_1 = arith.constant 0 : i32
    return %c0_i32, %c0_i32_0 : i32, i32
  }
  func.func @transform_2(%arg0: i32) -> (i32, i32) {
    %c0_i32 = arith.constant 0 : i32
    %c0_i32_0 = arith.constant 0 : i32
    %c0_i32_1 = arith.constant 0 : i32
    return %c0_i32, %c0_i32_0 : i32, i32
  }
  func.func @transform_3(%arg0: i32) -> (i32, i32) {
    %c0_i32 = arith.constant 0 : i32
    %c0_i32_0 = arith.constant 0 : i32
    %c0_i32_1 = arith.constant 0 : i32
    return %c0_i32, %c0_i32_0 : i32, i32
  }
  func.func @transform_4(%arg0: i32) -> (i32, i32) {
    %c0_i32 = arith.constant 0 : i32
    %c0_i32_0 = arith.constant 0 : i32
    %c0_i32_1 = arith.constant 0 : i32
    return %c0_i32, %c0_i32_0 : i32, i32
  }
  func.func @transform_5(%arg0: i32) -> (i32, i32) {
    %c0_i32 = arith.constant 0 : i32
    %c0_i32_0 = arith.constant 0 : i32
    %c0_i32_1 = arith.constant 0 : i32
    return %c0_i32, %c0_i32_0 : i32, i32
  }
  func.func @transform_6(%arg0: i32) -> (i32, i32) {
    %c0_i32 = arith.constant 0 : i32
    %c0_i32_0 = arith.constant 0 : i32
    %c0_i32_1 = arith.constant 0 : i32
    return %c0_i32, %c0_i32_0 : i32, i32
  }
  func.func @transform_7(%arg0: i32) -> (i32, i32) {
    %c0_i32 = arith.constant 0 : i32
    %c0_i32_0 = arith.constant 0 : i32
    %c0_i32_1 = arith.constant 0 : i32
    return %c0_i32, %c0_i32_0 : i32, i32
  }
  func.func @transform_8(%arg0: i32) -> (i32, i32) {
    %c0_i32 = arith.constant 0 : i32
    %c0_i32_0 = arith.constant 0 : i32
    %c0_i32_1 = arith.constant 0 : i32
    return %c0_i32, %c0_i32_0 : i32, i32
  }
  func.func @transform_9(%arg0: i32) -> (i32, i32) {
    %c0_i32 = arith.constant 0 : i32
    %c0_i32_0 = arith.constant 0 : i32
    return %arg0, %c0_i32 : i32, i32
  }
}

</mosaic_0001>

<llo_original>
// kernel: tpu_custom_call.1
$region0: #{tpu_custom_call.1}
  #allocation0 [shape = 'u32[]', space=smem, size = 0x4, offset = 0x4, fixed_abs, tag = 'smem constant byte address 0x4 - core index']
  #allocation1 [shape = 'u32[144,128]{1,0:T(1,128)}', space=vmem, size = 0x12000, scoped, tag = 'internal scratch']
  %s0 = inlined_call_operand.vmem [shape: f32[256,32], index: 0, kind: input, shape index: {}]
  %s1 = inlined_call_operand.vmem [shape: bf16[32,512], index: 1, kind: input, shape index: {}]
  %s2 = inlined_call_operand.vmem [shape: f32[1,512], index: 2, kind: input, shape index: {}]
  %s3 = inlined_call_operand.vmem [shape: bf16[512,128], index: 3, kind: input, shape index: {}]
  %s4 = inlined_call_operand.vmem [shape: f32[1,128], index: 4, kind: input, shape index: {}]
  %s5 = inlined_call_operand.hbm [shape: bf16[128,128], index: 5, kind: input, shape index: {}]
  %s6 = inlined_call_operand.vmem [shape: f32[1,128], index: 6, kind: input, shape index: {}]
  %s7 = inlined_call_operand.hbm [shape: bf16[128,128], index: 7, kind: input, shape index: {}]
  %s8 = inlined_call_operand.vmem [shape: f32[1,128], index: 8, kind: input, shape index: {}]
  %s9 = inlined_call_operand.hbm [shape: bf16[256,128], index: 9, kind: output, shape index: {}]
  %s10 = sld [smem:[#allocation0]]
  $region54: #{tpu_custom_call.1} parent=0
    _
  %s12 = ssub.s32 1, %s10
  %s13 = scalar_select 0, %s12, %s10
  $region1: #{tpu_custom_call.1} parent=0
    #allocation2 [shape = 'u8[32768]{0}', space=vmem, size = 0x8000, scoped, tag = 'input window, operand 5, single buffered']
    #allocation3 [shape = 's32[1]{0}', space=sflag, size = 0x4, scoped, tag = 'scoped memory for tpu_custom_call.1']
    #allocation4 [shape = 's32[1]{0}', space=sflag, size = 0x4, scoped, tag = 'scoped memory for tpu_custom_call.1']
    #allocation5 [shape = 'u8[32768]{0}', space=vmem, size = 0x8000, scoped, tag = 'input window, operand 7, single buffered']
    #allocation6 [shape = 's32[1]{0}', space=sflag, size = 0x4, scoped, tag = 'scoped memory for tpu_custom_call.1']
    #allocation7 [shape = 'u8[65536]{0}', space=vmem, size = 0x10000, scoped, tag = 'output window, operand 0, single buffered']
    %14 = vsyncpa [#allocation3], 0
    %15 = vsyncpa [#allocation6], 0
    %16 = vsyncpa [#allocation4], 0
    // Predicated region
    $region2: #{tpu_custom_call.1} parent=1 // pred_check
      _
    $region3: #{tpu_custom_call.1} parent=1 // pred_check_branch
      %18 = sbr.rel (0) target = $region5
    $region4: #{tpu_custom_call.1} parent=1 // pred_region
      _
    $region5: #{tpu_custom_call.1} parent=1 // pred_fallthru
      _
    // Predicated region
    $region6: #{tpu_custom_call.1} parent=1 // pred_check
      _
    $region7: #{tpu_custom_call.1} parent=1 // pred_check_branch
      %20 = sbr.rel (0) target = $region9
    $region8: #{tpu_custom_call.1} parent=1 // pred_region
      _
    $region9: #{tpu_custom_call.1} parent=1 // pred_fallthru
      _
    // Predicated region
    $region10: #{tpu_custom_call.1} parent=1 // pred_check
      _
    $region11: #{tpu_custom_call.1} parent=1 // pred_check_branch
      %22 = sbr.rel (0) target = $region13
    $region12: #{tpu_custom_call.1} parent=1 // pred_region
      _
    $region13: #{tpu_custom_call.1} parent=1 // pred_fallthru
      _
    // Predicated region
    $region14: #{tpu_custom_call.1} parent=1 // pred_check
      _
    $region15: #{tpu_custom_call.1} parent=1 // pred_check_branch
      %24 = sbr.rel (0) target = $region17
    $region16: #{tpu_custom_call.1} parent=1 // pred_region
      _
    $region17: #{tpu_custom_call.1} parent=1 // pred_fallthru
      _
    // Predicated region
    $region18: #{tpu_custom_call.1} parent=1 // pred_check
      _
    $region19: #{tpu_custom_call.1} parent=1 // pred_check_branch
      %26 = sbr.rel (0) target = $region21
    $region20: #{tpu_custom_call.1} parent=1 // pred_region
      _
    $region21: #{tpu_custom_call.1} parent=1 // pred_fallthru
      _
    // Predicated region
    $region22: #{tpu_custom_call.1} parent=1 // pred_check
      _
    $region23: #{tpu_custom_call.1} parent=1 // pred_check_branch
      %28 = sbr.rel (0) target = $region25
    $region24: #{tpu_custom_call.1} parent=1 // pred_region
      %s30 = ssub.s32 1024, 1024
      %31 = vsyncadd [#allocation3], %s30
      %s32 = sshll.u32 [#allocation2], 4
      %s33 = int_to_ptr.vmem [resolvable:$true] %s32
      %38 = dma.hbm_to_vmem [thread:$0]  %s5, 1024, %s33, [#allocation3], 64, 64, 4
    $region25: #{tpu_custom_call.1} parent=1 // pred_fallthru
      _
    // Predicated region
    $region26: #{tpu_custom_call.1} parent=1 // pred_check
      _
    $region27: #{tpu_custom_call.1} parent=1 // pred_check_branch
      %40 = sbr.rel (0) target = $region29
    $region28: #{tpu_custom_call.1} parent=1 // pred_region
      _
    $region29: #{tpu_custom_call.1} parent=1 // pred_fallthru
      _
    // Predicated region
    $region30: #{tpu_custom_call.1} parent=1 // pred_check
      _
    $region31: #{tpu_custom_call.1} parent=1 // pred_check_branch
      %42 = sbr.rel (0) target = $region33
    $region32: #{tpu_custom_call.1} parent=1 // pred_region
      %s44 = ssub.s32 1024, 1024
      %45 = vsyncadd [#allocation6], %s44
      %s46 = sshll.u32 [#allocation5], 4
      %s47 = int_to_ptr.vmem [resolvable:$true] %s46
      %52 = dma.hbm_to_vmem [thread:$0]  %s7, 1024, %s47, [#allocation6], 64, 64, 4
    $region33: #{tpu_custom_call.1} parent=1 // pred_fallthru
      _
    // Predicated region
    $region34: #{tpu_custom_call.1} parent=1 // pred_check
      _
    $region35: #{tpu_custom_call.1} parent=1 // pred_check_branch
      %54 = sbr.rel (0) target = $region37
    $region36: #{tpu_custom_call.1} parent=1 // pred_region
      _
    $region37: #{tpu_custom_call.1} parent=1 // pred_fallthru
      _
    // Predicated region
    $region38: #{tpu_custom_call.1} parent=1 // pred_check
      _
    $region39: #{tpu_custom_call.1} parent=1 // pred_check_branch
      %56 = sbr.rel (0) target = $region41
    $region40: #{tpu_custom_call.1} parent=1 // pred_region
      %57 = dma.done [#allocation3], 1024
    $region41: #{tpu_custom_call.1} parent=1 // pred_fallthru
      _
    // Predicated region
    $region42: #{tpu_custom_call.1} parent=1 // pred_check
      _
    $region43: #{tpu_custom_call.1} parent=1 // pred_check_branch
      %59 = sbr.rel (0) target = $region45
    $region44: #{tpu_custom_call.1} parent=1 // pred_region
      %60 = dma.done [#allocation6], 1024
    $region45: #{tpu_custom_call.1} parent=1 // pred_fallthru
      _
    %v62 = vld [vmem:[%s0] sm:$0xff]
    %v63 = vld [vmem:[%s0 + $0x8] sm:$0xff]
    %v64 = vld [vmem:[%s0 + $0x10] sm:$0xff]
    %v65 = vld [vmem:[%s0 + $0x18] sm:$0xff]
    %v66 = vld [vmem:[%s0 + $0x20] sm:$0xff]
    %v67 = vld [vmem:[%s0 + $0x28] sm:$0xff]
    %v68 = vld [vmem:[%s0 + $0x30] sm:$0xff]
    %v69 = vld [vmem:[%s0 + $0x38] sm:$0xff]
    %v70 = vld [vmem:[%s0 + $0x40] sm:$0xff]
    %v71 = vld [vmem:[%s0 + $0x48] sm:$0xff]
    %v72 = vld [vmem:[%s0 + $0x50] sm:$0xff]
    %v73 = vld [vmem:[%s0 + $0x58] sm:$0xff]
    %v74 = vld [vmem:[%s0 + $0x60] sm:$0xff]
    %v75 = vld [vmem:[%s0 + $0x68] sm:$0xff]
    %v76 = vld [vmem:[%s0 + $0x70] sm:$0xff]
    %v77 = vld [vmem:[%s0 + $0x78] sm:$0xff]
    %v78 = vld [vmem:[%s0 + $0x80] sm:$0xff]
    %v79 = vld [vmem:[%s0 + $0x88] sm:$0xff]
    %v80 = vld [vmem:[%s0 + $0x90] sm:$0xff]
    %v81 = vld [vmem:[%s0 + $0x98] sm:$0xff]
    %v82 = vld [vmem:[%s0 + $0xa0] sm:$0xff]
    %v83 = vld [vmem:[%s0 + $0xa8] sm:$0xff]
    %v84 = vld [vmem:[%s0 + $0xb0] sm:$0xff]
    %v85 = vld [vmem:[%s0 + $0xb8] sm:$0xff]
    %v86 = vld [vmem:[%s0 + $0xc0] sm:$0xff]
    %v87 = vld [vmem:[%s0 + $0xc8] sm:$0xff]
    %v88 = vld [vmem:[%s0 + $0xd0] sm:$0xff]
    %v89 = vld [vmem:[%s0 + $0xd8] sm:$0xff]
    %v90 = vld [vmem:[%s0 + $0xe0] sm:$0xff]
    %v91 = vld [vmem:[%s0 + $0xe8] sm:$0xff]
    %v92 = vld [vmem:[%s0 + $0xf0] sm:$0xff]
    %v93 = vld [vmem:[%s0 + $0xf8] sm:$0xff]
    %v94 = vpack.c.bf16 %v63, %v62
    %v95 = vpack.c.bf16 %v65, %v64
    %v96 = vpack.c.bf16 %v67, %v66
    %v97 = vpack.c.bf16 %v69, %v68
    %v98 = vpack.c.bf16 %v71, %v70
    %v99 = vpack.c.bf16 %v73, %v72
    %v100 = vpack.c.bf16 %v75, %v74
    %v101 = vpack.c.bf16 %v77, %v76
    %v102 = vpack.c.bf16 %v79, %v78
    %v103 = vpack.c.bf16 %v81, %v80
    %v104 = vpack.c.bf16 %v83, %v82
    %v105 = vpack.c.bf16 %v85, %v84
    %v106 = vpack.c.bf16 %v87, %v86
    %v107 = vpack.c.bf16 %v89, %v88
    %v108 = vpack.c.bf16 %v91, %v90
    %v109 = vpack.c.bf16 %v93, %v92
    %v110 = vld [vmem:[%s1] sm:$0xff]
    %v111 = vld [vmem:[%s1 + $0x8] sm:$0xff]
    %v112 = vld [vmem:[%s1 + $0x10] sm:$0xff]
    %v113 = vld [vmem:[%s1 + $0x18] sm:$0xff]
    %v114 = vld [vmem:[%s1 + $0x20] sm:$0xff]
    %v115 = vld [vmem:[%s1 + $0x28] sm:$0xff]
    %v116 = vld [vmem:[%s1 + $0x30] sm:$0xff]
    %v117 = vld [vmem:[%s1 + $0x38] sm:$0xff]
    %v118 = vld [vmem:[%s2] sm:$0xf]
    %v120 = vlaneseq
    %v121 = vshrl.u32 %v120, 7
    %v122 = vsub.s32 0, %v121
    %v123 = vrot.slane %v118, %v122
    %v124 = vlaneseq
    %v125 = vshrl.u32 %v124, 7
    %v126 = vsub.s32 1, %v125
    %v127 = vrot.slane %v118, %v126
    %v128 = vlaneseq
    %v129 = vshrl.u32 %v128, 7
    %v130 = vsub.s32 2, %v129
    %v131 = vrot.slane %v118, %v130
    %v132 = vlaneseq
    %v133 = vshrl.u32 %v132, 7
    %v134 = vsub.s32 3, %v133
    %v135 = vrot.slane %v118, %v134
    %v148 = vunpack.c.l.b16 %v110
    %v149 = vunpack.c.h.b16 %v110
    %v150 = vunpack.c.l.b16 %v111
    %v151 = vunpack.c.h.b16 %v111
    %v152 = vunpack.c.l.b16 %v112
    %v153 = vunpack.c.h.b16 %v112
    %v154 = vunpack.c.l.b16 %v113
    %v155 = vunpack.c.h.b16 %v113
    %v156 = vunpack.c.l.b16 %v114
    %v157 = vunpack.c.h.b16 %v114
    %v158 = vunpack.c.l.b16 %v115
    %v159 = vunpack.c.h.b16 %v115
    %v160 = vunpack.c.l.b16 %v116
    %v161 = vunpack.c.h.b16 %v116
    %v162 = vunpack.c.l.b16 %v117
    %v163 = vunpack.c.h.b16 %v117
    %v164 = vpack.c.b16 %v152, %v148
    %v165 = vpack.c.b16 %v153, %v149
    %v166 = vpack.c.b16 %v154, %v150
    %v167 = vpack.c.b16 %v155, %v151
    %v168 = vpack.c.b16 %v160, %v156
    %v169 = vpack.c.b16 %v161, %v157
    %v170 = vpack.c.b16 %v162, %v158
    %v171 = vpack.c.b16 %v163, %v159
    %vm180 = vcmask 261120
    %v182 = vsel %vm180, %v94, 0
    %v185 = vsel %vm180, %v95, 0
    %v188 = vsel %vm180, %v96, 0
    %v191 = vsel %vm180, %v97, 0
    %v194 = vsel %vm180, %v98, 0
    %v197 = vsel %vm180, %v99, 0
    %v200 = vsel %vm180, %v100, 0
    %v203 = vsel %vm180, %v101, 0
    %v206 = vsel %vm180, %v102, 0
    %v209 = vsel %vm180, %v103, 0
    %v212 = vsel %vm180, %v104, 0
    %v215 = vsel %vm180, %v105, 0
    %v218 = vsel %vm180, %v106, 0
    %v221 = vsel %vm180, %v107, 0
    %v224 = vsel %vm180, %v108, 0
    %v227 = vsel %vm180, %v109, 0
    %229 = vmatprep.subr.bf16.mxu0 0
    %230 = vmatpush1.bf16.msra.mxu0 0
    %231 = vmatprep.subr.bf16.mxu0 0
    %232 = vmatpush1.bf16.msra.mxu0 0
    %233 = vmatprep.subr.bf16.mxu0 0
    %234 = vmatpush1.bf16.msra.mxu0 0
    %235 = vmatprep.subr.bf16.mxu0 0
    %236 = vmatpush1.bf16.msra.mxu0 0
    %237 = vmatprep.subr.bf16.mxu0 0
    %238 = vmatpush1.bf16.msra.mxu0 0
    %239 = vmatprep.subr.bf16.mxu0 0
    %240 = vmatpush1.bf16.msra.mxu0 0
    %241 = vmatprep.subr.bf16.mxu0 %v169
    %242 = vmatpush1.bf16.msra.mxu0 %v168
    %243 = vmatprep.subr.bf16.mxu0 %v165
    %244 = vmatpush1.bf16.msra.mxu0 %v164
    %245 = vmatprep.subr.bf16.mxu0 0
    %246 = vmatpush2.bf16.msra.mxu0 0
    %247 = vmatprep.subr.bf16.mxu0 0
    %248 = vmatpush2.bf16.msra.mxu0 0
    %249 = vmatprep.subr.bf16.mxu0 0
    %250 = vmatpush2.bf16.msra.mxu0 0
    %251 = vmatprep.subr.bf16.mxu0 0
    %252 = vmatpush2.bf16.msra.mxu0 0
    %253 = vmatprep.subr.bf16.mxu0 0
    %254 = vmatpush2.bf16.msra.mxu0 0
    %255 = vmatprep.subr.bf16.mxu0 0
    %256 = vmatpush2.bf16.msra.mxu0 0
    %257 = vmatprep.subr.bf16.mxu0 0
    %258 = vmatpush2.bf16.msra.mxu0 0
    %259 = vmatprep.subr.bf16.mxu0 0
    %260 = vmatpush2.bf16.msra.mxu0 0
    %261 = vmatprep.mubr.bf16.mxu0 0
    %262 = vmatmul.mubr.bf16.gmra.mxu0 %v182
    %v263 = vpop.f32.mrf.mxu0
    %v264 = vadd.f32 %v123, %v263
    %v265 = vpop.f32.mrf.mxu0
    %v266 = vadd.f32 %v127, %v265
    %v267 = vpop.f32.mrf.mxu0
    %v268 = vadd.f32 %v123, %v267
    %v269 = vpop.f32.mrf.mxu0
    %v270 = vadd.f32 %v127, %v269
    %271 = vmatprep.mubr.bf16.mxu0 0
    %272 = vmatmul.mubr.bf16.gmra.mxu0 %v185
    %v273 = vpop.f32.mrf.mxu0
    %v274 = vadd.f32 %v123, %v273
    %v275 = vpop.f32.mrf.mxu0
    %v276 = vadd.f32 %v127, %v275
    %v277 = vpop.f32.mrf.mxu0
    %v278 = vadd.f32 %v123, %v277
    %v279 = vpop.f32.mrf.mxu0
    %v280 = vadd.f32 %v127, %v279
    %281 = vmatprep.mubr.bf16.mxu0 0
    %282 = vmatmul.mubr.bf16.gmra.mxu0 %v188
    %v283 = vpop.f32.mrf.mxu0
    %v284 = vadd.f32 %v123, %v283
    %v285 = vpop.f32.mrf.mxu0
    %v286 = vadd.f32 %v127, %v285
    %v287 = vpop.f32.mrf.mxu0
    %v288 = vadd.f32 %v123, %v287
    %v289 = vpop.f32.mrf.mxu0
    %v290 = vadd.f32 %v127, %v289
    %291 = vmatprep.mubr.bf16.mxu0 0
    %292 = vmatmul.mubr.bf16.gmra.mxu0 %v191
    %v293 = vpop.f32.mrf.mxu0
    %v294 = vadd.f32 %v123, %v293
    %v295 = vpop.f32.mrf.mxu0
    %v296 = vadd.f32 %v127, %v295
    %v297 = vpop.f32.mrf.mxu0
    %v298 = vadd.f32 %v123, %v297
    %v299 = vpop.f32.mrf.mxu0
    %v300 = vadd.f32 %v127, %v299
    %301 = vmatprep.mubr.bf16.mxu0 0
    %302 = vmatmul.mubr.bf16.gmra.mxu0 %v194
    %v303 = vpop.f32.mrf.mxu0
    %v304 = vadd.f32 %v123, %v303
    %v305 = vpop.f32.mrf.mxu0
    %v306 = vadd.f32 %v127, %v305
    %v307 = vpop.f32.mrf.mxu0
    %v308 = vadd.f32 %v123, %v307
    %v309 = vpop.f32.mrf.mxu0
    %v310 = vadd.f32 %v127, %v309
    %311 = vmatprep.mubr.bf16.mxu0 0
    %312 = vmatmul.mubr.bf16.gmra.mxu0 %v197
    %v313 = vpop.f32.mrf.mxu0
    %v314 = vadd.f32 %v123, %v313
    %v315 = vpop.f32.mrf.mxu0
    %v316 = vadd.f32 %v127, %v315
    %v317 = vpop.f32.mrf.mxu0
    %v318 = vadd.f32 %v123, %v317
    %v319 = vpop.f32.mrf.mxu0
    %v320 = vadd.f32 %v127, %v319
    %321 = vmatprep.mubr.bf16.mxu0 0
    %322 = vmatmul.mubr.bf16.gmra.mxu0 %v200
    %v323 = vpop.f32.mrf.mxu0
    %v324 = vadd.f32 %v123, %v323
    %v325 = vpop.f32.mrf.mxu0
    %v326 = vadd.f32 %v127, %v325
    %v327 = vpop.f32.mrf.mxu0
    %v328 = vadd.f32 %v123, %v327
    %v329 = vpop.f32.mrf.mxu0
    %v330 = vadd.f32 %v127, %v329
    %331 = vmatprep.mubr.bf16.mxu0 0
    %332 = vmatmul.mubr.bf16.gmra.mxu0 %v203
    %v333 = vpop.f32.mrf.mxu0
    %v334 = vadd.f32 %v123, %v333
    %v335 = vpop.f32.mrf.mxu0
    %v336 = vadd.f32 %v127, %v335
    %v337 = vpop.f32.mrf.mxu0
    %v338 = vadd.f32 %v123, %v337
    %v339 = vpop.f32.mrf.mxu0
    %v340 = vadd.f32 %v127, %v339
    %341 = vmatprep.mubr.bf16.mxu0 0
    %342 = vmatmul.mubr.bf16.gmra.mxu0 %v206
    %v343 = vpop.f32.mrf.mxu0
    %v344 = vadd.f32 %v123, %v343
    %v345 = vpop.f32.mrf.mxu0
    %v346 = vadd.f32 %v127, %v345
    %v347 = vpop.f32.mrf.mxu0
    %v348 = vadd.f32 %v123, %v347
    %v349 = vpop.f32.mrf.mxu0
    %v350 = vadd.f32 %v127, %v349
    %351 = vmatprep.mubr.bf16.mxu0 0
    %352 = vmatmul.mubr.bf16.gmra.mxu0 %v209
    %v353 = vpop.f32.mrf.mxu0
    %v354 = vadd.f32 %v123, %v353
    %v355 = vpop.f32.mrf.mxu0
    %v356 = vadd.f32 %v127, %v355
    %v357 = vpop.f32.mrf.mxu0
    %v358 = vadd.f32 %v123, %v357
    %v359 = vpop.f32.mrf.mxu0
    %v360 = vadd.f32 %v127, %v359
    %361 = vmatprep.mubr.bf16.mxu0 0
    %362 = vmatmul.mubr.bf16.gmra.mxu0 %v212
    %v363 = vpop.f32.mrf.mxu0
    %v364 = vadd.f32 %v123, %v363
    %v365 = vpop.f32.mrf.mxu0
    %v366 = vadd.f32 %v127, %v365
    %v367 = vpop.f32.mrf.mxu0
    %v368 = vadd.f32 %v123, %v367
    %v369 = vpop.f32.mrf.mxu0
    %v370 = vadd.f32 %v127, %v369
    %371 = vmatprep.mubr.bf16.mxu0 0
    %372 = vmatmul.mubr.bf16.gmra.mxu0 %v215
    %v373 = vpop.f32.mrf.mxu0
    %v374 = vadd.f32 %v123, %v373
    %v375 = vpop.f32.mrf.mxu0
    %v376 = vadd.f32 %v127, %v375
    %v377 = vpop.f32.mrf.mxu0
    %v378 = vadd.f32 %v123, %v377
    %v379 = vpop.f32.mrf.mxu0
    %v380 = vadd.f32 %v127, %v379
    %381 = vmatprep.mubr.bf16.mxu0 0
    %382 = vmatmul.mubr.bf16.gmra.mxu0 %v218
    %v383 = vpop.f32.mrf.mxu0
    %v384 = vadd.f32 %v123, %v383
    %v385 = vpop.f32.mrf.mxu0
    %v386 = vadd.f32 %v127, %v385
    %v387 = vpop.f32.mrf.mxu0
    %v388 = vadd.f32 %v123, %v387
    %v389 = vpop.f32.mrf.mxu0
    %v390 = vadd.f32 %v127, %v389
    %391 = vmatprep.mubr.bf16.mxu0 0
    %392 = vmatmul.mubr.bf16.gmra.mxu0 %v221
    %v393 = vpop.f32.mrf.mxu0
    %v394 = vadd.f32 %v123, %v393
    %v395 = vpop.f32.mrf.mxu0
    %v396 = vadd.f32 %v127, %v395
    %v397 = vpop.f32.mrf.mxu0
    %v398 = vadd.f32 %v123, %v397
    %v399 = vpop.f32.mrf.mxu0
    %v400 = vadd.f32 %v127, %v399
    %401 = vmatprep.mubr.bf16.mxu0 0
    %402 = vmatmul.mubr.bf16.gmra.mxu0 %v224
    %v403 = vpop.f32.mrf.mxu0
    %v404 = vadd.f32 %v123, %v403
    %v405 = vpop.f32.mrf.mxu0
    %v406 = vadd.f32 %v127, %v405
    %v407 = vpop.f32.mrf.mxu0
    %v408 = vadd.f32 %v123, %v407
    %v409 = vpop.f32.mrf.mxu0
    %v410 = vadd.f32 %v127, %v409
    %411 = vmatprep.mubr.bf16.mxu0 0
    %412 = vmatmul.mubr.bf16.gmra.mxu0 %v227
    %v413 = vpop.f32.mrf.mxu0
    %v414 = vadd.f32 %v123, %v413
    %v415 = vpop.f32.mrf.mxu0
    %v416 = vadd.f32 %v127, %v415
    %v417 = vpop.f32.mrf.mxu0
    %v418 = vadd.f32 %v123, %v417
    %v419 = vpop.f32.mrf.mxu0
    %v420 = vadd.f32 %v127, %v419
    %421 = vdwg.mxu0
    %422 = vmatprep.subr.bf16.mxu0 0
    %423 = vmatpush1.bf16.msra.mxu0 0
    %424 = vmatprep.subr.bf16.mxu0 0
    %425 = vmatpush1.bf16.msra.mxu0 0
    %426 = vmatprep.subr.bf16.mxu0 0
    %427 = vmatpush1.bf16.msra.mxu0 0
    %428 = vmatprep.subr.bf16.mxu0 0
    %429 = vmatpush1.bf16.msra.mxu0 0
    %430 = vmatprep.subr.bf16.mxu0 0
    %431 = vmatpush1.bf16.msra.mxu0 0
    %432 = vmatprep.subr.bf16.mxu0 0
    %433 = vmatpush1.bf16.msra.mxu0 0
    %434 = vmatprep.subr.bf16.mxu0 %v171
    %435 = vmatpush1.bf16.msra.mxu0 %v170
    %436 = vmatprep.subr.bf16.mxu0 %v167
    %437 = vmatpush1.bf16.msra.mxu0 %v166
    %438 = vmatprep.subr.bf16.mxu0 0
    %439 = vmatpush2.bf16.msra.mxu0 0
    %440 = vmatprep.subr.bf16.mxu0 0
    %441 = vmatpush2.bf16.msra.mxu0 0
    %442 = vmatprep.subr.bf16.mxu0 0
    %443 = vmatpush2.bf16.msra.mxu0 0
    %444 = vmatprep.subr.bf16.mxu0 0
    %445 = vmatpush2.bf16.msra.mxu0 0
    %446 = vmatprep.subr.bf16.mxu0 0
    %447 = vmatpush2.bf16.msra.mxu0 0
    %448 = vmatprep.subr.bf16.mxu0 0
    %449 = vmatpush2.bf16.msra.mxu0 0
    %450 = vmatprep.subr.bf16.mxu0 0
    %451 = vmatpush2.bf16.msra.mxu0 0
    %452 = vmatprep.subr.bf16.mxu0 0
    %453 = vmatpush2.bf16.msra.mxu0 0
    %454 = vmatprep.mubr.bf16.mxu0 0
    %455 = vmatmul.mubr.bf16.gmra.mxu0 %v182
    %v456 = vpop.f32.mrf.mxu0
    %v457 = vadd.f32 %v131, %v456
    %v458 = vpop.f32.mrf.mxu0
    %v459 = vadd.f32 %v135, %v458
    %v460 = vpop.f32.mrf.mxu0
    %v461 = vadd.f32 %v131, %v460
    %v462 = vpop.f32.mrf.mxu0
    %v463 = vadd.f32 %v135, %v462
    %464 = vmatprep.mubr.bf16.mxu0 0
    %465 = vmatmul.mubr.bf16.gmra.mxu0 %v185
    %v466 = vpop.f32.mrf.mxu0
    %v467 = vadd.f32 %v131, %v466
    %v468 = vpop.f32.mrf.mxu0
    %v469 = vadd.f32 %v135, %v468
    %v470 = vpop.f32.mrf.mxu0
    %v471 = vadd.f32 %v131, %v470
    %v472 = vpop.f32.mrf.mxu0
    %v473 = vadd.f32 %v135, %v472
    %474 = vmatprep.mubr.bf16.mxu0 0
    %475 = vmatmul.mubr.bf16.gmra.mxu0 %v188
    %v476 = vpop.f32.mrf.mxu0
    %v477 = vadd.f32 %v131, %v476
    %v478 = vpop.f32.mrf.mxu0
    %v479 = vadd.f32 %v135, %v478
    %v480 = vpop.f32.mrf.mxu0
    %v481 = vadd.f32 %v131, %v480
    %v482 = vpop.f32.mrf.mxu0
    %v483 = vadd.f32 %v135, %v482
    %484 = vmatprep.mubr.bf16.mxu0 0
    %485 = vmatmul.mubr.bf16.gmra.mxu0 %v191
    %v486 = vpop.f32.mrf.mxu0
    %v487 = vadd.f32 %v131, %v486
    %v488 = vpop.f32.mrf.mxu0
    %v489 = vadd.f32 %v135, %v488
    %v490 = vpop.f32.mrf.mxu0
    %v491 = vadd.f32 %v131, %v490
    %v492 = vpop.f32.mrf.mxu0
    %v493 = vadd.f32 %v135, %v492
    %494 = vmatprep.mubr.bf16.mxu0 0
    %495 = vmatmul.mubr.bf16.gmra.mxu0 %v194
    %v496 = vpop.f32.mrf.mxu0
    %v497 = vadd.f32 %v131, %v496
    %v498 = vpop.f32.mrf.mxu0
    %v499 = vadd.f32 %v135, %v498
    %v500 = vpop.f32.mrf.mxu0
    %v501 = vadd.f32 %v131, %v500
    %v502 = vpop.f32.mrf.mxu0
    %v503 = vadd.f32 %v135, %v502
    %504 = vmatprep.mubr.bf16.mxu0 0
    %505 = vmatmul.mubr.bf16.gmra.mxu0 %v197
    %v506 = vpop.f32.mrf.mxu0
    %v507 = vadd.f32 %v131, %v506
    %v508 = vpop.f32.mrf.mxu0
    %v509 = vadd.f32 %v135, %v508
    %v510 = vpop.f32.mrf.mxu0
    %v511 = vadd.f32 %v131, %v510
    %v512 = vpop.f32.mrf.mxu0
    %v513 = vadd.f32 %v135, %v512
    %514 = vmatprep.mubr.bf16.mxu0 0
    %515 = vmatmul.mubr.bf16.gmra.mxu0 %v200
    %v516 = vpop.f32.mrf.mxu0
    %v517 = vadd.f32 %v131, %v516
    %v518 = vpop.f32.mrf.mxu0
    %v519 = vadd.f32 %v135, %v518
    %v520 = vpop.f32.mrf.mxu0
    %v521 = vadd.f32 %v131, %v520
    %v522 = vpop.f32.mrf.mxu0
    %v523 = vadd.f32 %v135, %v522
    %524 = vmatprep.mubr.bf16.mxu0 0
    %525 = vmatmul.mubr.bf16.gmra.mxu0 %v203
    %v526 = vpop.f32.mrf.mxu0
    %v527 = vadd.f32 %v131, %v526
    %v528 = vpop.f32.mrf.mxu0
    %v529 = vadd.f32 %v135, %v528
    %v530 = vpop.f32.mrf.mxu0
    %v531 = vadd.f32 %v131, %v530
    %v532 = vpop.f32.mrf.mxu0
    %v533 = vadd.f32 %v135, %v532
    %534 = vmatprep.mubr.bf16.mxu0 0
    %535 = vmatmul.mubr.bf16.gmra.mxu0 %v206
    %v536 = vpop.f32.mrf.mxu0
    %v537 = vadd.f32 %v131, %v536
    %v538 = vpop.f32.mrf.mxu0
    %v539 = vadd.f32 %v135, %v538
    %v540 = vpop.f32.mrf.mxu0
    %v541 = vadd.f32 %v131, %v540
    %v542 = vpop.f32.mrf.mxu0
    %v543 = vadd.f32 %v135, %v542
    %544 = vmatprep.mubr.bf16.mxu0 0
    %545 = vmatmul.mubr.bf16.gmra.mxu0 %v209
    %v546 = vpop.f32.mrf.mxu0
    %v547 = vadd.f32 %v131, %v546
    %v548 = vpop.f32.mrf.mxu0
    %v549 = vadd.f32 %v135, %v548
    %v550 = vpop.f32.mrf.mxu0
    %v551 = vadd.f32 %v131, %v550
    %v552 = vpop.f32.mrf.mxu0
    %v553 = vadd.f32 %v135, %v552
    %554 = vmatprep.mubr.bf16.mxu0 0
    %555 = vmatmul.mubr.bf16.gmra.mxu0 %v212
    %v556 = vpop.f32.mrf.mxu0
    %v557 = vadd.f32 %v131, %v556
    %v558 = vpop.f32.mrf.mxu0
    %v559 = vadd.f32 %v135, %v558
    %v560 = vpop.f32.mrf.mxu0
    %v561 = vadd.f32 %v131, %v560
    %v562 = vpop.f32.mrf.mxu0
    %v563 = vadd.f32 %v135, %v562
    %564 = vmatprep.mubr.bf16.mxu0 0
    %565 = vmatmul.mubr.bf16.gmra.mxu0 %v215
    %v566 = vpop.f32.mrf.mxu0
    %v567 = vadd.f32 %v131, %v566
    %v568 = vpop.f32.mrf.mxu0
    %v569 = vadd.f32 %v135, %v568
    %v570 = vpop.f32.mrf.mxu0
    %v571 = vadd.f32 %v131, %v570
    %v572 = vpop.f32.mrf.mxu0
    %v573 = vadd.f32 %v135, %v572
    %574 = vmatprep.mubr.bf16.mxu0 0
    %575 = vmatmul.mubr.bf16.gmra.mxu0 %v218
    %v576 = vpop.f32.mrf.mxu0
    %v577 = vadd.f32 %v131, %v576
    %v578 = vpop.f32.mrf.mxu0
    %v579 = vadd.f32 %v135, %v578
    %v580 = vpop.f32.mrf.mxu0
    %v581 = vadd.f32 %v131, %v580
    %v582 = vpop.f32.mrf.mxu0
    %v583 = vadd.f32 %v135, %v582
    %584 = vmatprep.mubr.bf16.mxu0 0
    %585 = vmatmul.mubr.bf16.gmra.mxu0 %v221
    %v586 = vpop.f32.mrf.mxu0
    %v587 = vadd.f32 %v131, %v586
    %v588 = vpop.f32.mrf.mxu0
    %v589 = vadd.f32 %v135, %v588
    %v590 = vpop.f32.mrf.mxu0
    %v591 = vadd.f32 %v131, %v590
    %v592 = vpop.f32.mrf.mxu0
    %v593 = vadd.f32 %v135, %v592
    %594 = vmatprep.mubr.bf16.mxu0 0
    %595 = vmatmul.mubr.bf16.gmra.mxu0 %v224
    %v596 = vpop.f32.mrf.mxu0
    %v597 = vadd.f32 %v131, %v596
    %v598 = vpop.f32.mrf.mxu0
    %v599 = vadd.f32 %v135, %v598
    %v600 = vpop.f32.mrf.mxu0
    %v601 = vadd.f32 %v131, %v600
    %v602 = vpop.f32.mrf.mxu0
    %v603 = vadd.f32 %v135, %v602
    %604 = vmatprep.mubr.bf16.mxu0 0
    %605 = vmatmul.mubr.bf16.gmra.mxu0 %v227
    %v606 = vpop.f32.mrf.mxu0
    %v607 = vadd.f32 %v131, %v606
    %v608 = vpop.f32.mrf.mxu0
    %v609 = vadd.f32 %v135, %v608
    %v610 = vpop.f32.mrf.mxu0
    %v611 = vadd.f32 %v131, %v610
    %v612 = vpop.f32.mrf.mxu0
    %v613 = vadd.f32 %v135, %v612
    %614 = vdwg.mxu0
    %v615 = vmax.f32 %v264, 0.0
    %v616 = vmax.f32 %v266, 0.0
    %v617 = vmax.f32 %v457, 0.0
    %v618 = vmax.f32 %v459, 0.0
    %v619 = vmax.f32 %v268, 0.0
    %v620 = vmax.f32 %v270, 0.0
    %v621 = vmax.f32 %v461, 0.0
    %v622 = vmax.f32 %v463, 0.0
    %v623 = vmax.f32 %v274, 0.0
    %v624 = vmax.f32 %v276, 0.0
    %v625 = vmax.f32 %v467, 0.0
    %v626 = vmax.f32 %v469, 0.0
    %v627 = vmax.f32 %v278, 0.0
    %v628 = vmax.f32 %v280, 0.0
    %v629 = vmax.f32 %v471, 0.0
    %v630 = vmax.f32 %v473, 0.0
    %v631 = vmax.f32 %v284, 0.0
    %v632 = vmax.f32 %v286, 0.0
    %v633 = vmax.f32 %v477, 0.0
    %v634 = vmax.f32 %v479, 0.0
    %v635 = vmax.f32 %v288, 0.0
    %v636 = vmax.f32 %v290, 0.0
    %v637 = vmax.f32 %v481, 0.0
    %v638 = vmax.f32 %v483, 0.0
    %v639 = vmax.f32 %v294, 0.0
    %v640 = vmax.f32 %v296, 0.0
    %v641 = vmax.f32 %v487, 0.0
    %v642 = vmax.f32 %v489, 0.0
    %v643 = vmax.f32 %v298, 0.0
    %v644 = vmax.f32 %v300, 0.0
    %v645 = vmax.f32 %v491, 0.0
    %v646 = vmax.f32 %v493, 0.0
    %v647 = vmax.f32 %v304, 0.0
    %v648 = vmax.f32 %v306, 0.0
    %v649 = vmax.f32 %v497, 0.0
    %v650 = vmax.f32 %v499, 0.0
    %v651 = vmax.f32 %v308, 0.0
    %v652 = vmax.f32 %v310, 0.0
    %v653 = vmax.f32 %v501, 0.0
    %v654 = vmax.f32 %v503, 0.0
    %v655 = vmax.f32 %v314, 0.0
    %v656 = vmax.f32 %v316, 0.0
    %v657 = vmax.f32 %v507, 0.0
    %v658 = vmax.f32 %v509, 0.0
    %v659 = vmax.f32 %v318, 0.0
    %v660 = vmax.f32 %v320, 0.0
    %v661 = vmax.f32 %v511, 0.0
    %v662 = vmax.f32 %v513, 0.0
    %v663 = vmax.f32 %v324, 0.0
    %v664 = vmax.f32 %v326, 0.0
    %v665 = vmax.f32 %v517, 0.0
    %v666 = vmax.f32 %v519, 0.0
    %v667 = vmax.f32 %v328, 0.0
    %v668 = vmax.f32 %v330, 0.0
    %v669 = vmax.f32 %v521, 0.0
    %v670 = vmax.f32 %v523, 0.0
    %v671 = vmax.f32 %v334, 0.0
    %v672 = vmax.f32 %v336, 0.0
    %v673 = vmax.f32 %v527, 0.0
    %v674 = vmax.f32 %v529, 0.0
    %v675 = vmax.f32 %v338, 0.0
    %v676 = vmax.f32 %v340, 0.0
    %v677 = vmax.f32 %v531, 0.0
    %v678 = vmax.f32 %v533, 0.0
    %v679 = vmax.f32 %v344, 0.0
    %v680 = vmax.f32 %v346, 0.0
    %v681 = vmax.f32 %v537, 0.0
    %v682 = vmax.f32 %v539, 0.0
    %v683 = vmax.f32 %v348, 0.0
    %v684 = vmax.f32 %v350, 0.0
    %v685 = vmax.f32 %v541, 0.0
    %v686 = vmax.f32 %v543, 0.0
    %v687 = vmax.f32 %v354, 0.0
    %v688 = vmax.f32 %v356, 0.0
    %v689 = vmax.f32 %v547, 0.0
    %v690 = vmax.f32 %v549, 0.0
    %v691 = vmax.f32 %v358, 0.0
    %v692 = vmax.f32 %v360, 0.0
    %v693 = vmax.f32 %v551, 0.0
    %v694 = vmax.f32 %v553, 0.0
    %v695 = vmax.f32 %v364, 0.0
    %v696 = vmax.f32 %v366, 0.0
    %v697 = vmax.f32 %v557, 0.0
    %v698 = vmax.f32 %v559, 0.0
    %v699 = vmax.f32 %v368, 0.0
    %v700 = vmax.f32 %v370, 0.0
    %v701 = vmax.f32 %v561, 0.0
    %v702 = vmax.f32 %v563, 0.0
    %v703 = vmax.f32 %v374, 0.0
    %v704 = vmax.f32 %v376, 0.0
    %v705 = vmax.f32 %v567, 0.0
    %v706 = vmax.f32 %v569, 0.0
    %v707 = vmax.f32 %v378, 0.0
    %v708 = vmax.f32 %v380, 0.0
    %v709 = vmax.f32 %v571, 0.0
    %v710 = vmax.f32 %v573, 0.0
    %v711 = vmax.f32 %v384, 0.0
    %v712 = vmax.f32 %v386, 0.0
    %v713 = vmax.f32 %v577, 0.0
    %v714 = vmax.f32 %v579, 0.0
    %v715 = vmax.f32 %v388, 0.0
    %v716 = vmax.f32 %v390, 0.0
    %v717 = vmax.f32 %v581, 0.0
    %v718 = vmax.f32 %v583, 0.0
    %v719 = vmax.f32 %v394, 0.0
    %v720 = vmax.f32 %v396, 0.0
    %v721 = vmax.f32 %v587, 0.0
    %v722 = vmax.f32 %v589, 0.0
    %v723 = vmax.f32 %v398, 0.0
    %v724 = vmax.f32 %v400, 0.0
    %v725 = vmax.f32 %v591, 0.0
    %v726 = vmax.f32 %v593, 0.0
    %v727 = vmax.f32 %v404, 0.0
    %v728 = vmax.f32 %v406, 0.0
    %v729 = vmax.f32 %v597, 0.0
    %v730 = vmax.f32 %v599, 0.0
    %v731 = vmax.f32 %v408, 0.0
    %v732 = vmax.f32 %v410, 0.0
    %v733 = vmax.f32 %v601, 0.0
    %v734 = vmax.f32 %v603, 0.0
    %v735 = vmax.f32 %v414, 0.0
    %v736 = vmax.f32 %v416, 0.0
    %v737 = vmax.f32 %v607, 0.0
    %v738 = vmax.f32 %v609, 0.0
    %v739 = vmax.f32 %v418, 0.0
    %v740 = vmax.f32 %v420, 0.0
    %v741 = vmax.f32 %v611, 0.0
    %v742 = vmax.f32 %v613, 0.0
    %v743 = vpack.c.bf16 %v619, %v615
    %v744 = vpack.c.bf16 %v620, %v616
    %v745 = vpack.c.bf16 %v621, %v617
    %v746 = vpack.c.bf16 %v622, %v618
    %v747 = vpack.c.bf16 %v627, %v623
    %v748 = vpack.c.bf16 %v628, %v624
    %v749 = vpack.c.bf16 %v629, %v625
    %v750 = vpack.c.bf16 %v630, %v626
    %v751 = vpack.c.bf16 %v635, %v631
    %v752 = vpack.c.bf16 %v636, %v632
    %v753 = vpack.c.bf16 %v637, %v633
    %v754 = vpack.c.bf16 %v638, %v634
    %v755 = vpack.c.bf16 %v643, %v639
    %v756 = vpack.c.bf16 %v644, %v640
    %v757 = vpack.c.bf16 %v645, %v641
    %v758 = vpack.c.bf16 %v646, %v642
    %v759 = vpack.c.bf16 %v651, %v647
    %v760 = vpack.c.bf16 %v652, %v648
    %v761 = vpack.c.bf16 %v653, %v649
    %v762 = vpack.c.bf16 %v654, %v650
    %v763 = vpack.c.bf16 %v659, %v655
    %v764 = vpack.c.bf16 %v660, %v656
    %v765 = vpack.c.bf16 %v661, %v657
    %v766 = vpack.c.bf16 %v662, %v658
    %v767 = vpack.c.bf16 %v667, %v663
    %v768 = vpack.c.bf16 %v668, %v664
    %v769 = vpack.c.bf16 %v669, %v665
    %v770 = vpack.c.bf16 %v670, %v666
    %v771 = vpack.c.bf16 %v675, %v671
    %v772 = vpack.c.bf16 %v676, %v672
    %v773 = vpack.c.bf16 %v677, %v673
    %v774 = vpack.c.bf16 %v678, %v674
    %v775 = vpack.c.bf16 %v683, %v679
    %v776 = vpack.c.bf16 %v684, %v680
    %v777 = vpack.c.bf16 %v685, %v681
    %v778 = vpack.c.bf16 %v686, %v682
    %v779 = vpack.c.bf16 %v691, %v687
    %v780 = vpack.c.bf16 %v692, %v688
    %v781 = vpack.c.bf16 %v693, %v689
    %v782 = vpack.c.bf16 %v694, %v690
    %v783 = vpack.c.bf16 %v699, %v695
    %v784 = vpack.c.bf16 %v700, %v696
    %v785 = vpack.c.bf16 %v701, %v697
    %v786 = vpack.c.bf16 %v702, %v698
    %v787 = vpack.c.bf16 %v707, %v703
    %v788 = vpack.c.bf16 %v708, %v704
    %v789 = vpack.c.bf16 %v709, %v705
    %v790 = vpack.c.bf16 %v710, %v706
    %v791 = vpack.c.bf16 %v715, %v711
    %v792 = vpack.c.bf16 %v716, %v712
    %v793 = vpack.c.bf16 %v717, %v713
    %v794 = vpack.c.bf16 %v718, %v714
    %v795 = vpack.c.bf16 %v723, %v719
    %v796 = vpack.c.bf16 %v724, %v720
    %v797 = vpack.c.bf16 %v725, %v721
    %v798 = vpack.c.bf16 %v726, %v722
    %v799 = vpack.c.bf16 %v731, %v727
    %v800 = vpack.c.bf16 %v732, %v728
    %v801 = vpack.c.bf16 %v733, %v729
    %v802 = vpack.c.bf16 %v734, %v730
    %v803 = vpack.c.bf16 %v739, %v735
    %v804 = vpack.c.bf16 %v740, %v736
    %v805 = vpack.c.bf16 %v741, %v737
    %v806 = vpack.c.bf16 %v742, %v738
    %v807 = vld [vmem:[%s3] sm:$0xf]
    %v808 = vld [vmem:[%s3 + $0x4] sm:$0xf]
    %v809 = vld [vmem:[%s3 + $0x8] sm:$0xf]
    %v810 = vld [vmem:[%s3 + $0xc] sm:$0xf]
    %v811 = vld [vmem:[%s3 + $0x10] sm:$0xf]
    %v812 = vld [vmem:[%s3 + $0x14] sm:$0xf]
    %v813 = vld [vmem:[%s3 + $0x18] sm:$0xf]
    %v814 = vld [vmem:[%s3 + $0x1c] sm:$0xf]
    %v815 = vld [vmem:[%s3 + $0x20] sm:$0xf]
    %v816 = vld [vmem:[%s3 + $0x24] sm:$0xf]
    %v817 = vld [vmem:[%s3 + $0x28] sm:$0xf]
    %v818 = vld [vmem:[%s3 + $0x2c] sm:$0xf]
    %v819 = vld [vmem:[%s3 + $0x30] sm:$0xf]
    %v820 = vld [vmem:[%s3 + $0x34] sm:$0xf]
    %v821 = vld [vmem:[%s3 + $0x38] sm:$0xf]
    %v822 = vld [vmem:[%s3 + $0x3c] sm:$0xf]
    %v823 = vld [vmem:[%s3 + $0x40] sm:$0xf]
    %v824 = vld [vmem:[%s3 + $0x44] sm:$0xf]
    %v825 = vld [vmem:[%s3 + $0x48] sm:$0xf]
    %v826 = vld [vmem:[%s3 + $0x4c] sm:$0xf]
    %v827 = vld [vmem:[%s3 + $0x50] sm:$0xf]
    %v828 = vld [vmem:[%s3 + $0x54] sm:$0xf]
    %v829 = vld [vmem:[%s3 + $0x58] sm:$0xf]
    %v830 = vld [vmem:[%s3 + $0x5c] sm:$0xf]
    %v831 = vld [vmem:[%s3 + $0x60] sm:$0xf]
    %v832 = vld [vmem:[%s3 + $0x64] sm:$0xf]
    %v833 = vld [vmem:[%s3 + $0x68] sm:$0xf]
    %v834 = vld [vmem:[%s3 + $0x6c] sm:$0xf]
    %v835 = vld [vmem:[%s3 + $0x70] sm:$0xf]
    %v836 = vld [vmem:[%s3 + $0x74] sm:$0xf]
    %v837 = vld [vmem:[%s3 + $0x78] sm:$0xf]
    %v838 = vld [vmem:[%s3 + $0x7c] sm:$0xf]
    %v839 = vld [vmem:[%s3 + $0x80] sm:$0xf]
    %v840 = vld [vmem:[%s3 + $0x84] sm:$0xf]
    %v841 = vld [vmem:[%s3 + $0x88] sm:$0xf]
    %v842 = vld [vmem:[%s3 + $0x8c] sm:$0xf]
    %v843 = vld [vmem:[%s3 + $0x90] sm:$0xf]
    %v844 = vld [vmem:[%s3 + $0x94] sm:$0xf]
    %v845 = vld [vmem:[%s3 + $0x98] sm:$0xf]
    %v846 = vld [vmem:[%s3 + $0x9c] sm:$0xf]
    %v847 = vld [vmem:[%s3 + $0xa0] sm:$0xf]
    %v848 = vld [vmem:[%s3 + $0xa4] sm:$0xf]
    %v849 = vld [vmem:[%s3 + $0xa8] sm:$0xf]
    %v850 = vld [vmem:[%s3 + $0xac] sm:$0xf]
    %v851 = vld [vmem:[%s3 + $0xb0] sm:$0xf]
    %v852 = vld [vmem:[%s3 + $0xb4] sm:$0xf]
    %v853 = vld [vmem:[%s3 + $0xb8] sm:$0xf]
    %v854 = vld [vmem:[%s3 + $0xbc] sm:$0xf]
    %v855 = vld [vmem:[%s3 + $0xc0] sm:$0xf]
    %v856 = vld [vmem:[%s3 + $0xc4] sm:$0xf]
    %v857 = vld [vmem:[%s3 + $0xc8] sm:$0xf]
    %v858 = vld [vmem:[%s3 + $0xcc] sm:$0xf]
    %v859 = vld [vmem:[%s3 + $0xd0] sm:$0xf]
    %v860 = vld [vmem:[%s3 + $0xd4] sm:$0xf]
    %v861 = vld [vmem:[%s3 + $0xd8] sm:$0xf]
    %v862 = vld [vmem:[%s3 + $0xdc] sm:$0xf]
    %v863 = vld [vmem:[%s3 + $0xe0] sm:$0xf]
    %v864 = vld [vmem:[%s3 + $0xe4] sm:$0xf]
    %v865 = vld [vmem:[%s3 + $0xe8] sm:$0xf]
    %v866 = vld [vmem:[%s3 + $0xec] sm:$0xf]
    %v867 = vld [vmem:[%s3 + $0xf0] sm:$0xf]
    %v868 = vld [vmem:[%s3 + $0xf4] sm:$0xf]
    %v869 = vld [vmem:[%s3 + $0xf8] sm:$0xf]
    %v870 = vld [vmem:[%s3 + $0xfc] sm:$0xf]
    %v871 = vld [vmem:[%s4] sm:$0x1]
    %v873 = vlaneseq
    %v874 = vshrl.u32 %v873, 7
    %v875 = vsub.s32 0, %v874
    %v876 = vrot.slane %v871, %v875
    %v942 = vunpack.c.l.b16 %v807
    %v943 = vunpack.c.l.b16 %v808
    %v944 = vunpack.c.l.b16 %v809
    %v945 = vunpack.c.l.b16 %v810
    %v946 = vunpack.c.l.b16 %v811
    %v947 = vunpack.c.l.b16 %v812
    %v948 = vunpack.c.l.b16 %v813
    %v949 = vunpack.c.l.b16 %v814
    %v950 = vunpack.c.l.b16 %v815
    %v951 = vunpack.c.l.b16 %v816
    %v952 = vunpack.c.l.b16 %v817
    %v953 = vunpack.c.l.b16 %v818
    %v954 = vunpack.c.l.b16 %v819
    %v955 = vunpack.c.l.b16 %v820
    %v956 = vunpack.c.l.b16 %v821
    %v957 = vunpack.c.l.b16 %v822
    %v958 = vunpack.c.l.b16 %v823
    %v959 = vunpack.c.l.b16 %v824
    %v960 = vunpack.c.l.b16 %v825
    %v961 = vunpack.c.l.b16 %v826
    %v962 = vunpack.c.l.b16 %v827
    %v963 = vunpack.c.l.b16 %v828
    %v964 = vunpack.c.l.b16 %v829
    %v965 = vunpack.c.l.b16 %v830
    %v966 = vunpack.c.l.b16 %v831
    %v967 = vunpack.c.l.b16 %v832
    %v968 = vunpack.c.l.b16 %v833
    %v969 = vunpack.c.l.b16 %v834
    %v970 = vunpack.c.l.b16 %v835
    %v971 = vunpack.c.l.b16 %v836
    %v972 = vunpack.c.l.b16 %v837
    %v973 = vunpack.c.l.b16 %v838
    %v974 = vunpack.c.l.b16 %v839
    %v975 = vunpack.c.l.b16 %v840
    %v976 = vunpack.c.l.b16 %v841
    %v977 = vunpack.c.l.b16 %v842
    %v978 = vunpack.c.l.b16 %v843
    %v979 = vunpack.c.l.b16 %v844
    %v980 = vunpack.c.l.b16 %v845
    %v981 = vunpack.c.l.b16 %v846
    %v982 = vunpack.c.l.b16 %v847
    %v983 = vunpack.c.l.b16 %v848
    %v984 = vunpack.c.l.b16 %v849
    %v985 = vunpack.c.l.b16 %v850
    %v986 = vunpack.c.l.b16 %v851
    %v987 = vunpack.c.l.b16 %v852
    %v988 = vunpack.c.l.b16 %v853
    %v989 = vunpack.c.l.b16 %v854
    %v990 = vunpack.c.l.b16 %v855
    %v991 = vunpack.c.l.b16 %v856
    %v992 = vunpack.c.l.b16 %v857
    %v993 = vunpack.c.l.b16 %v858
    %v994 = vunpack.c.l.b16 %v859
    %v995 = vunpack.c.l.b16 %v860
    %v996 = vunpack.c.l.b16 %v861
    %v997 = vunpack.c.l.b16 %v862
    %v998 = vunpack.c.l.b16 %v863
    %v999 = vunpack.c.l.b16 %v864
    %v1000 = vunpack.c.l.b16 %v865
    %v1001 = vunpack.c.l.b16 %v866
    %v1002 = vunpack.c.l.b16 %v867
    %v1003 = vunpack.c.l.b16 %v868
    %v1004 = vunpack.c.l.b16 %v869
    %v1005 = vunpack.c.l.b16 %v870
    %v1006 = vpack.c.b16 %v943, %v942
    %v1007 = vpack.c.b16 %v945, %v944
    %v1008 = vpack.c.b16 %v947, %v946
    %v1009 = vpack.c.b16 %v949, %v948
    %v1010 = vpack.c.b16 %v951, %v950
    %v1011 = vpack.c.b16 %v953, %v952
    %v1012 = vpack.c.b16 %v955, %v954
    %v1013 = vpack.c.b16 %v957, %v956
    %v1014 = vpack.c.b16 %v959, %v958
    %v1015 = vpack.c.b16 %v961, %v960
    %v1016 = vpack.c.b16 %v963, %v962
    %v1017 = vpack.c.b16 %v965, %v964
    %v1018 = vpack.c.b16 %v967, %v966
    %v1019 = vpack.c.b16 %v969, %v968
    %v1020 = vpack.c.b16 %v971, %v970
    %v1021 = vpack.c.b16 %v973, %v972
    %v1022 = vpack.c.b16 %v975, %v974
    %v1023 = vpack.c.b16 %v977, %v976
    %v1024 = vpack.c.b16 %v979, %v978
    %v1025 = vpack.c.b16 %v981, %v980
    %v1026 = vpack.c.b16 %v983, %v982
    %v1027 = vpack.c.b16 %v985, %v984
    %v1028 = vpack.c.b16 %v987, %v986
    %v1029 = vpack.c.b16 %v989, %v988
    %v1030 = vpack.c.b16 %v991, %v990
    %v1031 = vpack.c.b16 %v993, %v992
    %v1032 = vpack.c.b16 %v995, %v994
    %v1033 = vpack.c.b16 %v997, %v996
    %v1034 = vpack.c.b16 %v999, %v998
    %v1035 = vpack.c.b16 %v1001, %v1000
    %v1036 = vpack.c.b16 %v1003, %v1002
    %v1037 = vpack.c.b16 %v1005, %v1004
    %1070 = vmatprep.subr.bf16.mxu0 0
    %1071 = vmatpush1.bf16.msra.mxu0 %v1013
    %1072 = vmatprep.subr.bf16.mxu0 0
    %1073 = vmatpush1.bf16.msra.mxu0 %v1012
    %1074 = vmatprep.subr.bf16.mxu0 0
    %1075 = vmatpush1.bf16.msra.mxu0 %v1011
    %1076 = vmatprep.subr.bf16.mxu0 0
    %1077 = vmatpush1.bf16.msra.mxu0 %v1010
    %1078 = vmatprep.subr.bf16.mxu0 0
    %1079 = vmatpush1.bf16.msra.mxu0 %v1009
    %1080 = vmatprep.subr.bf16.mxu0 0
    %1081 = vmatpush1.bf16.msra.mxu0 %v1008
    %1082 = vmatprep.subr.bf16.mxu0 0
    %1083 = vmatpush1.bf16.msra.mxu0 %v1007
    %1084 = vmatprep.subr.bf16.mxu0 0
    %1085 = vmatpush1.bf16.msra.mxu0 %v1006
    %1086 = vmatprep.subr.bf16.mxu0 0
    %1087 = vmatpush2.bf16.msra.mxu0 %v1021
    %1088 = vmatprep.subr.bf16.mxu0 0
    %1089 = vmatpush2.bf16.msra.mxu0 %v1020
    %1090 = vmatprep.subr.bf16.mxu0 0
    %1091 = vmatpush2.bf16.msra.mxu0 %v1019
    %1092 = vmatprep.subr.bf16.mxu0 0
    %1093 = vmatpush2.bf16.msra.mxu0 %v1018
    %1094 = vmatprep.subr.bf16.mxu0 0
    %1095 = vmatpush2.bf16.msra.mxu0 %v1017
    %1096 = vmatprep.subr.bf16.mxu0 0
    %1097 = vmatpush2.bf16.msra.mxu0 %v1016
    %1098 = vmatprep.subr.bf16.mxu0 0
    %1099 = vmatpush2.bf16.msra.mxu0 %v1015
    %1100 = vmatprep.subr.bf16.mxu0 0
    %1101 = vmatpush2.bf16.msra.mxu0 %v1014
    %1102 = vmatprep.mubr.bf16.mxu0 %v744
    %1103 = vmatmul.mubr.bf16.gmra.mxu0 %v743
    %v1104 = vpop.f32.mrf.mxu0
    %v1105 = vadd.f32 %v876, %v1104
    %v1106 = vpop.f32.mrf.mxu0
    %v1107 = vpop.f32.mrf.mxu0
    %v1108 = vadd.f32 %v876, %v1107
    %v1109 = vpop.f32.mrf.mxu0
    %1110 = vmatprep.mubr.bf16.mxu0 %v748
    %1111 = vmatmul.mubr.bf16.gmra.mxu0 %v747
    %v1112 = vpop.f32.mrf.mxu0
    %v1113 = vadd.f32 %v876, %v1112
    %v1114 = vpop.f32.mrf.mxu0
    %v1115 = vpop.f32.mrf.mxu0
    %v1116 = vadd.f32 %v876, %v1115
    %v1117 = vpop.f32.mrf.mxu0
    %1118 = vmatprep.mubr.bf16.mxu0 %v752
    %1119 = vmatmul.mubr.bf16.gmra.mxu0 %v751
    %v1120 = vpop.f32.mrf.mxu0
    %v1121 = vadd.f32 %v876, %v1120
    %v1122 = vpop.f32.mrf.mxu0
    %v1123 = vpop.f32.mrf.mxu0
    %v1124 = vadd.f32 %v876, %v1123
    %v1125 = vpop.f32.mrf.mxu0
    %1126 = vmatprep.mubr.bf16.mxu0 %v756
    %1127 = vmatmul.mubr.bf16.gmra.mxu0 %v755
    %v1128 = vpop.f32.mrf.mxu0
    %v1129 = vadd.f32 %v876, %v1128
    %v1130 = vpop.f32.mrf.mxu0
    %v1131 = vpop.f32.mrf.mxu0
    %v1132 = vadd.f32 %v876, %v1131
    %v1133 = vpop.f32.mrf.mxu0
    %1134 = vmatprep.mubr.bf16.mxu0 %v760
    %1135 = vmatmul.mubr.bf16.gmra.mxu0 %v759
    %v1136 = vpop.f32.mrf.mxu0
    %v1137 = vadd.f32 %v876, %v1136
    %v1138 = vpop.f32.mrf.mxu0
    %v1139 = vpop.f32.mrf.mxu0
    %v1140 = vadd.f32 %v876, %v1139
    %v1141 = vpop.f32.mrf.mxu0
    %1142 = vmatprep.mubr.bf16.mxu0 %v764
    %1143 = vmatmul.mubr.bf16.gmra.mxu0 %v763
    %v1144 = vpop.f32.mrf.mxu0
    %v1145 = vadd.f32 %v876, %v1144
    %v1146 = vpop.f32.mrf.mxu0
    %v1147 = vpop.f32.mrf.mxu0
    %v1148 = vadd.f32 %v876, %v1147
    %v1149 = vpop.f32.mrf.mxu0
    %1150 = vmatprep.mubr.bf16.mxu0 %v768
    %1151 = vmatmul.mubr.bf16.gmra.mxu0 %v767
    %v1152 = vpop.f32.mrf.mxu0
    %v1153 = vadd.f32 %v876, %v1152
    %v1154 = vpop.f32.mrf.mxu0
    %v1155 = vpop.f32.mrf.mxu0
    %v1156 = vadd.f32 %v876, %v1155
    %v1157 = vpop.f32.mrf.mxu0
    %1158 = vmatprep.mubr.bf16.mxu0 %v772
    %1159 = vmatmul.mubr.bf16.gmra.mxu0 %v771
    %v1160 = vpop.f32.mrf.mxu0
    %v1161 = vadd.f32 %v876, %v1160
    %v1162 = vpop.f32.mrf.mxu0
    %v1163 = vpop.f32.mrf.mxu0
    %v1164 = vadd.f32 %v876, %v1163
    %v1165 = vpop.f32.mrf.mxu0
    %1166 = vmatprep.mubr.bf16.mxu0 %v776
    %1167 = vmatmul.mubr.bf16.gmra.mxu0 %v775
    %v1168 = vpop.f32.mrf.mxu0
    %v1169 = vadd.f32 %v876, %v1168
    %v1170 = vpop.f32.mrf.mxu0
    %v1171 = vpop.f32.mrf.mxu0
    %v1172 = vadd.f32 %v876, %v1171
    %v1173 = vpop.f32.mrf.mxu0
    %1174 = vmatprep.mubr.bf16.mxu0 %v780
    %1175 = vmatmul.mubr.bf16.gmra.mxu0 %v779
    %v1176 = vpop.f32.mrf.mxu0
    %v1177 = vadd.f32 %v876, %v1176
    %v1178 = vpop.f32.mrf.mxu0
    %v1179 = vpop.f32.mrf.mxu0
    %v1180 = vadd.f32 %v876, %v1179
    %v1181 = vpop.f32.mrf.mxu0
    %1182 = vmatprep.mubr.bf16.mxu0 %v784
    %1183 = vmatmul.mubr.bf16.gmra.mxu0 %v783
    %v1184 = vpop.f32.mrf.mxu0
    %v1185 = vadd.f32 %v876, %v1184
    %v1186 = vpop.f32.mrf.mxu0
    %v1187 = vpop.f32.mrf.mxu0
    %v1188 = vadd.f32 %v876, %v1187
    %v1189 = vpop.f32.mrf.mxu0
    %1190 = vmatprep.mubr.bf16.mxu0 %v788
    %1191 = vmatmul.mubr.bf16.gmra.mxu0 %v787
    %v1192 = vpop.f32.mrf.mxu0
    %v1193 = vadd.f32 %v876, %v1192
    %v1194 = vpop.f32.mrf.mxu0
    %v1195 = vpop.f32.mrf.mxu0
    %v1196 = vadd.f32 %v876, %v1195
    %v1197 = vpop.f32.mrf.mxu0
    %1198 = vmatprep.mubr.bf16.mxu0 %v792
    %1199 = vmatmul.mubr.bf16.gmra.mxu0 %v791
    %v1200 = vpop.f32.mrf.mxu0
    %v1201 = vadd.f32 %v876, %v1200
    %v1202 = vpop.f32.mrf.mxu0
    %v1203 = vpop.f32.mrf.mxu0
    %v1204 = vadd.f32 %v876, %v1203
    %v1205 = vpop.f32.mrf.mxu0
    %1206 = vmatprep.mubr.bf16.mxu0 %v796
    %1207 = vmatmul.mubr.bf16.gmra.mxu0 %v795
    %v1208 = vpop.f32.mrf.mxu0
    %v1209 = vadd.f32 %v876, %v1208
    %v1210 = vpop.f32.mrf.mxu0
    %v1211 = vpop.f32.mrf.mxu0
    %v1212 = vadd.f32 %v876, %v1211
    %v1213 = vpop.f32.mrf.mxu0
    %1214 = vmatprep.mubr.bf16.mxu0 %v800
    %1215 = vmatmul.mubr.bf16.gmra.mxu0 %v799
    %v1216 = vpop.f32.mrf.mxu0
    %v1217 = vadd.f32 %v876, %v1216
    %v1218 = vpop.f32.mrf.mxu0
    %v1219 = vpop.f32.mrf.mxu0
    %v1220 = vadd.f32 %v876, %v1219
    %v1221 = vpop.f32.mrf.mxu0
    %1222 = vmatprep.mubr.bf16.mxu0 %v804
    %1223 = vmatmul.mubr.bf16.gmra.mxu0 %v803
    %v1224 = vpop.f32.mrf.mxu0
    %v1225 = vadd.f32 %v876, %v1224
    %v1226 = vpop.f32.mrf.mxu0
    %v1227 = vpop.f32.mrf.mxu0
    %v1228 = vadd.f32 %v876, %v1227
    %v1229 = vpop.f32.mrf.mxu0
    %1230 = vdwg.mxu0
    %1231 = vmatprep.subr.bf16.mxu0 0
    %1232 = vmatpush1.bf16.msra.mxu0 %v1029
    %1233 = vmatprep.subr.bf16.mxu0 0
    %1234 = vmatpush1.bf16.msra.mxu0 %v1028
    %1235 = vmatprep.subr.bf16.mxu0 0
    %1236 = vmatpush1.bf16.msra.mxu0 %v1027
    %1237 = vmatprep.subr.bf16.mxu0 0
    %1238 = vmatpush1.bf16.msra.mxu0 %v1026
    %1239 = vmatprep.subr.bf16.mxu0 0
    %1240 = vmatpush1.bf16.msra.mxu0 %v1025
    %1241 = vmatprep.subr.bf16.mxu0 0
    %1242 = vmatpush1.bf16.msra.mxu0 %v1024
    %1243 = vmatprep.subr.bf16.mxu0 0
    %1244 = vmatpush1.bf16.msra.mxu0 %v1023
    %1245 = vmatprep.subr.bf16.mxu0 0
    %1246 = vmatpush1.bf16.msra.mxu0 %v1022
    %1247 = vmatprep.subr.bf16.mxu0 0
    %1248 = vmatpush2.bf16.msra.mxu0 %v1037
    %1249 = vmatprep.subr.bf16.mxu0 0
    %1250 = vmatpush2.bf16.msra.mxu0 %v1036
    %1251 = vmatprep.subr.bf16.mxu0 0
    %1252 = vmatpush2.bf16.msra.mxu0 %v1035
    %1253 = vmatprep.subr.bf16.mxu0 0
    %1254 = vmatpush2.bf16.msra.mxu0 %v1034
    %1255 = vmatprep.subr.bf16.mxu0 0
    %1256 = vmatpush2.bf16.msra.mxu0 %v1033
    %1257 = vmatprep.subr.bf16.mxu0 0
    %1258 = vmatpush2.bf16.msra.mxu0 %v1032
    %1259 = vmatprep.subr.bf16.mxu0 0
    %1260 = vmatpush2.bf16.msra.mxu0 %v1031
    %1261 = vmatprep.subr.bf16.mxu0 0
    %1262 = vmatpush2.bf16.msra.mxu0 %v1030
    %1263 = vmatprep.mubr.bf16.mxu0 %v746
    %1264 = vmatmul.mubr.bf16.gmra.mxu0 %v745
    %v1265 = vpop.f32.mrf.mxu0
    %v1266 = vadd.f32 %v1105, %v1265
    %v1267 = vpop.f32.mrf.mxu0
    %v1268 = vpop.f32.mrf.mxu0
    %v1269 = vadd.f32 %v1108, %v1268
    %v1270 = vpop.f32.mrf.mxu0
    %1271 = vmatprep.mubr.bf16.mxu0 %v750
    %1272 = vmatmul.mubr.bf16.gmra.mxu0 %v749
    %v1273 = vpop.f32.mrf.mxu0
    %v1274 = vadd.f32 %v1113, %v1273
    %v1275 = vpop.f32.mrf.mxu0
    %v1276 = vpop.f32.mrf.mxu0
    %v1277 = vadd.f32 %v1116, %v1276
    %v1278 = vpop.f32.mrf.mxu0
    %1279 = vmatprep.mubr.bf16.mxu0 %v754
    %1280 = vmatmul.mubr.bf16.gmra.mxu0 %v753
    %v1281 = vpop.f32.mrf.mxu0
    %v1282 = vadd.f32 %v1121, %v1281
    %v1283 = vpop.f32.mrf.mxu0
    %v1284 = vpop.f32.mrf.mxu0
    %v1285 = vadd.f32 %v1124, %v1284
    %v1286 = vpop.f32.mrf.mxu0
    %1287 = vmatprep.mubr.bf16.mxu0 %v758
    %1288 = vmatmul.mubr.bf16.gmra.mxu0 %v757
    %v1289 = vpop.f32.mrf.mxu0
    %v1290 = vadd.f32 %v1129, %v1289
    %v1291 = vpop.f32.mrf.mxu0
    %v1292 = vpop.f32.mrf.mxu0
    %v1293 = vadd.f32 %v1132, %v1292
    %v1294 = vpop.f32.mrf.mxu0
    %1295 = vmatprep.mubr.bf16.mxu0 %v762
    %1296 = vmatmul.mubr.bf16.gmra.mxu0 %v761
    %v1297 = vpop.f32.mrf.mxu0
    %v1298 = vadd.f32 %v1137, %v1297
    %v1299 = vpop.f32.mrf.mxu0
    %v1300 = vpop.f32.mrf.mxu0
    %v1301 = vadd.f32 %v1140, %v1300
    %v1302 = vpop.f32.mrf.mxu0
    %1303 = vmatprep.mubr.bf16.mxu0 %v766
    %1304 = vmatmul.mubr.bf16.gmra.mxu0 %v765
    %v1305 = vpop.f32.mrf.mxu0
    %v1306 = vadd.f32 %v1145, %v1305
    %v1307 = vpop.f32.mrf.mxu0
    %v1308 = vpop.f32.mrf.mxu0
    %v1309 = vadd.f32 %v1148, %v1308
    %v1310 = vpop.f32.mrf.mxu0
    %1311 = vmatprep.mubr.bf16.mxu0 %v770
    %1312 = vmatmul.mubr.bf16.gmra.mxu0 %v769
    %v1313 = vpop.f32.mrf.mxu0
    %v1314 = vadd.f32 %v1153, %v1313
    %v1315 = vpop.f32.mrf.mxu0
    %v1316 = vpop.f32.mrf.mxu0
    %v1317 = vadd.f32 %v1156, %v1316
    %v1318 = vpop.f32.mrf.mxu0
    %1319 = vmatprep.mubr.bf16.mxu0 %v774
    %1320 = vmatmul.mubr.bf16.gmra.mxu0 %v773
    %v1321 = vpop.f32.mrf.mxu0
    %v1322 = vadd.f32 %v1161, %v1321
    %v1323 = vpop.f32.mrf.mxu0
    %v1324 = vpop.f32.mrf.mxu0
    %v1325 = vadd.f32 %v1164, %v1324
    %v1326 = vpop.f32.mrf.mxu0
    %1327 = vmatprep.mubr.bf16.mxu0 %v778
    %1328 = vmatmul.mubr.bf16.gmra.mxu0 %v777
    %v1329 = vpop.f32.mrf.mxu0
    %v1330 = vadd.f32 %v1169, %v1329
    %v1331 = vpop.f32.mrf.mxu0
    %v1332 = vpop.f32.mrf.mxu0
    %v1333 = vadd.f32 %v1172, %v1332
    %v1334 = vpop.f32.mrf.mxu0
    %1335 = vmatprep.mubr.bf16.mxu0 %v782
    %1336 = vmatmul.mubr.bf16.gmra.mxu0 %v781
    %v1337 = vpop.f32.mrf.mxu0
    %v1338 = vadd.f32 %v1177, %v1337
    %v1339 = vpop.f32.mrf.mxu0
    %v1340 = vpop.f32.mrf.mxu0
    %v1341 = vadd.f32 %v1180, %v1340
    %v1342 = vpop.f32.mrf.mxu0
    %1343 = vmatprep.mubr.bf16.mxu0 %v786
    %1344 = vmatmul.mubr.bf16.gmra.mxu0 %v785
    %v1345 = vpop.f32.mrf.mxu0
    %v1346 = vadd.f32 %v1185, %v1345
    %v1347 = vpop.f32.mrf.mxu0
    %v1348 = vpop.f32.mrf.mxu0
    %v1349 = vadd.f32 %v1188, %v1348
    %v1350 = vpop.f32.mrf.mxu0
    %1351 = vmatprep.mubr.bf16.mxu0 %v790
    %1352 = vmatmul.mubr.bf16.gmra.mxu0 %v789
    %v1353 = vpop.f32.mrf.mxu0
    %v1354 = vadd.f32 %v1193, %v1353
    %v1355 = vpop.f32.mrf.mxu0
    %v1356 = vpop.f32.mrf.mxu0
    %v1357 = vadd.f32 %v1196, %v1356
    %v1358 = vpop.f32.mrf.mxu0
    %1359 = vmatprep.mubr.bf16.mxu0 %v794
    %1360 = vmatmul.mubr.bf16.gmra.mxu0 %v793
    %v1361 = vpop.f32.mrf.mxu0
    %v1362 = vadd.f32 %v1201, %v1361
    %v1363 = vpop.f32.mrf.mxu0
    %v1364 = vpop.f32.mrf.mxu0
    %v1365 = vadd.f32 %v1204, %v1364
    %v1366 = vpop.f32.mrf.mxu0
    %1367 = vmatprep.mubr.bf16.mxu0 %v798
    %1368 = vmatmul.mubr.bf16.gmra.mxu0 %v797
    %v1369 = vpop.f32.mrf.mxu0
    %v1370 = vadd.f32 %v1209, %v1369
    %v1371 = vpop.f32.mrf.mxu0
    %v1372 = vpop.f32.mrf.mxu0
    %v1373 = vadd.f32 %v1212, %v1372
    %v1374 = vpop.f32.mrf.mxu0
    %1375 = vmatprep.mubr.bf16.mxu0 %v802
    %1376 = vmatmul.mubr.bf16.gmra.mxu0 %v801
    %v1377 = vpop.f32.mrf.mxu0
    %v1378 = vadd.f32 %v1217, %v1377
    %v1379 = vpop.f32.mrf.mxu0
    %v1380 = vpop.f32.mrf.mxu0
    %v1381 = vadd.f32 %v1220, %v1380
    %v1382 = vpop.f32.mrf.mxu0
    %1383 = vmatprep.mubr.bf16.mxu0 %v806
    %1384 = vmatmul.mubr.bf16.gmra.mxu0 %v805
    %v1385 = vpop.f32.mrf.mxu0
    %v1386 = vadd.f32 %v1225, %v1385
    %v1387 = vpop.f32.mrf.mxu0
    %v1388 = vpop.f32.mrf.mxu0
    %v1389 = vadd.f32 %v1228, %v1388
    %v1390 = vpop.f32.mrf.mxu0
    %1391 = vdwg.mxu0
    %v1392 = vmax.f32 %v1266, 0.0
    %v1393 = vmax.f32 %v1269, 0.0
    %v1394 = vmax.f32 %v1274, 0.0
    %v1395 = vmax.f32 %v1277, 0.0
    %v1396 = vmax.f32 %v1282, 0.0
    %v1397 = vmax.f32 %v1285, 0.0
    %v1398 = vmax.f32 %v1290, 0.0
    %v1399 = vmax.f32 %v1293, 0.0
    %v1400 = vmax.f32 %v1298, 0.0
    %v1401 = vmax.f32 %v1301, 0.0
    %v1402 = vmax.f32 %v1306, 0.0
    %v1403 = vmax.f32 %v1309, 0.0
    %v1404 = vmax.f32 %v1314, 0.0
    %v1405 = vmax.f32 %v1317, 0.0
    %v1406 = vmax.f32 %v1322, 0.0
    %v1407 = vmax.f32 %v1325, 0.0
    %v1408 = vmax.f32 %v1330, 0.0
    %v1409 = vmax.f32 %v1333, 0.0
    %v1410 = vmax.f32 %v1338, 0.0
    %v1411 = vmax.f32 %v1341, 0.0
    %v1412 = vmax.f32 %v1346, 0.0
    %v1413 = vmax.f32 %v1349, 0.0
    %v1414 = vmax.f32 %v1354, 0.0
    %v1415 = vmax.f32 %v1357, 0.0
    %v1416 = vmax.f32 %v1362, 0.0
    %v1417 = vmax.f32 %v1365, 0.0
    %v1418 = vmax.f32 %v1370, 0.0
    %v1419 = vmax.f32 %v1373, 0.0
    %v1420 = vmax.f32 %v1378, 0.0
    %v1421 = vmax.f32 %v1381, 0.0
    %v1422 = vmax.f32 %v1386, 0.0
    %v1423 = vmax.f32 %v1389, 0.0
    %v1424 = vpack.c.bf16 %v1393, %v1392
    %v1425 = vpack.c.bf16 %v1395, %v1394
    %v1426 = vpack.c.bf16 %v1397, %v1396
    %v1427 = vpack.c.bf16 %v1399, %v1398
    %v1428 = vpack.c.bf16 %v1401, %v1400
    %v1429 = vpack.c.bf16 %v1403, %v1402
    %v1430 = vpack.c.bf16 %v1405, %v1404
    %v1431 = vpack.c.bf16 %v1407, %v1406
    %v1432 = vpack.c.bf16 %v1409, %v1408
    %v1433 = vpack.c.bf16 %v1411, %v1410
    %v1434 = vpack.c.bf16 %v1413, %v1412
    %v1435 = vpack.c.bf16 %v1415, %v1414
    %v1436 = vpack.c.bf16 %v1417, %v1416
    %v1437 = vpack.c.bf16 %v1419, %v1418
    %v1438 = vpack.c.bf16 %v1421, %v1420
    %v1439 = vpack.c.bf16 %v1423, %v1422
    %v1440 = vld [vmem:[#allocation2] sm:$0xf]
    %v1441 = vld [vmem:[#allocation2 + $0x4] sm:$0xf]
    %v1442 = vld [vmem:[#allocation2 + $0x8] sm:$0xf]
    %v1443 = vld [vmem:[#allocation2 + $0xc] sm:$0xf]
    %v1444 = vld [vmem:[#allocation2 + $0x10] sm:$0xf]
    %v1445 = vld [vmem:[#allocation2 + $0x14] sm:$0xf]
    %v1446 = vld [vmem:[#allocation2 + $0x18] sm:$0xf]
    %v1447 = vld [vmem:[#allocation2 + $0x1c] sm:$0xf]
    %v1448 = vld [vmem:[#allocation2 + $0x20] sm:$0xf]
    %v1449 = vld [vmem:[#allocation2 + $0x24] sm:$0xf]
    %v1450 = vld [vmem:[#allocation2 + $0x28] sm:$0xf]
    %v1451 = vld [vmem:[#allocation2 + $0x2c] sm:$0xf]
    %v1452 = vld [vmem:[#allocation2 + $0x30] sm:$0xf]
    %v1453 = vld [vmem:[#allocation2 + $0x34] sm:$0xf]
    %v1454 = vld [vmem:[#allocation2 + $0x38] sm:$0xf]
    %v1455 = vld [vmem:[#allocation2 + $0x3c] sm:$0xf]
    %v1456 = vld [vmem:[%s6] sm:$0x1]
    %v1458 = vlaneseq
    %v1459 = vshrl.u32 %v1458, 7
    %v1460 = vsub.s32 0, %v1459
    %v1461 = vrot.slane %v1456, %v1460
    %v1479 = vunpack.c.l.b16 %v1440
    %v1480 = vunpack.c.l.b16 %v1441
    %v1481 = vunpack.c.l.b16 %v1442
    %v1482 = vunpack.c.l.b16 %v1443
    %v1483 = vunpack.c.l.b16 %v1444
    %v1484 = vunpack.c.l.b16 %v1445
    %v1485 = vunpack.c.l.b16 %v1446
    %v1486 = vunpack.c.l.b16 %v1447
    %v1487 = vunpack.c.l.b16 %v1448
    %v1488 = vunpack.c.l.b16 %v1449
    %v1489 = vunpack.c.l.b16 %v1450
    %v1490 = vunpack.c.l.b16 %v1451
    %v1491 = vunpack.c.l.b16 %v1452
    %v1492 = vunpack.c.l.b16 %v1453
    %v1493 = vunpack.c.l.b16 %v1454
    %v1494 = vunpack.c.l.b16 %v1455
    %v1495 = vpack.c.b16 %v1480, %v1479
    %v1496 = vpack.c.b16 %v1482, %v1481
    %v1497 = vpack.c.b16 %v1484, %v1483
    %v1498 = vpack.c.b16 %v1486, %v1485
    %v1499 = vpack.c.b16 %v1488, %v1487
    %v1500 = vpack.c.b16 %v1490, %v1489
    %v1501 = vpack.c.b16 %v1492, %v1491
    %v1502 = vpack.c.b16 %v1494, %v1493
    %1511 = vmatprep.subr.bf16.mxu0 0
    %1512 = vmatpush1.bf16.msra.mxu0 %v1502
    %1513 = vmatprep.subr.bf16.mxu0 0
    %1514 = vmatpush1.bf16.msra.mxu0 %v1501
    %1515 = vmatprep.subr.bf16.mxu0 0
    %1516 = vmatpush1.bf16.msra.mxu0 %v1500
    %1517 = vmatprep.subr.bf16.mxu0 0
    %1518 = vmatpush1.bf16.msra.mxu0 %v1499
    %1519 = vmatprep.subr.bf16.mxu0 0
    %1520 = vmatpush1.bf16.msra.mxu0 %v1498
    %1521 = vmatprep.subr.bf16.mxu0 0
    %1522 = vmatpush1.bf16.msra.mxu0 %v1497
    %1523 = vmatprep.subr.bf16.mxu0 0
    %1524 = vmatpush1.bf16.msra.mxu0 %v1496
    %1525 = vmatprep.subr.bf16.mxu0 0
    %1526 = vmatpush1.bf16.msra.mxu0 %v1495
    %1527 = vmatprep.subr.bf16.mxu0 0
    %1528 = vmatpush2.bf16.msra.mxu0 0
    %1529 = vmatprep.subr.bf16.mxu0 0
    %1530 = vmatpush2.bf16.msra.mxu0 0
    %1531 = vmatprep.subr.bf16.mxu0 0
    %1532 = vmatpush2.bf16.msra.mxu0 0
    %1533 = vmatprep.subr.bf16.mxu0 0
    %1534 = vmatpush2.bf16.msra.mxu0 0
    %1535 = vmatprep.subr.bf16.mxu0 0
    %1536 = vmatpush2.bf16.msra.mxu0 0
    %1537 = vmatprep.subr.bf16.mxu0 0
    %1538 = vmatpush2.bf16.msra.mxu0 0
    %1539 = vmatprep.subr.bf16.mxu0 0
    %1540 = vmatpush2.bf16.msra.mxu0 0
    %1541 = vmatprep.subr.bf16.mxu0 0
    %1542 = vmatpush2.bf16.msra.mxu0 0
    %1543 = vmatprep.mubr.bf16.mxu0 0
    %1544 = vmatmul.mubr.bf16.gmra.mxu0 %v1424
    %v1545 = vpop.f32.mrf.mxu0
    %v1546 = vadd.f32 %v1461, %v1545
    %v1547 = vpop.f32.mrf.mxu0
    %v1548 = vpop.f32.mrf.mxu0
    %v1549 = vadd.f32 %v1461, %v1548
    %v1550 = vpop.f32.mrf.mxu0
    %1551 = vmatprep.mubr.bf16.mxu0 0
    %1552 = vmatmul.mubr.bf16.gmra.mxu0 %v1425
    %v1553 = vpop.f32.mrf.mxu0
    %v1554 = vadd.f32 %v1461, %v1553
    %v1555 = vpop.f32.mrf.mxu0
    %v1556 = vpop.f32.mrf.mxu0
    %v1557 = vadd.f32 %v1461, %v1556
    %v1558 = vpop.f32.mrf.mxu0
    %1559 = vmatprep.mubr.bf16.mxu0 0
    %1560 = vmatmul.mubr.bf16.gmra.mxu0 %v1426
    %v1561 = vpop.f32.mrf.mxu0
    %v1562 = vadd.f32 %v1461, %v1561
    %v1563 = vpop.f32.mrf.mxu0
    %v1564 = vpop.f32.mrf.mxu0
    %v1565 = vadd.f32 %v1461, %v1564
    %v1566 = vpop.f32.mrf.mxu0
    %1567 = vmatprep.mubr.bf16.mxu0 0
    %1568 = vmatmul.mubr.bf16.gmra.mxu0 %v1427
    %v1569 = vpop.f32.mrf.mxu0
    %v1570 = vadd.f32 %v1461, %v1569
    %v1571 = vpop.f32.mrf.mxu0
    %v1572 = vpop.f32.mrf.mxu0
    %v1573 = vadd.f32 %v1461, %v1572
    %v1574 = vpop.f32.mrf.mxu0
    %1575 = vmatprep.mubr.bf16.mxu0 0
    %1576 = vmatmul.mubr.bf16.gmra.mxu0 %v1428
    %v1577 = vpop.f32.mrf.mxu0
    %v1578 = vadd.f32 %v1461, %v1577
    %v1579 = vpop.f32.mrf.mxu0
    %v1580 = vpop.f32.mrf.mxu0
    %v1581 = vadd.f32 %v1461, %v1580
    %v1582 = vpop.f32.mrf.mxu0
    %1583 = vmatprep.mubr.bf16.mxu0 0
    %1584 = vmatmul.mubr.bf16.gmra.mxu0 %v1429
    %v1585 = vpop.f32.mrf.mxu0
    %v1586 = vadd.f32 %v1461, %v1585
    %v1587 = vpop.f32.mrf.mxu0
    %v1588 = vpop.f32.mrf.mxu0
    %v1589 = vadd.f32 %v1461, %v1588
    %v1590 = vpop.f32.mrf.mxu0
    %1591 = vmatprep.mubr.bf16.mxu0 0
    %1592 = vmatmul.mubr.bf16.gmra.mxu0 %v1430
    %v1593 = vpop.f32.mrf.mxu0
    %v1594 = vadd.f32 %v1461, %v1593
    %v1595 = vpop.f32.mrf.mxu0
    %v1596 = vpop.f32.mrf.mxu0
    %v1597 = vadd.f32 %v1461, %v1596
    %v1598 = vpop.f32.mrf.mxu0
    %1599 = vmatprep.mubr.bf16.mxu0 0
    %1600 = vmatmul.mubr.bf16.gmra.mxu0 %v1431
    %v1601 = vpop.f32.mrf.mxu0
    %v1602 = vadd.f32 %v1461, %v1601
    %v1603 = vpop.f32.mrf.mxu0
    %v1604 = vpop.f32.mrf.mxu0
    %v1605 = vadd.f32 %v1461, %v1604
    %v1606 = vpop.f32.mrf.mxu0
    %1607 = vmatprep.mubr.bf16.mxu0 0
    %1608 = vmatmul.mubr.bf16.gmra.mxu0 %v1432
    %v1609 = vpop.f32.mrf.mxu0
    %v1610 = vadd.f32 %v1461, %v1609
    %v1611 = vpop.f32.mrf.mxu0
    %v1612 = vpop.f32.mrf.mxu0
    %v1613 = vadd.f32 %v1461, %v1612
    %v1614 = vpop.f32.mrf.mxu0
    %1615 = vmatprep.mubr.bf16.mxu0 0
    %1616 = vmatmul.mubr.bf16.gmra.mxu0 %v1433
    %v1617 = vpop.f32.mrf.mxu0
    %v1618 = vadd.f32 %v1461, %v1617
    %v1619 = vpop.f32.mrf.mxu0
    %v1620 = vpop.f32.mrf.mxu0
    %v1621 = vadd.f32 %v1461, %v1620
    %v1622 = vpop.f32.mrf.mxu0
    %1623 = vmatprep.mubr.bf16.mxu0 0
    %1624 = vmatmul.mubr.bf16.gmra.mxu0 %v1434
    %v1625 = vpop.f32.mrf.mxu0
    %v1626 = vadd.f32 %v1461, %v1625
    %v1627 = vpop.f32.mrf.mxu0
    %v1628 = vpop.f32.mrf.mxu0
    %v1629 = vadd.f32 %v1461, %v1628
    %v1630 = vpop.f32.mrf.mxu0
    %1631 = vmatprep.mubr.bf16.mxu0 0
    %1632 = vmatmul.mubr.bf16.gmra.mxu0 %v1435
    %v1633 = vpop.f32.mrf.mxu0
    %v1634 = vadd.f32 %v1461, %v1633
    %v1635 = vpop.f32.mrf.mxu0
    %v1636 = vpop.f32.mrf.mxu0
    %v1637 = vadd.f32 %v1461, %v1636
    %v1638 = vpop.f32.mrf.mxu0
    %1639 = vmatprep.mubr.bf16.mxu0 0
    %1640 = vmatmul.mubr.bf16.gmra.mxu0 %v1436
    %v1641 = vpop.f32.mrf.mxu0
    %v1642 = vadd.f32 %v1461, %v1641
    %v1643 = vpop.f32.mrf.mxu0
    %v1644 = vpop.f32.mrf.mxu0
    %v1645 = vadd.f32 %v1461, %v1644
    %v1646 = vpop.f32.mrf.mxu0
    %1647 = vmatprep.mubr.bf16.mxu0 0
    %1648 = vmatmul.mubr.bf16.gmra.mxu0 %v1437
    %v1649 = vpop.f32.mrf.mxu0
    %v1650 = vadd.f32 %v1461, %v1649
    %v1651 = vpop.f32.mrf.mxu0
    %v1652 = vpop.f32.mrf.mxu0
    %v1653 = vadd.f32 %v1461, %v1652
    %v1654 = vpop.f32.mrf.mxu0
    %1655 = vmatprep.mubr.bf16.mxu0 0
    %1656 = vmatmul.mubr.bf16.gmra.mxu0 %v1438
    %v1657 = vpop.f32.mrf.mxu0
    %v1658 = vadd.f32 %v1461, %v1657
    %v1659 = vpop.f32.mrf.mxu0
    %v1660 = vpop.f32.mrf.mxu0
    %v1661 = vadd.f32 %v1461, %v1660
    %v1662 = vpop.f32.mrf.mxu0
    %1663 = vmatprep.mubr.bf16.mxu0 0
    %1664 = vmatmul.mubr.bf16.gmra.mxu0 %v1439
    %v1665 = vpop.f32.mrf.mxu0
    %v1666 = vadd.f32 %v1461, %v1665
    %v1667 = vpop.f32.mrf.mxu0
    %v1668 = vpop.f32.mrf.mxu0
    %v1669 = vadd.f32 %v1461, %v1668
    %v1670 = vpop.f32.mrf.mxu0
    %1671 = vdwg.mxu0
    %v1672 = vmax.f32 %v1546, 0.0
    %v1673 = vmax.f32 %v1549, 0.0
    %v1674 = vmax.f32 %v1554, 0.0
    %v1675 = vmax.f32 %v1557, 0.0
    %v1676 = vmax.f32 %v1562, 0.0
    %v1677 = vmax.f32 %v1565, 0.0
    %v1678 = vmax.f32 %v1570, 0.0
    %v1679 = vmax.f32 %v1573, 0.0
    %v1680 = vmax.f32 %v1578, 0.0
    %v1681 = vmax.f32 %v1581, 0.0
    %v1682 = vmax.f32 %v1586, 0.0
    %v1683 = vmax.f32 %v1589, 0.0
    %v1684 = vmax.f32 %v1594, 0.0
    %v1685 = vmax.f32 %v1597, 0.0
    %v1686 = vmax.f32 %v1602, 0.0
    %v1687 = vmax.f32 %v1605, 0.0
    %v1688 = vmax.f32 %v1610, 0.0
    %v1689 = vmax.f32 %v1613, 0.0
    %v1690 = vmax.f32 %v1618, 0.0
    %v1691 = vmax.f32 %v1621, 0.0
    %v1692 = vmax.f32 %v1626, 0.0
    %v1693 = vmax.f32 %v1629, 0.0
    %v1694 = vmax.f32 %v1634, 0.0
    %v1695 = vmax.f32 %v1637, 0.0
    %v1696 = vmax.f32 %v1642, 0.0
    %v1697 = vmax.f32 %v1645, 0.0
    %v1698 = vmax.f32 %v1650, 0.0
    %v1699 = vmax.f32 %v1653, 0.0
    %v1700 = vmax.f32 %v1658, 0.0
    %v1701 = vmax.f32 %v1661, 0.0
    %v1702 = vmax.f32 %v1666, 0.0
    %v1703 = vmax.f32 %v1669, 0.0
    %v1704 = vpack.c.bf16 %v1673, %v1672
    %v1705 = vpack.c.bf16 %v1675, %v1674
    %v1706 = vpack.c.bf16 %v1677, %v1676
    %v1707 = vpack.c.bf16 %v1679, %v1678
    %v1708 = vpack.c.bf16 %v1681, %v1680
    %v1709 = vpack.c.bf16 %v1683, %v1682
    %v1710 = vpack.c.bf16 %v1685, %v1684
    %v1711 = vpack.c.bf16 %v1687, %v1686
    %v1712 = vpack.c.bf16 %v1689, %v1688
    %v1713 = vpack.c.bf16 %v1691, %v1690
    %v1714 = vpack.c.bf16 %v1693, %v1692
    %v1715 = vpack.c.bf16 %v1695, %v1694
    %v1716 = vpack.c.bf16 %v1697, %v1696
    %v1717 = vpack.c.bf16 %v1699, %v1698
    %v1718 = vpack.c.bf16 %v1701, %v1700
    %v1719 = vpack.c.bf16 %v1703, %v1702
    %v1720 = vld [vmem:[#allocation5] sm:$0xf]
    %v1721 = vld [vmem:[#allocation5 + $0x4] sm:$0xf]
    %v1722 = vld [vmem:[#allocation5 + $0x8] sm:$0xf]
    %v1723 = vld [vmem:[#allocation5 + $0xc] sm:$0xf]
    %v1724 = vld [vmem:[#allocation5 + $0x10] sm:$0xf]
    %v1725 = vld [vmem:[#allocation5 + $0x14] sm:$0xf]
    %v1726 = vld [vmem:[#allocation5 + $0x18] sm:$0xf]
    %v1727 = vld [vmem:[#allocation5 + $0x1c] sm:$0xf]
    %v1728 = vld [vmem:[#allocation5 + $0x20] sm:$0xf]
    %v1729 = vld [vmem:[#allocation5 + $0x24] sm:$0xf]
    %v1730 = vld [vmem:[#allocation5 + $0x28] sm:$0xf]
    %v1731 = vld [vmem:[#allocation5 + $0x2c] sm:$0xf]
    %v1732 = vld [vmem:[#allocation5 + $0x30] sm:$0xf]
    %v1733 = vld [vmem:[#allocation5 + $0x34] sm:$0xf]
    %v1734 = vld [vmem:[#allocation5 + $0x38] sm:$0xf]
    %v1735 = vld [vmem:[#allocation5 + $0x3c] sm:$0xf]
    %v1736 = vld [vmem:[%s8] sm:$0x1]
    %v1738 = vlaneseq
    %v1739 = vshrl.u32 %v1738, 7
    %v1740 = vsub.s32 0, %v1739
    %v1741 = vrot.slane %v1736, %v1740
    %v1759 = vunpack.c.l.b16 %v1720
    %v1760 = vunpack.c.l.b16 %v1721
    %v1761 = vunpack.c.l.b16 %v1722
    %v1762 = vunpack.c.l.b16 %v1723
    %v1763 = vunpack.c.l.b16 %v1724
    %v1764 = vunpack.c.l.b16 %v1725
    %v1765 = vunpack.c.l.b16 %v1726
    %v1766 = vunpack.c.l.b16 %v1727
    %v1767 = vunpack.c.l.b16 %v1728
    %v1768 = vunpack.c.l.b16 %v1729
    %v1769 = vunpack.c.l.b16 %v1730
    %v1770 = vunpack.c.l.b16 %v1731
    %v1771 = vunpack.c.l.b16 %v1732
    %v1772 = vunpack.c.l.b16 %v1733
    %v1773 = vunpack.c.l.b16 %v1734
    %v1774 = vunpack.c.l.b16 %v1735
    %v1775 = vpack.c.b16 %v1760, %v1759
    %v1776 = vpack.c.b16 %v1762, %v1761
    %v1777 = vpack.c.b16 %v1764, %v1763
    %v1778 = vpack.c.b16 %v1766, %v1765
    %v1779 = vpack.c.b16 %v1768, %v1767
    %v1780 = vpack.c.b16 %v1770, %v1769
    %v1781 = vpack.c.b16 %v1772, %v1771
    %v1782 = vpack.c.b16 %v1774, %v1773
    %1791 = vmatprep.subr.bf16.mxu0 0
    %1792 = vmatpush1.bf16.msra.mxu0 %v1782
    %1793 = vmatprep.subr.bf16.mxu0 0
    %1794 = vmatpush1.bf16.msra.mxu0 %v1781
    %1795 = vmatprep.subr.bf16.mxu0 0
    %1796 = vmatpush1.bf16.msra.mxu0 %v1780
    %1797 = vmatprep.subr.bf16.mxu0 0
    %1798 = vmatpush1.bf16.msra.mxu0 %v1779
    %1799 = vmatprep.subr.bf16.mxu0 0
    %1800 = vmatpush1.bf16.msra.mxu0 %v1778
    %1801 = vmatprep.subr.bf16.mxu0 0
    %1802 = vmatpush1.bf16.msra.mxu0 %v1777
    %1803 = vmatprep.subr.bf16.mxu0 0
    %1804 = vmatpush1.bf16.msra.mxu0 %v1776
    %1805 = vmatprep.subr.bf16.mxu0 0
    %1806 = vmatpush1.bf16.msra.mxu0 %v1775
    %1807 = vmatprep.subr.bf16.mxu0 0
    %1808 = vmatpush2.bf16.msra.mxu0 0
    %1809 = vmatprep.subr.bf16.mxu0 0
    %1810 = vmatpush2.bf16.msra.mxu0 0
    %1811 = vmatprep.subr.bf16.mxu0 0
    %1812 = vmatpush2.bf16.msra.mxu0 0
    %1813 = vmatprep.subr.bf16.mxu0 0
    %1814 = vmatpush2.bf16.msra.mxu0 0
    %1815 = vmatprep.subr.bf16.mxu0 0
    %1816 = vmatpush2.bf16.msra.mxu0 0
    %1817 = vmatprep.subr.bf16.mxu0 0
    %1818 = vmatpush2.bf16.msra.mxu0 0
    %1819 = vmatprep.subr.bf16.mxu0 0
    %1820 = vmatpush2.bf16.msra.mxu0 0
    %1821 = vmatprep.subr.bf16.mxu0 0
    %1822 = vmatpush2.bf16.msra.mxu0 0
    %1823 = vmatprep.mubr.bf16.mxu0 0
    %1824 = vmatmul.mubr.bf16.gmra.mxu0 %v1704
    %v1825 = vpop.f32.mrf.mxu0
    %v1826 = vadd.f32 %v1741, %v1825
    %v1827 = vpop.f32.mrf.mxu0
    %v1828 = vpop.f32.mrf.mxu0
    %v1829 = vadd.f32 %v1741, %v1828
    %v1830 = vpop.f32.mrf.mxu0
    %1831 = vmatprep.mubr.bf16.mxu0 0
    %1832 = vmatmul.mubr.bf16.gmra.mxu0 %v1705
    %v1833 = vpop.f32.mrf.mxu0
    %v1834 = vadd.f32 %v1741, %v1833
    %v1835 = vpop.f32.mrf.mxu0
    %v1836 = vpop.f32.mrf.mxu0
    %v1837 = vadd.f32 %v1741, %v1836
    %v1838 = vpop.f32.mrf.mxu0
    %1839 = vmatprep.mubr.bf16.mxu0 0
    %1840 = vmatmul.mubr.bf16.gmra.mxu0 %v1706
    %v1841 = vpop.f32.mrf.mxu0
    %v1842 = vadd.f32 %v1741, %v1841
    %v1843 = vpop.f32.mrf.mxu0
    %v1844 = vpop.f32.mrf.mxu0
    %v1845 = vadd.f32 %v1741, %v1844
    %v1846 = vpop.f32.mrf.mxu0
    %1847 = vmatprep.mubr.bf16.mxu0 0
    %1848 = vmatmul.mubr.bf16.gmra.mxu0 %v1707
    %v1849 = vpop.f32.mrf.mxu0
    %v1850 = vadd.f32 %v1741, %v1849
    %v1851 = vpop.f32.mrf.mxu0
    %v1852 = vpop.f32.mrf.mxu0
    %v1853 = vadd.f32 %v1741, %v1852
    %v1854 = vpop.f32.mrf.mxu0
    %1855 = vmatprep.mubr.bf16.mxu0 0
    %1856 = vmatmul.mubr.bf16.gmra.mxu0 %v1708
    %v1857 = vpop.f32.mrf.mxu0
    %v1858 = vadd.f32 %v1741, %v1857
    %v1859 = vpop.f32.mrf.mxu0
    %v1860 = vpop.f32.mrf.mxu0
    %v1861 = vadd.f32 %v1741, %v1860
    %v1862 = vpop.f32.mrf.mxu0
    %1863 = vmatprep.mubr.bf16.mxu0 0
    %1864 = vmatmul.mubr.bf16.gmra.mxu0 %v1709
    %v1865 = vpop.f32.mrf.mxu0
    %v1866 = vadd.f32 %v1741, %v1865
    %v1867 = vpop.f32.mrf.mxu0
    %v1868 = vpop.f32.mrf.mxu0
    %v1869 = vadd.f32 %v1741, %v1868
    %v1870 = vpop.f32.mrf.mxu0
    %1871 = vmatprep.mubr.bf16.mxu0 0
    %1872 = vmatmul.mubr.bf16.gmra.mxu0 %v1710
    %v1873 = vpop.f32.mrf.mxu0
    %v1874 = vadd.f32 %v1741, %v1873
    %v1875 = vpop.f32.mrf.mxu0
    %v1876 = vpop.f32.mrf.mxu0
    %v1877 = vadd.f32 %v1741, %v1876
    %v1878 = vpop.f32.mrf.mxu0
    %1879 = vmatprep.mubr.bf16.mxu0 0
    %1880 = vmatmul.mubr.bf16.gmra.mxu0 %v1711
    %v1881 = vpop.f32.mrf.mxu0
    %v1882 = vadd.f32 %v1741, %v1881
    %v1883 = vpop.f32.mrf.mxu0
    %v1884 = vpop.f32.mrf.mxu0
    %v1885 = vadd.f32 %v1741, %v1884
    %v1886 = vpop.f32.mrf.mxu0
    %1887 = vmatprep.mubr.bf16.mxu0 0
    %1888 = vmatmul.mubr.bf16.gmra.mxu0 %v1712
    %v1889 = vpop.f32.mrf.mxu0
    %v1890 = vadd.f32 %v1741, %v1889
    %v1891 = vpop.f32.mrf.mxu0
    %v1892 = vpop.f32.mrf.mxu0
    %v1893 = vadd.f32 %v1741, %v1892
    %v1894 = vpop.f32.mrf.mxu0
    %1895 = vmatprep.mubr.bf16.mxu0 0
    %1896 = vmatmul.mubr.bf16.gmra.mxu0 %v1713
    %v1897 = vpop.f32.mrf.mxu0
    %v1898 = vadd.f32 %v1741, %v1897
    %v1899 = vpop.f32.mrf.mxu0
    %v1900 = vpop.f32.mrf.mxu0
    %v1901 = vadd.f32 %v1741, %v1900
    %v1902 = vpop.f32.mrf.mxu0
    %1903 = vmatprep.mubr.bf16.mxu0 0
    %1904 = vmatmul.mubr.bf16.gmra.mxu0 %v1714
    %v1905 = vpop.f32.mrf.mxu0
    %v1906 = vadd.f32 %v1741, %v1905
    %v1907 = vpop.f32.mrf.mxu0
    %v1908 = vpop.f32.mrf.mxu0
    %v1909 = vadd.f32 %v1741, %v1908
    %v1910 = vpop.f32.mrf.mxu0
    %1911 = vmatprep.mubr.bf16.mxu0 0
    %1912 = vmatmul.mubr.bf16.gmra.mxu0 %v1715
    %v1913 = vpop.f32.mrf.mxu0
    %v1914 = vadd.f32 %v1741, %v1913
    %v1915 = vpop.f32.mrf.mxu0
    %v1916 = vpop.f32.mrf.mxu0
    %v1917 = vadd.f32 %v1741, %v1916
    %v1918 = vpop.f32.mrf.mxu0
    %1919 = vmatprep.mubr.bf16.mxu0 0
    %1920 = vmatmul.mubr.bf16.gmra.mxu0 %v1716
    %v1921 = vpop.f32.mrf.mxu0
    %v1922 = vadd.f32 %v1741, %v1921
    %v1923 = vpop.f32.mrf.mxu0
    %v1924 = vpop.f32.mrf.mxu0
    %v1925 = vadd.f32 %v1741, %v1924
    %v1926 = vpop.f32.mrf.mxu0
    %1927 = vmatprep.mubr.bf16.mxu0 0
    %1928 = vmatmul.mubr.bf16.gmra.mxu0 %v1717
    %v1929 = vpop.f32.mrf.mxu0
    %v1930 = vadd.f32 %v1741, %v1929
    %v1931 = vpop.f32.mrf.mxu0
    %v1932 = vpop.f32.mrf.mxu0
    %v1933 = vadd.f32 %v1741, %v1932
    %v1934 = vpop.f32.mrf.mxu0
    %1935 = vmatprep.mubr.bf16.mxu0 0
    %1936 = vmatmul.mubr.bf16.gmra.mxu0 %v1718
    %v1937 = vpop.f32.mrf.mxu0
    %v1938 = vadd.f32 %v1741, %v1937
    %v1939 = vpop.f32.mrf.mxu0
    %v1940 = vpop.f32.mrf.mxu0
    %v1941 = vadd.f32 %v1741, %v1940
    %v1942 = vpop.f32.mrf.mxu0
    %1943 = vmatprep.mubr.bf16.mxu0 0
    %1944 = vmatmul.mubr.bf16.gmra.mxu0 %v1719
    %v1945 = vpop.f32.mrf.mxu0
    %v1946 = vadd.f32 %v1741, %v1945
    %v1947 = vpop.f32.mrf.mxu0
    %v1948 = vpop.f32.mrf.mxu0
    %v1949 = vadd.f32 %v1741, %v1948
    %v1950 = vpop.f32.mrf.mxu0
    %1951 = vdwg.mxu0
    %v1952 = vpack.c.bf16 %v1829, %v1826
    %v1953 = vpack.c.bf16 %v1837, %v1834
    %v1954 = vpack.c.bf16 %v1845, %v1842
    %v1955 = vpack.c.bf16 %v1853, %v1850
    %v1956 = vpack.c.bf16 %v1861, %v1858
    %v1957 = vpack.c.bf16 %v1869, %v1866
    %v1958 = vpack.c.bf16 %v1877, %v1874
    %v1959 = vpack.c.bf16 %v1885, %v1882
    %v1960 = vpack.c.bf16 %v1893, %v1890
    %v1961 = vpack.c.bf16 %v1901, %v1898
    %v1962 = vpack.c.bf16 %v1909, %v1906
    %v1963 = vpack.c.bf16 %v1917, %v1914
    %v1964 = vpack.c.bf16 %v1925, %v1922
    %v1965 = vpack.c.bf16 %v1933, %v1930
    %v1966 = vpack.c.bf16 %v1941, %v1938
    %v1967 = vpack.c.bf16 %v1949, %v1946
    %v1984 = vunpack.c.l.b16 %v1952
    %v1985 = vunpack.c.h.b16 %v1952
    %v1986 = vunpack.c.l.b16 %v1953
    %v1987 = vunpack.c.h.b16 %v1953
    %v1988 = vunpack.c.l.b16 %v1954
    %v1989 = vunpack.c.h.b16 %v1954
    %v1990 = vunpack.c.l.b16 %v1955
    %v1991 = vunpack.c.h.b16 %v1955
    %v1992 = vunpack.c.l.b16 %v1956
    %v1993 = vunpack.c.h.b16 %v1956
    %v1994 = vunpack.c.l.b16 %v1957
    %v1995 = vunpack.c.h.b16 %v1957
    %v1996 = vunpack.c.l.b16 %v1958
    %v1997 = vunpack.c.h.b16 %v1958
    %v1998 = vunpack.c.l.b16 %v1959
    %v1999 = vunpack.c.h.b16 %v1959
    %v2000 = vunpack.c.l.b16 %v1960
    %v2001 = vunpack.c.h.b16 %v1960
    %v2002 = vunpack.c.l.b16 %v1961
    %v2003 = vunpack.c.h.b16 %v1961
    %v2004 = vunpack.c.l.b16 %v1962
    %v2005 = vunpack.c.h.b16 %v1962
    %v2006 = vunpack.c.l.b16 %v1963
    %v2007 = vunpack.c.h.b16 %v1963
    %v2008 = vunpack.c.l.b16 %v1964
    %v2009 = vunpack.c.h.b16 %v1964
    %v2010 = vunpack.c.l.b16 %v1965
    %v2011 = vunpack.c.h.b16 %v1965
    %v2012 = vunpack.c.l.b16 %v1966
    %v2013 = vunpack.c.h.b16 %v1966
    %v2014 = vunpack.c.l.b16 %v1967
    %v2015 = vunpack.c.h.b16 %v1967
    %v2016 = vpack.c.b16 %v1984, %v1984
    %v2017 = vpack.c.b16 %v1985, %v1985
    %v2018 = vpack.c.b16 %v1986, %v1986
    %v2019 = vpack.c.b16 %v1987, %v1987
    %v2020 = vpack.c.b16 %v1988, %v1988
    %v2021 = vpack.c.b16 %v1989, %v1989
    %v2022 = vpack.c.b16 %v1990, %v1990
    %v2023 = vpack.c.b16 %v1991, %v1991
    %v2024 = vpack.c.b16 %v1992, %v1992
    %v2025 = vpack.c.b16 %v1993, %v1993
    %v2026 = vpack.c.b16 %v1994, %v1994
    %v2027 = vpack.c.b16 %v1995, %v1995
    %v2028 = vpack.c.b16 %v1996, %v1996
    %v2029 = vpack.c.b16 %v1997, %v1997
    %v2030 = vpack.c.b16 %v1998, %v1998
    %v2031 = vpack.c.b16 %v1999, %v1999
    %v2032 = vpack.c.b16 %v2000, %v2000
    %v2033 = vpack.c.b16 %v2001, %v2001
    %v2034 = vpack.c.b16 %v2002, %v2002
    %v2035 = vpack.c.b16 %v2003, %v2003
    %v2036 = vpack.c.b16 %v2004, %v2004
    %v2037 = vpack.c.b16 %v2005, %v2005
    %v2038 = vpack.c.b16 %v2006, %v2006
    %v2039 = vpack.c.b16 %v2007, %v2007
    %v2040 = vpack.c.b16 %v2008, %v2008
    %v2041 = vpack.c.b16 %v2009, %v2009
    %v2042 = vpack.c.b16 %v2010, %v2010
    %v2043 = vpack.c.b16 %v2011, %v2011
    %v2044 = vpack.c.b16 %v2012, %v2012
    %v2045 = vpack.c.b16 %v2013, %v2013
    %v2046 = vpack.c.b16 %v2014, %v2014
    %v2047 = vpack.c.b16 %v2015, %v2015
    %2080 = vst [vmem:[#allocation7] sm:$0xf] %v2016
    %2081 = vst [vmem:[#allocation7 + $0x4] sm:$0xf] %v2017
    %2082 = vst [vmem:[#allocation7 + $0x8] sm:$0xf] %v2018
    %2083 = vst [vmem:[#allocation7 + $0xc] sm:$0xf] %v2019
    %2084 = vst [vmem:[#allocation7 + $0x10] sm:$0xf] %v2020
    %2085 = vst [vmem:[#allocation7 + $0x14] sm:$0xf] %v2021
    %2086 = vst [vmem:[#allocation7 + $0x18] sm:$0xf] %v2022
    %2087 = vst [vmem:[#allocation7 + $0x1c] sm:$0xf] %v2023
    %2088 = vst [vmem:[#allocation7 + $0x20] sm:$0xf] %v2024
    %2089 = vst [vmem:[#allocation7 + $0x24] sm:$0xf] %v2025
    %2090 = vst [vmem:[#allocation7 + $0x28] sm:$0xf] %v2026
    %2091 = vst [vmem:[#allocation7 + $0x2c] sm:$0xf] %v2027
    %2092 = vst [vmem:[#allocation7 + $0x30] sm:$0xf] %v2028
    %2093 = vst [vmem:[#allocation7 + $0x34] sm:$0xf] %v2029
    %2094 = vst [vmem:[#allocation7 + $0x38] sm:$0xf] %v2030
    %2095 = vst [vmem:[#allocation7 + $0x3c] sm:$0xf] %v2031
    %2096 = vst [vmem:[#allocation7 + $0x40] sm:$0xf] %v2032
    %2097 = vst [vmem:[#allocation7 + $0x44] sm:$0xf] %v2033
    %2098 = vst [vmem:[#allocation7 + $0x48] sm:$0xf] %v2034
    %2099 = vst [vmem:[#allocation7 + $0x4c] sm:$0xf] %v2035
    %2100 = vst [vmem:[#allocation7 + $0x50] sm:$0xf] %v2036
    %2101 = vst [vmem:[#allocation7 + $0x54] sm:$0xf] %v2037
    %2102 = vst [vmem:[#allocation7 + $0x58] sm:$0xf] %v2038
    %2103 = vst [vmem:[#allocation7 + $0x5c] sm:$0xf] %v2039
    %2104 = vst [vmem:[#allocation7 + $0x60] sm:$0xf] %v2040
    %2105 = vst [vmem:[#allocation7 + $0x64] sm:$0xf] %v2041
    %2106 = vst [vmem:[#allocation7 + $0x68] sm:$0xf] %v2042
    %2107 = vst [vmem:[#allocation7 + $0x6c] sm:$0xf] %v2043
    %2108 = vst [vmem:[#allocation7 + $0x70] sm:$0xf] %v2044
    %2109 = vst [vmem:[#allocation7 + $0x74] sm:$0xf] %v2045
    %2110 = vst [vmem:[#allocation7 + $0x78] sm:$0xf] %v2046
    %2111 = vst [vmem:[#allocation7 + $0x7c] sm:$0xf] %v2047
    // Predicated region
    $region46: #{tpu_custom_call.1} parent=1 // pred_check
      _
    $region47: #{tpu_custom_call.1} parent=1 // pred_check_branch
      %2113 = sbr.rel (0) target = $region49
    $region48: #{tpu_custom_call.1} parent=1 // pred_region
      %s2115 = ssub.s32 2048, 2048
      %2116 = vsyncadd [#allocation4], %s2115
      %s2117 = sshll.u32 [#allocation7], 4
      %s2118 = int_to_ptr.vmem [resolvable:$true] %s2117
      %2123 = dma.vmem_to_hbm [thread:$0]  %s2118, 2048, %s9, [#allocation4], 64, 64, 4
    $region49: #{tpu_custom_call.1} parent=1 // pred_fallthru
      _
    // Predicated region
    $region50: #{tpu_custom_call.1} parent=1 // pred_check
      _
    $region51: #{tpu_custom_call.1} parent=1 // pred_check_branch
      %2125 = sbr.rel (0) target = $region53
    $region52: #{tpu_custom_call.1} parent=1 // pred_region
      %2126 = dma.done [#allocation4], 2048
    $region53: #{tpu_custom_call.1} parent=1 // pred_fallthru
      _
    %2127 = vsyncpa [#allocation3], 1
    %2128 = vsyncpa [#allocation6], 1
    %2129 = vsyncpa [#allocation4], 1

// kernel: tpu_custom_call.1
$region0: #{tpu_custom_call.1}
  #allocation0 [shape = 'u32[]', space=smem, size = 0x4, offset = 0x4, fixed_abs, tag = 'smem constant byte address 0x4 - core index']
  #allocation1 [shape = 'u32[144,128]{1,0:T(1,128)}', space=vmem, size = 0x12000, scoped, tag = 'internal scratch']
  %s0 = inlined_call_operand.vmem [shape: f32[256,32], index: 0, kind: input, shape index: {}]
  %s1 = inlined_call_operand.vmem [shape: bf16[32,512], index: 1, kind: input, shape index: {}]
  %s2 = inlined_call_operand.vmem [shape: f32[1,512], index: 2, kind: input, shape index: {}]
  %s3 = inlined_call_operand.vmem [shape: bf16[512,128], index: 3, kind: input, shape index: {}]
  %s4 = inlined_call_operand.vmem [shape: f32[1,128], index: 4, kind: input, shape index: {}]
  %s5 = inlined_call_operand.hbm [shape: bf16[128,128], index: 5, kind: input, shape index: {}]
  %s6 = inlined_call_operand.vmem [shape: f32[1,128], index: 6, kind: input, shape index: {}]
  %s7 = inlined_call_operand.hbm [shape: bf16[128,128], index: 7, kind: input, shape index: {}]
  %s8 = inlined_call_operand.vmem [shape: f32[1,128], index: 8, kind: input, shape index: {}]
  %s9 = inlined_call_operand.hbm [shape: bf16[256,128], index: 9, kind: output, shape index: {}]
  %s10 = sld [smem:[#allocation0]]
  $region54: #{tpu_custom_call.1} parent=0
    _
  %s12 = ssub.s32 1, %s10
  %s13 = scalar_select 0, %s12, %s10
  $region1: #{tpu_custom_call.1} parent=0
    #allocation2 [shape = 'u8[32768]{0}', space=vmem, size = 0x8000, scoped, tag = 'input window, operand 5, single buffered']
    #allocation3 [shape = 's32[1]{0}', space=sflag, size = 0x4, scoped, tag = 'scoped memory for tpu_custom_call.1']
    #allocation4 [shape = 's32[1]{0}', space=sflag, size = 0x4, scoped, tag = 'scoped memory for tpu_custom_call.1']
    #allocation5 [shape = 'u8[32768]{0}', space=vmem, size = 0x8000, scoped, tag = 'input window, operand 7, single buffered']
    #allocation6 [shape = 's32[1]{0}', space=sflag, size = 0x4, scoped, tag = 'scoped memory for tpu_custom_call.1']
    #allocation7 [shape = 'u8[65536]{0}', space=vmem, size = 0x10000, scoped, tag = 'output window, operand 0, single buffered']
    %14 = vsyncpa [#allocation3], 0
    %15 = vsyncpa [#allocation6], 0
    %16 = vsyncpa [#allocation4], 0
    // Predicated region
    $region2: #{tpu_custom_call.1} parent=1 // pred_check
      _
    $region3: #{tpu_custom_call.1} parent=1 // pred_check_branch
      %18 = sbr.rel (0) target = $region5
    $region4: #{tpu_custom_call.1} parent=1 // pred_region
      _
    $region5: #{tpu_custom_call.1} parent=1 // pred_fallthru
      _
    // Predicated region
    $region6: #{tpu_custom_call.1} parent=1 // pred_check
      _
    $region7: #{tpu_custom_call.1} parent=1 // pred_check_branch
      %20 = sbr.rel (0) target = $region9
    $region8: #{tpu_custom_call.1} parent=1 // pred_region
      _
    $region9: #{tpu_custom_call.1} parent=1 // pred_fallthru
      _
    // Predicated region
    $region10: #{tpu_custom_call.1} parent=1 // pred_check
      _
    $region11: #{tpu_custom_call.1} parent=1 // pred_check_branch
      %22 = sbr.rel (0) target = $region13
    $region12: #{tpu_custom_call.1} parent=1 // pred_region
      _
    $region13: #{tpu_custom_call.1} parent=1 // pred_fallthru
      _
    // Predicated region
    $region14: #{tpu_custom_call.1} parent=1 // pred_check
      _
    $region15: #{tpu_custom_call.1} parent=1 // pred_check_branch
      %24 = sbr.rel (0) target = $region17
    $region16: #{tpu_custom_call.1} parent=1 // pred_region
      _
    $region17: #{tpu_custom_call.1} parent=1 // pred_fallthru
      _
    // Predicated region
    $region18: #{tpu_custom_call.1} parent=1 // pred_check
      _
    $region19: #{tpu_custom_call.1} parent=1 // pred_check_branch
      %26 = sbr.rel (0) target = $region21
    $region20: #{tpu_custom_call.1} parent=1 // pred_region
      _
    $region21: #{tpu_custom_call.1} parent=1 // pred_fallthru
      _
    // Predicated region
    $region22: #{tpu_custom_call.1} parent=1 // pred_check
      _
    $region23: #{tpu_custom_call.1} parent=1 // pred_check_branch
      %28 = sbr.rel (0) target = $region25
    $region24: #{tpu_custom_call.1} parent=1 // pred_region
      %s30 = ssub.s32 1024, 1024
      %31 = vsyncadd [#allocation3], %s30
      %s32 = sshll.u32 [#allocation2], 4
      %s33 = int_to_ptr.vmem [resolvable:$true] %s32
      %38 = dma.hbm_to_vmem [thread:$0]  %s5, 1024, %s33, [#allocation3], 64, 64, 4
    $region25: #{tpu_custom_call.1} parent=1 // pred_fallthru
      _
    // Predicated region
    $region26: #{tpu_custom_call.1} parent=1 // pred_check
      _
    $region27: #{tpu_custom_call.1} parent=1 // pred_check_branch
      %40 = sbr.rel (0) target = $region29
    $region28: #{tpu_custom_call.1} parent=1 // pred_region
      _
    $region29: #{tpu_custom_call.1} parent=1 // pred_fallthru
      _
    // Predicated region
    $region30: #{tpu_custom_call.1} parent=1 // pred_check
      _
    $region31: #{tpu_custom_call.1} parent=1 // pred_check_branch
      %42 = sbr.rel (0) target = $region33
    $region32: #{tpu_custom_call.1} parent=1 // pred_region
      %s44 = ssub.s32 1024, 1024
      %45 = vsyncadd [#allocation6], %s44
      %s46 = sshll.u32 [#allocation5], 4
      %s47 = int_to_ptr.vmem [resolvable:$true] %s46
      %52 = dma.hbm_to_vmem [thread:$0]  %s7, 1024, %s47, [#allocation6], 64, 64, 4
    $region33: #{tpu_custom_call.1} parent=1 // pred_fallthru
      _
    // Predicated region
    $region34: #{tpu_custom_call.1} parent=1 // pred_check
      _
    $region35: #{tpu_custom_call.1} parent=1 // pred_check_branch
      %54 = sbr.rel (0) target = $region37
    $region36: #{tpu_custom_call.1} parent=1 // pred_region
      _
    $region37: #{tpu_custom_call.1} parent=1 // pred_fallthru
      _
    // Predicated region
    $region38: #{tpu_custom_call.1} parent=1 // pred_check
      _
    $region39: #{tpu_custom_call.1} parent=1 // pred_check_branch
      %56 = sbr.rel (0) target = $region41
    $region40: #{tpu_custom_call.1} parent=1 // pred_region
      %57 = dma.done [#allocation3], 1024
    $region41: #{tpu_custom_call.1} parent=1 // pred_fallthru
      _
    // Predicated region
    $region42: #{tpu_custom_call.1} parent=1 // pred_check
      _
    $region43: #{tpu_custom_call.1} parent=1 // pred_check_branch
      %59 = sbr.rel (0) target = $region45
    $region44: #{tpu_custom_call.1} parent=1 // pred_region
      %60 = dma.done [#allocation6], 1024
    $region45: #{tpu_custom_call.1} parent=1 // pred_fallthru
      _
    %v62 = vld [vmem:[%s0] sm:$0xff]
    %v63 = vld [vmem:[%s0 + $0x8] sm:$0xff]
    %v64 = vld [vmem:[%s0 + $0x10] sm:$0xff]
    %v65 = vld [vmem:[%s0 + $0x18] sm:$0xff]
    %v66 = vld [vmem:[%s0 + $0x20] sm:$0xff]
    %v67 = vld [vmem:[%s0 + $0x28] sm:$0xff]
    %v68 = vld [vmem:[%s0 + $0x30] sm:$0xff]
    %v69 = vld [vmem:[%s0 + $0x38] sm:$0xff]
    %v70 = vld [vmem:[%s0 + $0x40] sm:$0xff]
    %v71 = vld [vmem:[%s0 + $0x48] sm:$0xff]
    %v72 = vld [vmem:[%s0 + $0x50] sm:$0xff]
    %v73 = vld [vmem:[%s0 + $0x58] sm:$0xff]
    %v74 = vld [vmem:[%s0 + $0x60] sm:$0xff]
    %v75 = vld [vmem:[%s0 + $0x68] sm:$0xff]
    %v76 = vld [vmem:[%s0 + $0x70] sm:$0xff]
    %v77 = vld [vmem:[%s0 + $0x78] sm:$0xff]
    %v78 = vld [vmem:[%s0 + $0x80] sm:$0xff]
    %v79 = vld [vmem:[%s0 + $0x88] sm:$0xff]
    %v80 = vld [vmem:[%s0 + $0x90] sm:$0xff]
    %v81 = vld [vmem:[%s0 + $0x98] sm:$0xff]
    %v82 = vld [vmem:[%s0 + $0xa0] sm:$0xff]
    %v83 = vld [vmem:[%s0 + $0xa8] sm:$0xff]
    %v84 = vld [vmem:[%s0 + $0xb0] sm:$0xff]
    %v85 = vld [vmem:[%s0 + $0xb8] sm:$0xff]
    %v86 = vld [vmem:[%s0 + $0xc0] sm:$0xff]
    %v87 = vld [vmem:[%s0 + $0xc8] sm:$0xff]
    %v88 = vld [vmem:[%s0 + $0xd0] sm:$0xff]
    %v89 = vld [vmem:[%s0 + $0xd8] sm:$0xff]
    %v90 = vld [vmem:[%s0 + $0xe0] sm:$0xff]
    %v91 = vld [vmem:[%s0 + $0xe8] sm:$0xff]
    %v92 = vld [vmem:[%s0 + $0xf0] sm:$0xff]
    %v93 = vld [vmem:[%s0 + $0xf8] sm:$0xff]
    %v94 = vpack.c.bf16 %v63, %v62
    %v95 = vpack.c.bf16 %v65, %v64
    %v96 = vpack.c.bf16 %v67, %v66
    %v97 = vpack.c.bf16 %v69, %v68
    %v98 = vpack.c.bf16 %v71, %v70
    %v99 = vpack.c.bf16 %v73, %v72
    %v100 = vpack.c.bf16 %v75, %v74
    %v101 = vpack.c.bf16 %v77, %v76
    %v102 = vpack.c.bf16 %v79, %v78
    %v103 = vpack.c.bf16 %v81, %v80
    %v104 = vpack.c.bf16 %v83, %v82
    %v105 = vpack.c.bf16 %v85, %v84
    %v106 = vpack.c.bf16 %v87, %v86
    %v107 = vpack.c.bf16 %v89, %v88
    %v108 = vpack.c.bf16 %v91, %v90
    %v109 = vpack.c.bf16 %v93, %v92
    %v110 = vld [vmem:[%s1] sm:$0xff]
    %v111 = vld [vmem:[%s1 + $0x8] sm:$0xff]
    %v112 = vld [vmem:[%s1 + $0x10] sm:$0xff]
    %v113 = vld [vmem:[%s1 + $0x18] sm:$0xff]
    %v114 = vld [vmem:[%s1 + $0x20] sm:$0xff]
    %v115 = vld [vmem:[%s1 + $0x28] sm:$0xff]
    %v116 = vld [vmem:[%s1 + $0x30] sm:$0xff]
    %v117 = vld [vmem:[%s1 + $0x38] sm:$0xff]
    %v118 = vld [vmem:[%s2] sm:$0xf]
    %v120 = vlaneseq
    %v121 = vshrl.u32 %v120, 7
    %v122 = vsub.s32 0, %v121
    %v123 = vrot.slane %v118, %v122
    %v124 = vlaneseq
    %v125 = vshrl.u32 %v124, 7
    %v126 = vsub.s32 1, %v125
    %v127 = vrot.slane %v118, %v126
    %v128 = vlaneseq
    %v129 = vshrl.u32 %v128, 7
    %v130 = vsub.s32 2, %v129
    %v131 = vrot.slane %v118, %v130
    %v132 = vlaneseq
    %v133 = vshrl.u32 %v132, 7
    %v134 = vsub.s32 3, %v133
    %v135 = vrot.slane %v118, %v134
    %v148 = vunpack.c.l.b16 %v110
    %v149 = vunpack.c.h.b16 %v110
    %v150 = vunpack.c.l.b16 %v111
    %v151 = vunpack.c.h.b16 %v111
    %v152 = vunpack.c.l.b16 %v112
    %v153 = vunpack.c.h.b16 %v112
    %v154 = vunpack.c.l.b16 %v113
    %v155 = vunpack.c.h.b16 %v113
    %v156 = vunpack.c.l.b16 %v114
    %v157 = vunpack.c.h.b16 %v114
    %v158 = vunpack.c.l.b16 %v115
    %v159 = vunpack.c.h.b16 %v115
    %v160 = vunpack.c.l.b16 %v116
    %v161 = vunpack.c.h.b16 %v116
    %v162 = vunpack.c.l.b16 %v117
    %v163 = vunpack.c.h.b16 %v117
    %v164 = vpack.c.b16 %v152, %v148
    %v165 = vpack.c.b16 %v153, %v149
    %v166 = vpack.c.b16 %v154, %v150
    %v167 = vpack.c.b16 %v155, %v151
    %v168 = vpack.c.b16 %v160, %v156
    %v169 = vpack.c.b16 %v161, %v157
    %v170 = vpack.c.b16 %v162, %v158
    %v171 = vpack.c.b16 %v163, %v159
    %vm180 = vcmask 261120
    %v182 = vsel %vm180, %v94, 0
    %v185 = vsel %vm180, %v95, 0
    %v188 = vsel %vm180, %v96, 0
    %v191 = vsel %vm180, %v97, 0
    %v194 = vsel %vm180, %v98, 0
    %v197 = vsel %vm180, %v99, 0
    %v200 = vsel %vm180, %v100, 0
    %v203 = vsel %vm180, %v101, 0
    %v206 = vsel %vm180, %v102, 0
    %v209 = vsel %vm180, %v103, 0
    %v212 = vsel %vm180, %v104, 0
    %v215 = vsel %vm180, %v105, 0
    %v218 = vsel %vm180, %v106, 0
    %v221 = vsel %vm180, %v107, 0
    %v224 = vsel %vm180, %v108, 0
    %v227 = vsel %vm180, %v109, 0
    %229 = vmatprep.subr.bf16.mxu0 0
    %230 = vmatpush1.bf16.msra.mxu0 0
    %231 = vmatprep.subr.bf16.mxu0 0
    %232 = vmatpush1.bf16.msra.mxu0 0
    %233 = vmatprep.subr.bf16.mxu0 0
    %234 = vmatpush1.bf16.msra.mxu0 0
    %235 = vmatprep.subr.bf16.mxu0 0
    %236 = vmatpush1.bf16.msra.mxu0 0
    %237 = vmatprep.subr.bf16.mxu0 0
    %238 = vmatpush1.bf16.msra.mxu0 0
    %239 = vmatprep.subr.bf16.mxu0 0
    %240 = vmatpush1.bf16.msra.mxu0 0
    %241 = vmatprep.subr.bf16.mxu0 %v169
    %242 = vmatpush1.bf16.msra.mxu0 %v168
    %243 = vmatprep.subr.bf16.mxu0 %v165
    %244 = vmatpush1.bf16.msra.mxu0 %v164
    %245 = vmatprep.subr.bf16.mxu0 0
    %246 = vmatpush2.bf16.msra.mxu0 0
    %247 = vmatprep.subr.bf16.mxu0 0
    %248 = vmatpush2.bf16.msra.mxu0 0
    %249 = vmatprep.subr.bf16.mxu0 0
    %250 = vmatpush2.bf16.msra.mxu0 0
    %251 = vmatprep.subr.bf16.mxu0 0
    %252 = vmatpush2.bf16.msra.mxu0 0
    %253 = vmatprep.subr.bf16.mxu0 0
    %254 = vmatpush2.bf16.msra.mxu0 0
    %255 = vmatprep.subr.bf16.mxu0 0
    %256 = vmatpush2.bf16.msra.mxu0 0
    %257 = vmatprep.subr.bf16.mxu0 0
    %258 = vmatpush2.bf16.msra.mxu0 0
    %259 = vmatprep.subr.bf16.mxu0 0
    %260 = vmatpush2.bf16.msra.mxu0 0
    %261 = vmatprep.mubr.bf16.mxu0 0
    %262 = vmatmul.mubr.bf16.gmra.mxu0 %v182
    %v263 = vpop.f32.mrf.mxu0
    %v264 = vadd.f32 %v123, %v263
    %v265 = vpop.f32.mrf.mxu0
    %v266 = vadd.f32 %v127, %v265
    %v267 = vpop.f32.mrf.mxu0
    %v268 = vadd.f32 %v123, %v267
    %v269 = vpop.f32.mrf.mxu0
    %v270 = vadd.f32 %v127, %v269
    %271 = vmatprep.mubr.bf16.mxu0 0
    %272 = vmatmul.mubr.bf16.gmra.mxu0 %v185
    %v273 = vpop.f32.mrf.mxu0
    %v274 = vadd.f32 %v123, %v273
    %v275 = vpop.f32.mrf.mxu0
    %v276 = vadd.f32 %v127, %v275
    %v277 = vpop.f32.mrf.mxu0
    %v278 = vadd.f32 %v123, %v277
    %v279 = vpop.f32.mrf.mxu0
    %v280 = vadd.f32 %v127, %v279
    %281 = vmatprep.mubr.bf16.mxu0 0
    %282 = vmatmul.mubr.bf16.gmra.mxu0 %v188
    %v283 = vpop.f32.mrf.mxu0
    %v284 = vadd.f32 %v123, %v283
    %v285 = vpop.f32.mrf.mxu0
    %v286 = vadd.f32 %v127, %v285
    %v287 = vpop.f32.mrf.mxu0
    %v288 = vadd.f32 %v123, %v287
    %v289 = vpop.f32.mrf.mxu0
    %v290 = vadd.f32 %v127, %v289
    %291 = vmatprep.mubr.bf16.mxu0 0
    %292 = vmatmul.mubr.bf16.gmra.mxu0 %v191
    %v293 = vpop.f32.mrf.mxu0
    %v294 = vadd.f32 %v123, %v293
    %v295 = vpop.f32.mrf.mxu0
    %v296 = vadd.f32 %v127, %v295
    %v297 = vpop.f32.mrf.mxu0
    %v298 = vadd.f32 %v123, %v297
    %v299 = vpop.f32.mrf.mxu0
    %v300 = vadd.f32 %v127, %v299
    %301 = vmatprep.mubr.bf16.mxu0 0
    %302 = vmatmul.mubr.bf16.gmra.mxu0 %v194
    %v303 = vpop.f32.mrf.mxu0
    %v304 = vadd.f32 %v123, %v303
    %v305 = vpop.f32.mrf.mxu0
    %v306 = vadd.f32 %v127, %v305
    %v307 = vpop.f32.mrf.mxu0
    %v308 = vadd.f32 %v123, %v307
    %v309 = vpop.f32.mrf.mxu0
    %v310 = vadd.f32 %v127, %v309
    %311 = vmatprep.mubr.bf16.mxu0 0
    %312 = vmatmul.mubr.bf16.gmra.mxu0 %v197
    %v313 = vpop.f32.mrf.mxu0
    %v314 = vadd.f32 %v123, %v313
    %v315 = vpop.f32.mrf.mxu0
    %v316 = vadd.f32 %v127, %v315
    %v317 = vpop.f32.mrf.mxu0
    %v318 = vadd.f32 %v123, %v317
    %v319 = vpop.f32.mrf.mxu0
    %v320 = vadd.f32 %v127, %v319
    %321 = vmatprep.mubr.bf16.mxu0 0
    %322 = vmatmul.mubr.bf16.gmra.mxu0 %v200
    %v323 = vpop.f32.mrf.mxu0
    %v324 = vadd.f32 %v123, %v323
    %v325 = vpop.f32.mrf.mxu0
    %v326 = vadd.f32 %v127, %v325
    %v327 = vpop.f32.mrf.mxu0
    %v328 = vadd.f32 %v123, %v327
    %v329 = vpop.f32.mrf.mxu0
    %v330 = vadd.f32 %v127, %v329
    %331 = vmatprep.mubr.bf16.mxu0 0
    %332 = vmatmul.mubr.bf16.gmra.mxu0 %v203
    %v333 = vpop.f32.mrf.mxu0
    %v334 = vadd.f32 %v123, %v333
    %v335 = vpop.f32.mrf.mxu0
    %v336 = vadd.f32 %v127, %v335
    %v337 = vpop.f32.mrf.mxu0
    %v338 = vadd.f32 %v123, %v337
    %v339 = vpop.f32.mrf.mxu0
    %v340 = vadd.f32 %v127, %v339
    %341 = vmatprep.mubr.bf16.mxu0 0
    %342 = vmatmul.mubr.bf16.gmra.mxu0 %v206
    %v343 = vpop.f32.mrf.mxu0
    %v344 = vadd.f32 %v123, %v343
    %v345 = vpop.f32.mrf.mxu0
    %v346 = vadd.f32 %v127, %v345
    %v347 = vpop.f32.mrf.mxu0
    %v348 = vadd.f32 %v123, %v347
    %v349 = vpop.f32.mrf.mxu0
    %v350 = vadd.f32 %v127, %v349
    %351 = vmatprep.mubr.bf16.mxu0 0
    %352 = vmatmul.mubr.bf16.gmra.mxu0 %v209
    %v353 = vpop.f32.mrf.mxu0
    %v354 = vadd.f32 %v123, %v353
    %v355 = vpop.f32.mrf.mxu0
    %v356 = vadd.f32 %v127, %v355
    %v357 = vpop.f32.mrf.mxu0
    %v358 = vadd.f32 %v123, %v357
    %v359 = vpop.f32.mrf.mxu0
    %v360 = vadd.f32 %v127, %v359
    %361 = vmatprep.mubr.bf16.mxu0 0
    %362 = vmatmul.mubr.bf16.gmra.mxu0 %v212
    %v363 = vpop.f32.mrf.mxu0
    %v364 = vadd.f32 %v123, %v363
    %v365 = vpop.f32.mrf.mxu0
    %v366 = vadd.f32 %v127, %v365
    %v367 = vpop.f32.mrf.mxu0
    %v368 = vadd.f32 %v123, %v367
    %v369 = vpop.f32.mrf.mxu0
    %v370 = vadd.f32 %v127, %v369
    %371 = vmatprep.mubr.bf16.mxu0 0
    %372 = vmatmul.mubr.bf16.gmra.mxu0 %v215
    %v373 = vpop.f32.mrf.mxu0
    %v374 = vadd.f32 %v123, %v373
    %v375 = vpop.f32.mrf.mxu0
    %v376 = vadd.f32 %v127, %v375
    %v377 = vpop.f32.mrf.mxu0
    %v378 = vadd.f32 %v123, %v377
    %v379 = vpop.f32.mrf.mxu0
    %v380 = vadd.f32 %v127, %v379
    %381 = vmatprep.mubr.bf16.mxu0 0
    %382 = vmatmul.mubr.bf16.gmra.mxu0 %v218
    %v383 = vpop.f32.mrf.mxu0
    %v384 = vadd.f32 %v123, %v383
    %v385 = vpop.f32.mrf.mxu0
    %v386 = vadd.f32 %v127, %v385
    %v387 = vpop.f32.mrf.mxu0
    %v388 = vadd.f32 %v123, %v387
    %v389 = vpop.f32.mrf.mxu0
    %v390 = vadd.f32 %v127, %v389
    %391 = vmatprep.mubr.bf16.mxu0 0
    %392 = vmatmul.mubr.bf16.gmra.mxu0 %v221
    %v393 = vpop.f32.mrf.mxu0
    %v394 = vadd.f32 %v123, %v393
    %v395 = vpop.f32.mrf.mxu0
    %v396 = vadd.f32 %v127, %v395
    %v397 = vpop.f32.mrf.mxu0
    %v398 = vadd.f32 %v123, %v397
    %v399 = vpop.f32.mrf.mxu0
    %v400 = vadd.f32 %v127, %v399
    %401 = vmatprep.mubr.bf16.mxu0 0
    %402 = vmatmul.mubr.bf16.gmra.mxu0 %v224
    %v403 = vpop.f32.mrf.mxu0
    %v404 = vadd.f32 %v123, %v403
    %v405 = vpop.f32.mrf.mxu0
    %v406 = vadd.f32 %v127, %v405
    %v407 = vpop.f32.mrf.mxu0
    %v408 = vadd.f32 %v123, %v407
    %v409 = vpop.f32.mrf.mxu0
    %v410 = vadd.f32 %v127, %v409
    %411 = vmatprep.mubr.bf16.mxu0 0
    %412 = vmatmul.mubr.bf16.gmra.mxu0 %v227
    %v413 = vpop.f32.mrf.mxu0
    %v414 = vadd.f32 %v123, %v413
    %v415 = vpop.f32.mrf.mxu0
    %v416 = vadd.f32 %v127, %v415
    %v417 = vpop.f32.mrf.mxu0
    %v418 = vadd.f32 %v123, %v417
    %v419 = vpop.f32.mrf.mxu0
    %v420 = vadd.f32 %v127, %v419
    %421 = vdwg.mxu0
    %422 = vmatprep.subr.bf16.mxu0 0
    %423 = vmatpush1.bf16.msra.mxu0 0
    %424 = vmatprep.subr.bf16.mxu0 0
    %425 = vmatpush1.bf16.msra.mxu0 0
    %426 = vmatprep.subr.bf16.mxu0 0
    %427 = vmatpush1.bf16.msra.mxu0 0
    %428 = vmatprep.subr.bf16.mxu0 0
    %429 = vmatpush1.bf16.msra.mxu0 0
    %430 = vmatprep.subr.bf16.mxu0 0
    %431 = vmatpush1.bf16.msra.mxu0 0
    %432 = vmatprep.subr.bf16.mxu0 0
    %433 = vmatpush1.bf16.msra.mxu0 0
    %434 = vmatprep.subr.bf16.mxu0 %v171
    %435 = vmatpush1.bf16.msra.mxu0 %v170
    %436 = vmatprep.subr.bf16.mxu0 %v167
    %437 = vmatpush1.bf16.msra.mxu0 %v166
    %438 = vmatprep.subr.bf16.mxu0 0
    %439 = vmatpush2.bf16.msra.mxu0 0
    %440 = vmatprep.subr.bf16.mxu0 0
    %441 = vmatpush2.bf16.msra.mxu0 0
    %442 = vmatprep.subr.bf16.mxu0 0
    %443 = vmatpush2.bf16.msra.mxu0 0
    %444 = vmatprep.subr.bf16.mxu0 0
    %445 = vmatpush2.bf16.msra.mxu0 0
    %446 = vmatprep.subr.bf16.mxu0 0
    %447 = vmatpush2.bf16.msra.mxu0 0
    %448 = vmatprep.subr.bf16.mxu0 0
    %449 = vmatpush2.bf16.msra.mxu0 0
    %450 = vmatprep.subr.bf16.mxu0 0
    %451 = vmatpush2.bf16.msra.mxu0 0
    %452 = vmatprep.subr.bf16.mxu0 0
    %453 = vmatpush2.bf16.msra.mxu0 0
    %454 = vmatprep.mubr.bf16.mxu0 0
    %455 = vmatmul.mubr.bf16.gmra.mxu0 %v182
    %v456 = vpop.f32.mrf.mxu0
    %v457 = vadd.f32 %v131, %v456
    %v458 = vpop.f32.mrf.mxu0
    %v459 = vadd.f32 %v135, %v458
    %v460 = vpop.f32.mrf.mxu0
    %v461 = vadd.f32 %v131, %v460
    %v462 = vpop.f32.mrf.mxu0
    %v463 = vadd.f32 %v135, %v462
    %464 = vmatprep.mubr.bf16.mxu0 0
    %465 = vmatmul.mubr.bf16.gmra.mxu0 %v185
    %v466 = vpop.f32.mrf.mxu0
    %v467 = vadd.f32 %v131, %v466
    %v468 = vpop.f32.mrf.mxu0
    %v469 = vadd.f32 %v135, %v468
    %v470 = vpop.f32.mrf.mxu0
    %v471 = vadd.f32 %v131, %v470
    %v472 = vpop.f32.mrf.mxu0
    %v473 = vadd.f32 %v135, %v472
    %474 = vmatprep.mubr.bf16.mxu0 0
    %475 = vmatmul.mubr.bf16.gmra.mxu0 %v188
    %v476 = vpop.f32.mrf.mxu0
    %v477 = vadd.f32 %v131, %v476
    %v478 = vpop.f32.mrf.mxu0
    %v479 = vadd.f32 %v135, %v478
    %v480 = vpop.f32.mrf.mxu0
    %v481 = vadd.f32 %v131, %v480
    %v482 = vpop.f32.mrf.mxu0
    %v483 = vadd.f32 %v135, %v482
    %484 = vmatprep.mubr.bf16.mxu0 0
    %485 = vmatmul.mubr.bf16.gmra.mxu0 %v191
    %v486 = vpop.f32.mrf.mxu0
    %v487 = vadd.f32 %v131, %v486
    %v488 = vpop.f32.mrf.mxu0
    %v489 = vadd.f32 %v135, %v488
    %v490 = vpop.f32.mrf.mxu0
    %v491 = vadd.f32 %v131, %v490
    %v492 = vpop.f32.mrf.mxu0
    %v493 = vadd.f32 %v135, %v492
    %494 = vmatprep.mubr.bf16.mxu0 0
    %495 = vmatmul.mubr.bf16.gmra.mxu0 %v194
    %v496 = vpop.f32.mrf.mxu0
    %v497 = vadd.f32 %v131, %v496
    %v498 = vpop.f32.mrf.mxu0
    %v499 = vadd.f32 %v135, %v498
    %v500 = vpop.f32.mrf.mxu0
    %v501 = vadd.f32 %v131, %v500
    %v502 = vpop.f32.mrf.mxu0
    %v503 = vadd.f32 %v135, %v502
    %504 = vmatprep.mubr.bf16.mxu0 0
    %505 = vmatmul.mubr.bf16.gmra.mxu0 %v197
    %v506 = vpop.f32.mrf.mxu0
    %v507 = vadd.f32 %v131, %v506
    %v508 = vpop.f32.mrf.mxu0
    %v509 = vadd.f32 %v135, %v508
    %v510 = vpop.f32.mrf.mxu0
    %v511 = vadd.f32 %v131, %v510
    %v512 = vpop.f32.mrf.mxu0
    %v513 = vadd.f32 %v135, %v512
    %514 = vmatprep.mubr.bf16.mxu0 0
    %515 = vmatmul.mubr.bf16.gmra.mxu0 %v200
    %v516 = vpop.f32.mrf.mxu0
    %v517 = vadd.f32 %v131, %v516
    %v518 = vpop.f32.mrf.mxu0
    %v519 = vadd.f32 %v135, %v518
    %v520 = vpop.f32.mrf.mxu0
    %v521 = vadd.f32 %v131, %v520
    %v522 = vpop.f32.mrf.mxu0
    %v523 = vadd.f32 %v135, %v522
    %524 = vmatprep.mubr.bf16.mxu0 0
    %525 = vmatmul.mubr.bf16.gmra.mxu0 %v203
    %v526 = vpop.f32.mrf.mxu0
    %v527 = vadd.f32 %v131, %v526
    %v528 = vpop.f32.mrf.mxu0
    %v529 = vadd.f32 %v135, %v528
    %v530 = vpop.f32.mrf.mxu0
    %v531 = vadd.f32 %v131, %v530
    %v532 = vpop.f32.mrf.mxu0
    %v533 = vadd.f32 %v135, %v532
    %534 = vmatprep.mubr.bf16.mxu0 0
    %535 = vmatmul.mubr.bf16.gmra.mxu0 %v206
    %v536 = vpop.f32.mrf.mxu0
    %v537 = vadd.f32 %v131, %v536
    %v538 = vpop.f32.mrf.mxu0
    %v539 = vadd.f32 %v135, %v538
    %v540 = vpop.f32.mrf.mxu0
    %v541 = vadd.f32 %v131, %v540
    %v542 = vpop.f32.mrf.mxu0
    %v543 = vadd.f32 %v135, %v542
    %544 = vmatprep.mubr.bf16.mxu0 0
    %545 = vmatmul.mubr.bf16.gmra.mxu0 %v209
    %v546 = vpop.f32.mrf.mxu0
    %v547 = vadd.f32 %v131, %v546
    %v548 = vpop.f32.mrf.mxu0
    %v549 = vadd.f32 %v135, %v548
    %v550 = vpop.f32.mrf.mxu0
    %v551 = vadd.f32 %v131, %v550
    %v552 = vpop.f32.mrf.mxu0
    %v553 = vadd.f32 %v135, %v552
    %554 = vmatprep.mubr.bf16.mxu0 0
    %555 = vmatmul.mubr.bf16.gmra.mxu0 %v212
    %v556 = vpop.f32.mrf.mxu0
    %v557 = vadd.f32 %v131, %v556
    %v558 = vpop.f32.mrf.mxu0
    %v559 = vadd.f32 %v135, %v558
    %v560 = vpop.f32.mrf.mxu0
    %v561 = vadd.f32 %v131, %v560
    %v562 = vpop.f32.mrf.mxu0
    %v563 = vadd.f32 %v135, %v562
    %564 = vmatprep.mubr.bf16.mxu0 0
    %565 = vmatmul.mubr.bf16.gmra.mxu0 %v215
    %v566 = vpop.f32.mrf.mxu0
    %v567 = vadd.f32 %v131, %v566
    %v568 = vpop.f32.mrf.mxu0
    %v569 = vadd.f32 %v135, %v568
    %v570 = vpop.f32.mrf.mxu0
    %v571 = vadd.f32 %v131, %v570
    %v572 = vpop.f32.mrf.mxu0
    %v573 = vadd.f32 %v135, %v572
    %574 = vmatprep.mubr.bf16.mxu0 0
    %575 = vmatmul.mubr.bf16.gmra.mxu0 %v218
    %v576 = vpop.f32.mrf.mxu0
    %v577 = vadd.f32 %v131, %v576
    %v578 = vpop.f32.mrf.mxu0
    %v579 = vadd.f32 %v135, %v578
    %v580 = vpop.f32.mrf.mxu0
    %v581 = vadd.f32 %v131, %v580
    %v582 = vpop.f32.mrf.mxu0
    %v583 = vadd.f32 %v135, %v582
    %584 = vmatprep.mubr.bf16.mxu0 0
    %585 = vmatmul.mubr.bf16.gmra.mxu0 %v221
    %v586 = vpop.f32.mrf.mxu0
    %v587 = vadd.f32 %v131, %v586
    %v588 = vpop.f32.mrf.mxu0
    %v589 = vadd.f32 %v135, %v588
    %v590 = vpop.f32.mrf.mxu0
    %v591 = vadd.f32 %v131, %v590
    %v592 = vpop.f32.mrf.mxu0
    %v593 = vadd.f32 %v135, %v592
    %594 = vmatprep.mubr.bf16.mxu0 0
    %595 = vmatmul.mubr.bf16.gmra.mxu0 %v224
    %v596 = vpop.f32.mrf.mxu0
    %v597 = vadd.f32 %v131, %v596
    %v598 = vpop.f32.mrf.mxu0
    %v599 = vadd.f32 %v135, %v598
    %v600 = vpop.f32.mrf.mxu0
    %v601 = vadd.f32 %v131, %v600
    %v602 = vpop.f32.mrf.mxu0
    %v603 = vadd.f32 %v135, %v602
    %604 = vmatprep.mubr.bf16.mxu0 0
    %605 = vmatmul.mubr.bf16.gmra.mxu0 %v227
    %v606 = vpop.f32.mrf.mxu0
    %v607 = vadd.f32 %v131, %v606
    %v608 = vpop.f32.mrf.mxu0
    %v609 = vadd.f32 %v135, %v608
    %v610 = vpop.f32.mrf.mxu0
    %v611 = vadd.f32 %v131, %v610
    %v612 = vpop.f32.mrf.mxu0
    %v613 = vadd.f32 %v135, %v612
    %614 = vdwg.mxu0
    %v615 = vmax.f32 %v264, 0.0
    %v616 = vmax.f32 %v266, 0.0
    %v617 = vmax.f32 %v457, 0.0
    %v618 = vmax.f32 %v459, 0.0
    %v619 = vmax.f32 %v268, 0.0
    %v620 = vmax.f32 %v270, 0.0
    %v621 = vmax.f32 %v461, 0.0
    %v622 = vmax.f32 %v463, 0.0
    %v623 = vmax.f32 %v274, 0.0
    %v624 = vmax.f32 %v276, 0.0
    %v625 = vmax.f32 %v467, 0.0
    %v626 = vmax.f32 %v469, 0.0
    %v627 = vmax.f32 %v278, 0.0
    %v628 = vmax.f32 %v280, 0.0
    %v629 = vmax.f32 %v471, 0.0
    %v630 = vmax.f32 %v473, 0.0
    %v631 = vmax.f32 %v284, 0.0
    %v632 = vmax.f32 %v286, 0.0
    %v633 = vmax.f32 %v477, 0.0
    %v634 = vmax.f32 %v479, 0.0
    %v635 = vmax.f32 %v288, 0.0
    %v636 = vmax.f32 %v290, 0.0
    %v637 = vmax.f32 %v481, 0.0
    %v638 = vmax.f32 %v483, 0.0
    %v639 = vmax.f32 %v294, 0.0
    %v640 = vmax.f32 %v296, 0.0
    %v641 = vmax.f32 %v487, 0.0
    %v642 = vmax.f32 %v489, 0.0
    %v643 = vmax.f32 %v298, 0.0
    %v644 = vmax.f32 %v300, 0.0
    %v645 = vmax.f32 %v491, 0.0
    %v646 = vmax.f32 %v493, 0.0
    %v647 = vmax.f32 %v304, 0.0
    %v648 = vmax.f32 %v306, 0.0
    %v649 = vmax.f32 %v497, 0.0
    %v650 = vmax.f32 %v499, 0.0
    %v651 = vmax.f32 %v308, 0.0
    %v652 = vmax.f32 %v310, 0.0
    %v653 = vmax.f32 %v501, 0.0
    %v654 = vmax.f32 %v503, 0.0
    %v655 = vmax.f32 %v314, 0.0
    %v656 = vmax.f32 %v316, 0.0
    %v657 = vmax.f32 %v507, 0.0
    %v658 = vmax.f32 %v509, 0.0
    %v659 = vmax.f32 %v318, 0.0
    %v660 = vmax.f32 %v320, 0.0
    %v661 = vmax.f32 %v511, 0.0
    %v662 = vmax.f32 %v513, 0.0
    %v663 = vmax.f32 %v324, 0.0
    %v664 = vmax.f32 %v326, 0.0
    %v665 = vmax.f32 %v517, 0.0
    %v666 = vmax.f32 %v519, 0.0
    %v667 = vmax.f32 %v328, 0.0
    %v668 = vmax.f32 %v330, 0.0
    %v669 = vmax.f32 %v521, 0.0
    %v670 = vmax.f32 %v523, 0.0
    %v671 = vmax.f32 %v334, 0.0
    %v672 = vmax.f32 %v336, 0.0
    %v673 = vmax.f32 %v527, 0.0
    %v674 = vmax.f32 %v529, 0.0
    %v675 = vmax.f32 %v338, 0.0
    %v676 = vmax.f32 %v340, 0.0
    %v677 = vmax.f32 %v531, 0.0
    %v678 = vmax.f32 %v533, 0.0
    %v679 = vmax.f32 %v344, 0.0
    %v680 = vmax.f32 %v346, 0.0
    %v681 = vmax.f32 %v537, 0.0
    %v682 = vmax.f32 %v539, 0.0
    %v683 = vmax.f32 %v348, 0.0
    %v684 = vmax.f32 %v350, 0.0
    %v685 = vmax.f32 %v541, 0.0
    %v686 = vmax.f32 %v543, 0.0
    %v687 = vmax.f32 %v354, 0.0
    %v688 = vmax.f32 %v356, 0.0
    %v689 = vmax.f32 %v547, 0.0
    %v690 = vmax.f32 %v549, 0.0
    %v691 = vmax.f32 %v358, 0.0
    %v692 = vmax.f32 %v360, 0.0
    %v693 = vmax.f32 %v551, 0.0
    %v694 = vmax.f32 %v553, 0.0
    %v695 = vmax.f32 %v364, 0.0
    %v696 = vmax.f32 %v366, 0.0
    %v697 = vmax.f32 %v557, 0.0
    %v698 = vmax.f32 %v559, 0.0
    %v699 = vmax.f32 %v368, 0.0
    %v700 = vmax.f32 %v370, 0.0
    %v701 = vmax.f32 %v561, 0.0
    %v702 = vmax.f32 %v563, 0.0
    %v703 = vmax.f32 %v374, 0.0
    %v704 = vmax.f32 %v376, 0.0
    %v705 = vmax.f32 %v567, 0.0
    %v706 = vmax.f32 %v569, 0.0
    %v707 = vmax.f32 %v378, 0.0
    %v708 = vmax.f32 %v380, 0.0
    %v709 = vmax.f32 %v571, 0.0
    %v710 = vmax.f32 %v573, 0.0
    %v711 = vmax.f32 %v384, 0.0
    %v712 = vmax.f32 %v386, 0.0
    %v713 = vmax.f32 %v577, 0.0
    %v714 = vmax.f32 %v579, 0.0
    %v715 = vmax.f32 %v388, 0.0
    %v716 = vmax.f32 %v390, 0.0
    %v717 = vmax.f32 %v581, 0.0
    %v718 = vmax.f32 %v583, 0.0
    %v719 = vmax.f32 %v394, 0.0
    %v720 = vmax.f32 %v396, 0.0
    %v721 = vmax.f32 %v587, 0.0
    %v722 = vmax.f32 %v589, 0.0
    %v723 = vmax.f32 %v398, 0.0
    %v724 = vmax.f32 %v400, 0.0
    %v725 = vmax.f32 %v591, 0.0
    %v726 = vmax.f32 %v593, 0.0
    %v727 = vmax.f32 %v404, 0.0
    %v728 = vmax.f32 %v406, 0.0
    %v729 = vmax.f32 %v597, 0.0
    %v730 = vmax.f32 %v599, 0.0
    %v731 = vmax.f32 %v408, 0.0
    %v732 = vmax.f32 %v410, 0.0
    %v733 = vmax.f32 %v601, 0.0
    %v734 = vmax.f32 %v603, 0.0
    %v735 = vmax.f32 %v414, 0.0
    %v736 = vmax.f32 %v416, 0.0
    %v737 = vmax.f32 %v607, 0.0
    %v738 = vmax.f32 %v609, 0.0
    %v739 = vmax.f32 %v418, 0.0
    %v740 = vmax.f32 %v420, 0.0
    %v741 = vmax.f32 %v611, 0.0
    %v742 = vmax.f32 %v613, 0.0
    %v743 = vpack.c.bf16 %v619, %v615
    %v744 = vpack.c.bf16 %v620, %v616
    %v745 = vpack.c.bf16 %v621, %v617
    %v746 = vpack.c.bf16 %v622, %v618
    %v747 = vpack.c.bf16 %v627, %v623
    %v748 = vpack.c.bf16 %v628, %v624
    %v749 = vpack.c.bf16 %v629, %v625
    %v750 = vpack.c.bf16 %v630, %v626
    %v751 = vpack.c.bf16 %v635, %v631
    %v752 = vpack.c.bf16 %v636, %v632
    %v753 = vpack.c.bf16 %v637, %v633
    %v754 = vpack.c.bf16 %v638, %v634
    %v755 = vpack.c.bf16 %v643, %v639
    %v756 = vpack.c.bf16 %v644, %v640
    %v757 = vpack.c.bf16 %v645, %v641
    %v758 = vpack.c.bf16 %v646, %v642
    %v759 = vpack.c.bf16 %v651, %v647
    %v760 = vpack.c.bf16 %v652, %v648
    %v761 = vpack.c.bf16 %v653, %v649
    %v762 = vpack.c.bf16 %v654, %v650
    %v763 = vpack.c.bf16 %v659, %v655
    %v764 = vpack.c.bf16 %v660, %v656
    %v765 = vpack.c.bf16 %v661, %v657
    %v766 = vpack.c.bf16 %v662, %v658
    %v767 = vpack.c.bf16 %v667, %v663
    %v768 = vpack.c.bf16 %v668, %v664
    %v769 = vpack.c.bf16 %v669, %v665
    %v770 = vpack.c.bf16 %v670, %v666
    %v771 = vpack.c.bf16 %v675, %v671
    %v772 = vpack.c.bf16 %v676, %v672
    %v773 = vpack.c.bf16 %v677, %v673
    %v774 = vpack.c.bf16 %v678, %v674
    %v775 = vpack.c.bf16 %v683, %v679
    %v776 = vpack.c.bf16 %v684, %v680
    %v777 = vpack.c.bf16 %v685, %v681
    %v778 = vpack.c.bf16 %v686, %v682
    %v779 = vpack.c.bf16 %v691, %v687
    %v780 = vpack.c.bf16 %v692, %v688
    %v781 = vpack.c.bf16 %v693, %v689
    %v782 = vpack.c.bf16 %v694, %v690
    %v783 = vpack.c.bf16 %v699, %v695
    %v784 = vpack.c.bf16 %v700, %v696
    %v785 = vpack.c.bf16 %v701, %v697
    %v786 = vpack.c.bf16 %v702, %v698
    %v787 = vpack.c.bf16 %v707, %v703
    %v788 = vpack.c.bf16 %v708, %v704
    %v789 = vpack.c.bf16 %v709, %v705
    %v790 = vpack.c.bf16 %v710, %v706
    %v791 = vpack.c.bf16 %v715, %v711
    %v792 = vpack.c.bf16 %v716, %v712
    %v793 = vpack.c.bf16 %v717, %v713
    %v794 = vpack.c.bf16 %v718, %v714
    %v795 = vpack.c.bf16 %v723, %v719
    %v796 = vpack.c.bf16 %v724, %v720
    %v797 = vpack.c.bf16 %v725, %v721
    %v798 = vpack.c.bf16 %v726, %v722
    %v799 = vpack.c.bf16 %v731, %v727
    %v800 = vpack.c.bf16 %v732, %v728
    %v801 = vpack.c.bf16 %v733, %v729
    %v802 = vpack.c.bf16 %v734, %v730
    %v803 = vpack.c.bf16 %v739, %v735
    %v804 = vpack.c.bf16 %v740, %v736
    %v805 = vpack.c.bf16 %v741, %v737
    %v806 = vpack.c.bf16 %v742, %v738
    %v807 = vld [vmem:[%s3] sm:$0xf]
    %v808 = vld [vmem:[%s3 + $0x4] sm:$0xf]
    %v809 = vld [vmem:[%s3 + $0x8] sm:$0xf]
    %v810 = vld [vmem:[%s3 + $0xc] sm:$0xf]
    %v811 = vld [vmem:[%s3 + $0x10] sm:$0xf]
    %v812 = vld [vmem:[%s3 + $0x14] sm:$0xf]
    %v813 = vld [vmem:[%s3 + $0x18] sm:$0xf]
    %v814 = vld [vmem:[%s3 + $0x1c] sm:$0xf]
    %v815 = vld [vmem:[%s3 + $0x20] sm:$0xf]
    %v816 = vld [vmem:[%s3 + $0x24] sm:$0xf]
    %v817 = vld [vmem:[%s3 + $0x28] sm:$0xf]
    %v818 = vld [vmem:[%s3 + $0x2c] sm:$0xf]
    %v819 = vld [vmem:[%s3 + $0x30] sm:$0xf]
    %v820 = vld [vmem:[%s3 + $0x34] sm:$0xf]
    %v821 = vld [vmem:[%s3 + $0x38] sm:$0xf]
    %v822 = vld [vmem:[%s3 + $0x3c] sm:$0xf]
    %v823 = vld [vmem:[%s3 + $0x40] sm:$0xf]
    %v824 = vld [vmem:[%s3 + $0x44] sm:$0xf]
    %v825 = vld [vmem:[%s3 + $0x48] sm:$0xf]
    %v826 = vld [vmem:[%s3 + $0x4c] sm:$0xf]
    %v827 = vld [vmem:[%s3 + $0x50] sm:$0xf]
    %v828 = vld [vmem:[%s3 + $0x54] sm:$0xf]
    %v829 = vld [vmem:[%s3 + $0x58] sm:$0xf]
    %v830 = vld [vmem:[%s3 + $0x5c] sm:$0xf]
    %v831 = vld [vmem:[%s3 + $0x60] sm:$0xf]
    %v832 = vld [vmem:[%s3 + $0x64] sm:$0xf]
    %v833 = vld [vmem:[%s3 + $0x68] sm:$0xf]
    %v834 = vld [vmem:[%s3 + $0x6c] sm:$0xf]
    %v835 = vld [vmem:[%s3 + $0x70] sm:$0xf]
    %v836 = vld [vmem:[%s3 + $0x74] sm:$0xf]
    %v837 = vld [vmem:[%s3 + $0x78] sm:$0xf]
    %v838 = vld [vmem:[%s3 + $0x7c] sm:$0xf]
    %v839 = vld [vmem:[%s3 + $0x80] sm:$0xf]
    %v840 = vld [vmem:[%s3 + $0x84] sm:$0xf]
    %v841 = vld [vmem:[%s3 + $0x88] sm:$0xf]
    %v842 = vld [vmem:[%s3 + $0x8c] sm:$0xf]
    %v843 = vld [vmem:[%s3 + $0x90] sm:$0xf]
    %v844 = vld [vmem:[%s3 + $0x94] sm:$0xf]
    %v845 = vld [vmem:[%s3 + $0x98] sm:$0xf]
    %v846 = vld [vmem:[%s3 + $0x9c] sm:$0xf]
    %v847 = vld [vmem:[%s3 + $0xa0] sm:$0xf]
    %v848 = vld [vmem:[%s3 + $0xa4] sm:$0xf]
    %v849 = vld [vmem:[%s3 + $0xa8] sm:$0xf]
    %v850 = vld [vmem:[%s3 + $0xac] sm:$0xf]
    %v851 = vld [vmem:[%s3 + $0xb0] sm:$0xf]
    %v852 = vld [vmem:[%s3 + $0xb4] sm:$0xf]
    %v853 = vld [vmem:[%s3 + $0xb8] sm:$0xf]
    %v854 = vld [vmem:[%s3 + $0xbc] sm:$0xf]
    %v855 = vld [vmem:[%s3 + $0xc0] sm:$0xf]
    %v856 = vld [vmem:[%s3 + $0xc4] sm:$0xf]
    %v857 = vld [vmem:[%s3 + $0xc8] sm:$0xf]
    %v858 = vld [vmem:[%s3 + $0xcc] sm:$0xf]
    %v859 = vld [vmem:[%s3 + $0xd0] sm:$0xf]
    %v860 = vld [vmem:[%s3 + $0xd4] sm:$0xf]
    %v861 = vld [vmem:[%s3 + $0xd8] sm:$0xf]
    %v862 = vld [vmem:[%s3 + $0xdc] sm:$0xf]
    %v863 = vld [vmem:[%s3 + $0xe0] sm:$0xf]
    %v864 = vld [vmem:[%s3 + $0xe4] sm:$0xf]
    %v865 = vld [vmem:[%s3 + $0xe8] sm:$0xf]
    %v866 = vld [vmem:[%s3 + $0xec] sm:$0xf]
    %v867 = vld [vmem:[%s3 + $0xf0] sm:$0xf]
    %v868 = vld [vmem:[%s3 + $0xf4] sm:$0xf]
    %v869 = vld [vmem:[%s3 + $0xf8] sm:$0xf]
    %v870 = vld [vmem:[%s3 + $0xfc] sm:$0xf]
    %v871 = vld [vmem:[%s4] sm:$0x1]
    %v873 = vlaneseq
    %v874 = vshrl.u32 %v873, 7
    %v875 = vsub.s32 0, %v874
    %v876 = vrot.slane %v871, %v875
    %v942 = vunpack.c.l.b16 %v807
    %v943 = vunpack.c.l.b16 %v808
    %v944 = vunpack.c.l.b16 %v809
    %v945 = vunpack.c.l.b16 %v810
    %v946 = vunpack.c.l.b16 %v811
    %v947 = vunpack.c.l.b16 %v812
    %v948 = vunpack.c.l.b16 %v813
    %v949 = vunpack.c.l.b16 %v814
    %v950 = vunpack.c.l.b16 %v815
    %v951 = vunpack.c.l.b16 %v816
    %v952 = vunpack.c.l.b16 %v817
    %v953 = vunpack.c.l.b16 %v818
    %v954 = vunpack.c.l.b16 %v819
    %v955 = vunpack.c.l.b16 %v820
    %v956 = vunpack.c.l.b16 %v821
    %v957 = vunpack.c.l.b16 %v822
    %v958 = vunpack.c.l.b16 %v823
    %v959 = vunpack.c.l.b16 %v824
    %v960 = vunpack.c.l.b16 %v825
    %v961 = vunpack.c.l.b16 %v826
    %v962 = vunpack.c.l.b16 %v827
    %v963 = vunpack.c.l.b16 %v828
    %v964 = vunpack.c.l.b16 %v829
    %v965 = vunpack.c.l.b16 %v830
    %v966 = vunpack.c.l.b16 %v831
    %v967 = vunpack.c.l.b16 %v832
    %v968 = vunpack.c.l.b16 %v833
    %v969 = vunpack.c.l.b16 %v834
    %v970 = vunpack.c.l.b16 %v835
    %v971 = vunpack.c.l.b16 %v836
    %v972 = vunpack.c.l.b16 %v837
    %v973 = vunpack.c.l.b16 %v838
    %v974 = vunpack.c.l.b16 %v839
    %v975 = vunpack.c.l.b16 %v840
    %v976 = vunpack.c.l.b16 %v841
    %v977 = vunpack.c.l.b16 %v842
    %v978 = vunpack.c.l.b16 %v843
    %v979 = vunpack.c.l.b16 %v844
    %v980 = vunpack.c.l.b16 %v845
    %v981 = vunpack.c.l.b16 %v846
    %v982 = vunpack.c.l.b16 %v847
    %v983 = vunpack.c.l.b16 %v848
    %v984 = vunpack.c.l.b16 %v849
    %v985 = vunpack.c.l.b16 %v850
    %v986 = vunpack.c.l.b16 %v851
    %v987 = vunpack.c.l.b16 %v852
    %v988 = vunpack.c.l.b16 %v853
    %v989 = vunpack.c.l.b16 %v854
    %v990 = vunpack.c.l.b16 %v855
    %v991 = vunpack.c.l.b16 %v856
    %v992 = vunpack.c.l.b16 %v857
    %v993 = vunpack.c.l.b16 %v858
    %v994 = vunpack.c.l.b16 %v859
    %v995 = vunpack.c.l.b16 %v860
    %v996 = vunpack.c.l.b16 %v861
    %v997 = vunpack.c.l.b16 %v862
    %v998 = vunpack.c.l.b16 %v863
    %v999 = vunpack.c.l.b16 %v864
    %v1000 = vunpack.c.l.b16 %v865
    %v1001 = vunpack.c.l.b16 %v866
    %v1002 = vunpack.c.l.b16 %v867
    %v1003 = vunpack.c.l.b16 %v868
    %v1004 = vunpack.c.l.b16 %v869
    %v1005 = vunpack.c.l.b16 %v870
    %v1006 = vpack.c.b16 %v943, %v942
    %v1007 = vpack.c.b16 %v945, %v944
    %v1008 = vpack.c.b16 %v947, %v946
    %v1009 = vpack.c.b16 %v949, %v948
    %v1010 = vpack.c.b16 %v951, %v950
    %v1011 = vpack.c.b16 %v953, %v952
    %v1012 = vpack.c.b16 %v955, %v954
    %v1013 = vpack.c.b16 %v957, %v956
    %v1014 = vpack.c.b16 %v959, %v958
    %v1015 = vpack.c.b16 %v961, %v960
    %v1016 = vpack.c.b16 %v963, %v962
    %v1017 = vpack.c.b16 %v965, %v964
    %v1018 = vpack.c.b16 %v967, %v966
    %v1019 = vpack.c.b16 %v969, %v968
    %v1020 = vpack.c.b16 %v971, %v970
    %v1021 = vpack.c.b16 %v973, %v972
    %v1022 = vpack.c.b16 %v975, %v974
    %v1023 = vpack.c.b16 %v977, %v976
    %v1024 = vpack.c.b16 %v979, %v978
    %v1025 = vpack.c.b16 %v981, %v980
    %v1026 = vpack.c.b16 %v983, %v982
    %v1027 = vpack.c.b16 %v985, %v984
    %v1028 = vpack.c.b16 %v987, %v986
    %v1029 = vpack.c.b16 %v989, %v988
    %v1030 = vpack.c.b16 %v991, %v990
    %v1031 = vpack.c.b16 %v993, %v992
    %v1032 = vpack.c.b16 %v995, %v994
    %v1033 = vpack.c.b16 %v997, %v996
    %v1034 = vpack.c.b16 %v999, %v998
    %v1035 = vpack.c.b16 %v1001, %v1000
    %v1036 = vpack.c.b16 %v1003, %v1002
    %v1037 = vpack.c.b16 %v1005, %v1004
    %1070 = vmatprep.subr.bf16.mxu0 0
    %1071 = vmatpush1.bf16.msra.mxu0 %v1013
    %1072 = vmatprep.subr.bf16.mxu0 0
    %1073 = vmatpush1.bf16.msra.mxu0 %v1012
    %1074 = vmatprep.subr.bf16.mxu0 0
    %1075 = vmatpush1.bf16.msra.mxu0 %v1011
    %1076 = vmatprep.subr.bf16.mxu0 0
    %1077 = vmatpush1.bf16.msra.mxu0 %v1010
    %1078 = vmatprep.subr.bf16.mxu0 0
    %1079 = vmatpush1.bf16.msra.mxu0 %v1009
    %1080 = vmatprep.subr.bf16.mxu0 0
    %1081 = vmatpush1.bf16.msra.mxu0 %v1008
    %1082 = vmatprep.subr.bf16.mxu0 0
    %1083 = vmatpush1.bf16.msra.mxu0 %v1007
    %1084 = vmatprep.subr.bf16.mxu0 0
    %1085 = vmatpush1.bf16.msra.mxu0 %v1006
    %1086 = vmatprep.subr.bf16.mxu0 0
    %1087 = vmatpush2.bf16.msra.mxu0 %v1021
    %1088 = vmatprep.subr.bf16.mxu0 0
    %1089 = vmatpush2.bf16.msra.mxu0 %v1020
    %1090 = vmatprep.subr.bf16.mxu0 0
    %1091 = vmatpush2.bf16.msra.mxu0 %v1019
    %1092 = vmatprep.subr.bf16.mxu0 0
    %1093 = vmatpush2.bf16.msra.mxu0 %v1018
    %1094 = vmatprep.subr.bf16.mxu0 0
    %1095 = vmatpush2.bf16.msra.mxu0 %v1017
    %1096 = vmatprep.subr.bf16.mxu0 0
    %1097 = vmatpush2.bf16.msra.mxu0 %v1016
    %1098 = vmatprep.subr.bf16.mxu0 0
    %1099 = vmatpush2.bf16.msra.mxu0 %v1015
    %1100 = vmatprep.subr.bf16.mxu0 0
    %1101 = vmatpush2.bf16.msra.mxu0 %v1014
    %1102 = vmatprep.mubr.bf16.mxu0 %v744
    %1103 = vmatmul.mubr.bf16.gmra.mxu0 %v743
    %v1104 = vpop.f32.mrf.mxu0
    %v1105 = vadd.f32 %v876, %v1104
    %v1106 = vpop.f32.mrf.mxu0
    %v1107 = vpop.f32.mrf.mxu0
    %v1108 = vadd.f32 %v876, %v1107
    %v1109 = vpop.f32.mrf.mxu0
    %1110 = vmatprep.mubr.bf16.mxu0 %v748
    %1111 = vmatmul.mubr.bf16.gmra.mxu0 %v747
    %v1112 = vpop.f32.mrf.mxu0
    %v1113 = vadd.f32 %v876, %v1112
    %v1114 = vpop.f32.mrf.mxu0
    %v1115 = vpop.f32.mrf.mxu0
    %v1116 = vadd.f32 %v876, %v1115
    %v1117 = vpop.f32.mrf.mxu0
    %1118 = vmatprep.mubr.bf16.mxu0 %v752
    %1119 = vmatmul.mubr.bf16.gmra.mxu0 %v751
    %v1120 = vpop.f32.mrf.mxu0
    %v1121 = vadd.f32 %v876, %v1120
    %v1122 = vpop.f32.mrf.mxu0
    %v1123 = vpop.f32.mrf.mxu0
    %v1124 = vadd.f32 %v876, %v1123
    %v1125 = vpop.f32.mrf.mxu0
    %1126 = vmatprep.mubr.bf16.mxu0 %v756
    %1127 = vmatmul.mubr.bf16.gmra.mxu0 %v755
    %v1128 = vpop.f32.mrf.mxu0
    %v1129 = vadd.f32 %v876, %v1128
    %v1130 = vpop.f32.mrf.mxu0
    %v1131 = vpop.f32.mrf.mxu0
    %v1132 = vadd.f32 %v876, %v1131
    %v1133 = vpop.f32.mrf.mxu0
    %1134 = vmatprep.mubr.bf16.mxu0 %v760
    %1135 = vmatmul.mubr.bf16.gmra.mxu0 %v759
    %v1136 = vpop.f32.mrf.mxu0
    %v1137 = vadd.f32 %v876, %v1136
    %v1138 = vpop.f32.mrf.mxu0
    %v1139 = vpop.f32.mrf.mxu0
    %v1140 = vadd.f32 %v876, %v1139
    %v1141 = vpop.f32.mrf.mxu0
    %1142 = vmatprep.mubr.bf16.mxu0 %v764
    %1143 = vmatmul.mubr.bf16.gmra.mxu0 %v763
    %v1144 = vpop.f32.mrf.mxu0
    %v1145 = vadd.f32 %v876, %v1144
    %v1146 = vpop.f32.mrf.mxu0
    %v1147 = vpop.f32.mrf.mxu0
    %v1148 = vadd.f32 %v876, %v1147
    %v1149 = vpop.f32.mrf.mxu0
    %1150 = vmatprep.mubr.bf16.mxu0 %v768
    %1151 = vmatmul.mubr.bf16.gmra.mxu0 %v767
    %v1152 = vpop.f32.mrf.mxu0
    %v1153 = vadd.f32 %v876, %v1152
    %v1154 = vpop.f32.mrf.mxu0
    %v1155 = vpop.f32.mrf.mxu0
    %v1156 = vadd.f32 %v876, %v1155
    %v1157 = vpop.f32.mrf.mxu0
    %1158 = vmatprep.mubr.bf16.mxu0 %v772
    %1159 = vmatmul.mubr.bf16.gmra.mxu0 %v771
    %v1160 = vpop.f32.mrf.mxu0
    %v1161 = vadd.f32 %v876, %v1160
    %v1162 = vpop.f32.mrf.mxu0
    %v1163 = vpop.f32.mrf.mxu0
    %v1164 = vadd.f32 %v876, %v1163
    %v1165 = vpop.f32.mrf.mxu0
    %1166 = vmatprep.mubr.bf16.mxu0 %v776
    %1167 = vmatmul.mubr.bf16.gmra.mxu0 %v775
    %v1168 = vpop.f32.mrf.mxu0
    %v1169 = vadd.f32 %v876, %v1168
    %v1170 = vpop.f32.mrf.mxu0
    %v1171 = vpop.f32.mrf.mxu0
    %v1172 = vadd.f32 %v876, %v1171
    %v1173 = vpop.f32.mrf.mxu0
    %1174 = vmatprep.mubr.bf16.mxu0 %v780
    %1175 = vmatmul.mubr.bf16.gmra.mxu0 %v779
    %v1176 = vpop.f32.mrf.mxu0
    %v1177 = vadd.f32 %v876, %v1176
    %v1178 = vpop.f32.mrf.mxu0
    %v1179 = vpop.f32.mrf.mxu0
    %v1180 = vadd.f32 %v876, %v1179
    %v1181 = vpop.f32.mrf.mxu0
    %1182 = vmatprep.mubr.bf16.mxu0 %v784
    %1183 = vmatmul.mubr.bf16.gmra.mxu0 %v783
    %v1184 = vpop.f32.mrf.mxu0
    %v1185 = vadd.f32 %v876, %v1184
    %v1186 = vpop.f32.mrf.mxu0
    %v1187 = vpop.f32.mrf.mxu0
    %v1188 = vadd.f32 %v876, %v1187
    %v1189 = vpop.f32.mrf.mxu0
    %1190 = vmatprep.mubr.bf16.mxu0 %v788
    %1191 = vmatmul.mubr.bf16.gmra.mxu0 %v787
    %v1192 = vpop.f32.mrf.mxu0
    %v1193 = vadd.f32 %v876, %v1192
    %v1194 = vpop.f32.mrf.mxu0
    %v1195 = vpop.f32.mrf.mxu0
    %v1196 = vadd.f32 %v876, %v1195
    %v1197 = vpop.f32.mrf.mxu0
    %1198 = vmatprep.mubr.bf16.mxu0 %v792
    %1199 = vmatmul.mubr.bf16.gmra.mxu0 %v791
    %v1200 = vpop.f32.mrf.mxu0
    %v1201 = vadd.f32 %v876, %v1200
    %v1202 = vpop.f32.mrf.mxu0
    %v1203 = vpop.f32.mrf.mxu0
    %v1204 = vadd.f32 %v876, %v1203
    %v1205 = vpop.f32.mrf.mxu0
    %1206 = vmatprep.mubr.bf16.mxu0 %v796
    %1207 = vmatmul.mubr.bf16.gmra.mxu0 %v795
    %v1208 = vpop.f32.mrf.mxu0
    %v1209 = vadd.f32 %v876, %v1208
    %v1210 = vpop.f32.mrf.mxu0
    %v1211 = vpop.f32.mrf.mxu0
    %v1212 = vadd.f32 %v876, %v1211
    %v1213 = vpop.f32.mrf.mxu0
    %1214 = vmatprep.mubr.bf16.mxu0 %v800
    %1215 = vmatmul.mubr.bf16.gmra.mxu0 %v799
    %v1216 = vpop.f32.mrf.mxu0
    %v1217 = vadd.f32 %v876, %v1216
    %v1218 = vpop.f32.mrf.mxu0
    %v1219 = vpop.f32.mrf.mxu0
    %v1220 = vadd.f32 %v876, %v1219
    %v1221 = vpop.f32.mrf.mxu0
    %1222 = vmatprep.mubr.bf16.mxu0 %v804
    %1223 = vmatmul.mubr.bf16.gmra.mxu0 %v803
    %v1224 = vpop.f32.mrf.mxu0
    %v1225 = vadd.f32 %v876, %v1224
    %v1226 = vpop.f32.mrf.mxu0
    %v1227 = vpop.f32.mrf.mxu0
    %v1228 = vadd.f32 %v876, %v1227
    %v1229 = vpop.f32.mrf.mxu0
    %1230 = vdwg.mxu0
    %1231 = vmatprep.subr.bf16.mxu0 0
    %1232 = vmatpush1.bf16.msra.mxu0 %v1029
    %1233 = vmatprep.subr.bf16.mxu0 0
    %1234 = vmatpush1.bf16.msra.mxu0 %v1028
    %1235 = vmatprep.subr.bf16.mxu0 0
    %1236 = vmatpush1.bf16.msra.mxu0 %v1027
    %1237 = vmatprep.subr.bf16.mxu0 0
    %1238 = vmatpush1.bf16.msra.mxu0 %v1026
    %1239 = vmatprep.subr.bf16.mxu0 0
    %1240 = vmatpush1.bf16.msra.mxu0 %v1025
    %1241 = vmatprep.subr.bf16.mxu0 0
    %1242 = vmatpush1.bf16.msra.mxu0 %v1024
    %1243 = vmatprep.subr.bf16.mxu0 0
    %1244 = vmatpush1.bf16.msra.mxu0 %v1023
    %1245 = vmatprep.subr.bf16.mxu0 0
    %1246 = vmatpush1.bf16.msra.mxu0 %v1022
    %1247 = vmatprep.subr.bf16.mxu0 0
    %1248 = vmatpush2.bf16.msra.mxu0 %v1037
    %1249 = vmatprep.subr.bf16.mxu0 0
    %1250 = vmatpush2.bf16.msra.mxu0 %v1036
    %1251 = vmatprep.subr.bf16.mxu0 0
    %1252 = vmatpush2.bf16.msra.mxu0 %v1035
    %1253 = vmatprep.subr.bf16.mxu0 0
    %1254 = vmatpush2.bf16.msra.mxu0 %v1034
    %1255 = vmatprep.subr.bf16.mxu0 0
    %1256 = vmatpush2.bf16.msra.mxu0 %v1033
    %1257 = vmatprep.subr.bf16.mxu0 0
    %1258 = vmatpush2.bf16.msra.mxu0 %v1032
    %1259 = vmatprep.subr.bf16.mxu0 0
    %1260 = vmatpush2.bf16.msra.mxu0 %v1031
    %1261 = vmatprep.subr.bf16.mxu0 0
    %1262 = vmatpush2.bf16.msra.mxu0 %v1030
    %1263 = vmatprep.mubr.bf16.mxu0 %v746
    %1264 = vmatmul.mubr.bf16.gmra.mxu0 %v745
    %v1265 = vpop.f32.mrf.mxu0
    %v1266 = vadd.f32 %v1105, %v1265
    %v1267 = vpop.f32.mrf.mxu0
    %v1268 = vpop.f32.mrf.mxu0
    %v1269 = vadd.f32 %v1108, %v1268
    %v1270 = vpop.f32.mrf.mxu0
    %1271 = vmatprep.mubr.bf16.mxu0 %v750
    %1272 = vmatmul.mubr.bf16.gmra.mxu0 %v749
    %v1273 = vpop.f32.mrf.mxu0
    %v1274 = vadd.f32 %v1113, %v1273
    %v1275 = vpop.f32.mrf.mxu0
    %v1276 = vpop.f32.mrf.mxu0
    %v1277 = vadd.f32 %v1116, %v1276
    %v1278 = vpop.f32.mrf.mxu0
    %1279 = vmatprep.mubr.bf16.mxu0 %v754
    %1280 = vmatmul.mubr.bf16.gmra.mxu0 %v753
    %v1281 = vpop.f32.mrf.mxu0
    %v1282 = vadd.f32 %v1121, %v1281
    %v1283 = vpop.f32.mrf.mxu0
    %v1284 = vpop.f32.mrf.mxu0
    %v1285 = vadd.f32 %v1124, %v1284
    %v1286 = vpop.f32.mrf.mxu0
    %1287 = vmatprep.mubr.bf16.mxu0 %v758
    %1288 = vmatmul.mubr.bf16.gmra.mxu0 %v757
    %v1289 = vpop.f32.mrf.mxu0
    %v1290 = vadd.f32 %v1129, %v1289
    %v1291 = vpop.f32.mrf.mxu0
    %v1292 = vpop.f32.mrf.mxu0
    %v1293 = vadd.f32 %v1132, %v1292
    %v1294 = vpop.f32.mrf.mxu0
    %1295 = vmatprep.mubr.bf16.mxu0 %v762
    %1296 = vmatmul.mubr.bf16.gmra.mxu0 %v761
    %v1297 = vpop.f32.mrf.mxu0
    %v1298 = vadd.f32 %v1137, %v1297
    %v1299 = vpop.f32.mrf.mxu0
    %v1300 = vpop.f32.mrf.mxu0
    %v1301 = vadd.f32 %v1140, %v1300
    %v1302 = vpop.f32.mrf.mxu0
    %1303 = vmatprep.mubr.bf16.mxu0 %v766
    %1304 = vmatmul.mubr.bf16.gmra.mxu0 %v765
    %v1305 = vpop.f32.mrf.mxu0
    %v1306 = vadd.f32 %v1145, %v1305
    %v1307 = vpop.f32.mrf.mxu0
    %v1308 = vpop.f32.mrf.mxu0
    %v1309 = vadd.f32 %v1148, %v1308
    %v1310 = vpop.f32.mrf.mxu0
    %1311 = vmatprep.mubr.bf16.mxu0 %v770
    %1312 = vmatmul.mubr.bf16.gmra.mxu0 %v769
    %v1313 = vpop.f32.mrf.mxu0
    %v1314 = vadd.f32 %v1153, %v1313
    %v1315 = vpop.f32.mrf.mxu0
    %v1316 = vpop.f32.mrf.mxu0
    %v1317 = vadd.f32 %v1156, %v1316
    %v1318 = vpop.f32.mrf.mxu0
    %1319 = vmatprep.mubr.bf16.mxu0 %v774
    %1320 = vmatmul.mubr.bf16.gmra.mxu0 %v773
    %v1321 = vpop.f32.mrf.mxu0
    %v1322 = vadd.f32 %v1161, %v1321
    %v1323 = vpop.f32.mrf.mxu0
    %v1324 = vpop.f32.mrf.mxu0
    %v1325 = vadd.f32 %v1164, %v1324
    %v1326 = vpop.f32.mrf.mxu0
    %1327 = vmatprep.mubr.bf16.mxu0 %v778
    %1328 = vmatmul.mubr.bf16.gmra.mxu0 %v777
    %v1329 = vpop.f32.mrf.mxu0
    %v1330 = vadd.f32 %v1169, %v1329
    %v1331 = vpop.f32.mrf.mxu0
    %v1332 = vpop.f32.mrf.mxu0
    %v1333 = vadd.f32 %v1172, %v1332
    %v1334 = vpop.f32.mrf.mxu0
    %1335 = vmatprep.mubr.bf16.mxu0 %v782
    %1336 = vmatmul.mubr.bf16.gmra.mxu0 %v781
    %v1337 = vpop.f32.mrf.mxu0
    %v1338 = vadd.f32 %v1177, %v1337
    %v1339 = vpop.f32.mrf.mxu0
    %v1340 = vpop.f32.mrf.mxu0
    %v1341 = vadd.f32 %v1180, %v1340
    %v1342 = vpop.f32.mrf.mxu0
    %1343 = vmatprep.mubr.bf16.mxu0 %v786
    %1344 = vmatmul.mubr.bf16.gmra.mxu0 %v785
    %v1345 = vpop.f32.mrf.mxu0
    %v1346 = vadd.f32 %v1185, %v1345
    %v1347 = vpop.f32.mrf.mxu0
    %v1348 = vpop.f32.mrf.mxu0
    %v1349 = vadd.f32 %v1188, %v1348
    %v1350 = vpop.f32.mrf.mxu0
    %1351 = vmatprep.mubr.bf16.mxu0 %v790
    %1352 = vmatmul.mubr.bf16.gmra.mxu0 %v789
    %v1353 = vpop.f32.mrf.mxu0
    %v1354 = vadd.f32 %v1193, %v1353
    %v1355 = vpop.f32.mrf.mxu0
    %v1356 = vpop.f32.mrf.mxu0
    %v1357 = vadd.f32 %v1196, %v1356
    %v1358 = vpop.f32.mrf.mxu0
    %1359 = vmatprep.mubr.bf16.mxu0 %v794
    %1360 = vmatmul.mubr.bf16.gmra.mxu0 %v793
    %v1361 = vpop.f32.mrf.mxu0
    %v1362 = vadd.f32 %v1201, %v1361
    %v1363 = vpop.f32.mrf.mxu0
    %v1364 = vpop.f32.mrf.mxu0
    %v1365 = vadd.f32 %v1204, %v1364
    %v1366 = vpop.f32.mrf.mxu0
    %1367 = vmatprep.mubr.bf16.mxu0 %v798
    %1368 = vmatmul.mubr.bf16.gmra.mxu0 %v797
    %v1369 = vpop.f32.mrf.mxu0
    %v1370 = vadd.f32 %v1209, %v1369
    %v1371 = vpop.f32.mrf.mxu0
    %v1372 = vpop.f32.mrf.mxu0
    %v1373 = vadd.f32 %v1212, %v1372
    %v1374 = vpop.f32.mrf.mxu0
    %1375 = vmatprep.mubr.bf16.mxu0 %v802
    %1376 = vmatmul.mubr.bf16.gmra.mxu0 %v801
    %v1377 = vpop.f32.mrf.mxu0
    %v1378 = vadd.f32 %v1217, %v1377
    %v1379 = vpop.f32.mrf.mxu0
    %v1380 = vpop.f32.mrf.mxu0
    %v1381 = vadd.f32 %v1220, %v1380
    %v1382 = vpop.f32.mrf.mxu0
    %1383 = vmatprep.mubr.bf16.mxu0 %v806
    %1384 = vmatmul.mubr.bf16.gmra.mxu0 %v805
    %v1385 = vpop.f32.mrf.mxu0
    %v1386 = vadd.f32 %v1225, %v1385
    %v1387 = vpop.f32.mrf.mxu0
    %v1388 = vpop.f32.mrf.mxu0
    %v1389 = vadd.f32 %v1228, %v1388
    %v1390 = vpop.f32.mrf.mxu0
    %1391 = vdwg.mxu0
    %v1392 = vmax.f32 %v1266, 0.0
    %v1393 = vmax.f32 %v1269, 0.0
    %v1394 = vmax.f32 %v1274, 0.0
    %v1395 = vmax.f32 %v1277, 0.0
    %v1396 = vmax.f32 %v1282, 0.0
    %v1397 = vmax.f32 %v1285, 0.0
    %v1398 = vmax.f32 %v1290, 0.0
    %v1399 = vmax.f32 %v1293, 0.0
    %v1400 = vmax.f32 %v1298, 0.0
    %v1401 = vmax.f32 %v1301, 0.0
    %v1402 = vmax.f32 %v1306, 0.0
    %v1403 = vmax.f32 %v1309, 0.0
    %v1404 = vmax.f32 %v1314, 0.0
    %v1405 = vmax.f32 %v1317, 0.0
    %v1406 = vmax.f32 %v1322, 0.0
    %v1407 = vmax.f32 %v1325, 0.0
    %v1408 = vmax.f32 %v1330, 0.0
    %v1409 = vmax.f32 %v1333, 0.0
    %v1410 = vmax.f32 %v1338, 0.0
    %v1411 = vmax.f32 %v1341, 0.0
    %v1412 = vmax.f32 %v1346, 0.0
    %v1413 = vmax.f32 %v1349, 0.0
    %v1414 = vmax.f32 %v1354, 0.0
    %v1415 = vmax.f32 %v1357, 0.0
    %v1416 = vmax.f32 %v1362, 0.0
    %v1417 = vmax.f32 %v1365, 0.0
    %v1418 = vmax.f32 %v1370, 0.0
    %v1419 = vmax.f32 %v1373, 0.0
    %v1420 = vmax.f32 %v1378, 0.0
    %v1421 = vmax.f32 %v1381, 0.0
    %v1422 = vmax.f32 %v1386, 0.0
    %v1423 = vmax.f32 %v1389, 0.0
    %v1424 = vpack.c.bf16 %v1393, %v1392
    %v1425 = vpack.c.bf16 %v1395, %v1394
    %v1426 = vpack.c.bf16 %v1397, %v1396
    %v1427 = vpack.c.bf16 %v1399, %v1398
    %v1428 = vpack.c.bf16 %v1401, %v1400
    %v1429 = vpack.c.bf16 %v1403, %v1402
    %v1430 = vpack.c.bf16 %v1405, %v1404
    %v1431 = vpack.c.bf16 %v1407, %v1406
    %v1432 = vpack.c.bf16 %v1409, %v1408
    %v1433 = vpack.c.bf16 %v1411, %v1410
    %v1434 = vpack.c.bf16 %v1413, %v1412
    %v1435 = vpack.c.bf16 %v1415, %v1414
    %v1436 = vpack.c.bf16 %v1417, %v1416
    %v1437 = vpack.c.bf16 %v1419, %v1418
    %v1438 = vpack.c.bf16 %v1421, %v1420
    %v1439 = vpack.c.bf16 %v1423, %v1422
    %v1440 = vld [vmem:[#allocation2] sm:$0xf]
    %v1441 = vld [vmem:[#allocation2 + $0x4] sm:$0xf]
    %v1442 = vld [vmem:[#allocation2 + $0x8] sm:$0xf]
    %v1443 = vld [vmem:[#allocation2 + $0xc] sm:$0xf]
    %v1444 = vld [vmem:[#allocation2 + $0x10] sm:$0xf]
    %v1445 = vld [vmem:[#allocation2 + $0x14] sm:$0xf]
    %v1446 = vld [vmem:[#allocation2 + $0x18] sm:$0xf]
    %v1447 = vld [vmem:[#allocation2 + $0x1c] sm:$0xf]
    %v1448 = vld [vmem:[#allocation2 + $0x20] sm:$0xf]
    %v1449 = vld [vmem:[#allocation2 + $0x24] sm:$0xf]
    %v1450 = vld [vmem:[#allocation2 + $0x28] sm:$0xf]
    %v1451 = vld [vmem:[#allocation2 + $0x2c] sm:$0xf]
    %v1452 = vld [vmem:[#allocation2 + $0x30] sm:$0xf]
    %v1453 = vld [vmem:[#allocation2 + $0x34] sm:$0xf]
    %v1454 = vld [vmem:[#allocation2 + $0x38] sm:$0xf]
    %v1455 = vld [vmem:[#allocation2 + $0x3c] sm:$0xf]
    %v1456 = vld [vmem:[%s6] sm:$0x1]
    %v1458 = vlaneseq
    %v1459 = vshrl.u32 %v1458, 7
    %v1460 = vsub.s32 0, %v1459
    %v1461 = vrot.slane %v1456, %v1460
    %v1479 = vunpack.c.l.b16 %v1440
    %v1480 = vunpack.c.l.b16 %v1441
    %v1481 = vunpack.c.l.b16 %v1442
    %v1482 = vunpack.c.l.b16 %v1443
    %v1483 = vunpack.c.l.b16 %v1444
    %v1484 = vunpack.c.l.b16 %v1445
    %v1485 = vunpack.c.l.b16 %v1446
    %v1486 = vunpack.c.l.b16 %v1447
    %v1487 = vunpack.c.l.b16 %v1448
    %v1488 = vunpack.c.l.b16 %v1449
    %v1489 = vunpack.c.l.b16 %v1450
    %v1490 = vunpack.c.l.b16 %v1451
    %v1491 = vunpack.c.l.b16 %v1452
    %v1492 = vunpack.c.l.b16 %v1453
    %v1493 = vunpack.c.l.b16 %v1454
    %v1494 = vunpack.c.l.b16 %v1455
    %v1495 = vpack.c.b16 %v1480, %v1479
    %v1496 = vpack.c.b16 %v1482, %v1481
    %v1497 = vpack.c.b16 %v1484, %v1483
    %v1498 = vpack.c.b16 %v1486, %v1485
    %v1499 = vpack.c.b16 %v1488, %v1487
    %v1500 = vpack.c.b16 %v1490, %v1489
    %v1501 = vpack.c.b16 %v1492, %v1491
    %v1502 = vpack.c.b16 %v1494, %v1493
    %1511 = vmatprep.subr.bf16.mxu0 0
    %1512 = vmatpush1.bf16.msra.mxu0 %v1502
    %1513 = vmatprep.subr.bf16.mxu0 0
    %1514 = vmatpush1.bf16.msra.mxu0 %v1501
    %1515 = vmatprep.subr.bf16.mxu0 0
    %1516 = vmatpush1.bf16.msra.mxu0 %v1500
    %1517 = vmatprep.subr.bf16.mxu0 0
    %1518 = vmatpush1.bf16.msra.mxu0 %v1499
    %1519 = vmatprep.subr.bf16.mxu0 0
    %1520 = vmatpush1.bf16.msra.mxu0 %v1498
    %1521 = vmatprep.subr.bf16.mxu0 0
    %1522 = vmatpush1.bf16.msra.mxu0 %v1497
    %1523 = vmatprep.subr.bf16.mxu0 0
    %1524 = vmatpush1.bf16.msra.mxu0 %v1496
    %1525 = vmatprep.subr.bf16.mxu0 0
    %1526 = vmatpush1.bf16.msra.mxu0 %v1495
    %1527 = vmatprep.subr.bf16.mxu0 0
    %1528 = vmatpush2.bf16.msra.mxu0 0
    %1529 = vmatprep.subr.bf16.mxu0 0
    %1530 = vmatpush2.bf16.msra.mxu0 0
    %1531 = vmatprep.subr.bf16.mxu0 0
    %1532 = vmatpush2.bf16.msra.mxu0 0
    %1533 = vmatprep.subr.bf16.mxu0 0
    %1534 = vmatpush2.bf16.msra.mxu0 0
    %1535 = vmatprep.subr.bf16.mxu0 0
    %1536 = vmatpush2.bf16.msra.mxu0 0
    %1537 = vmatprep.subr.bf16.mxu0 0
    %1538 = vmatpush2.bf16.msra.mxu0 0
    %1539 = vmatprep.subr.bf16.mxu0 0
    %1540 = vmatpush2.bf16.msra.mxu0 0
    %1541 = vmatprep.subr.bf16.mxu0 0
    %1542 = vmatpush2.bf16.msra.mxu0 0
    %1543 = vmatprep.mubr.bf16.mxu0 0
    %1544 = vmatmul.mubr.bf16.gmra.mxu0 %v1424
    %v1545 = vpop.f32.mrf.mxu0
    %v1546 = vadd.f32 %v1461, %v1545
    %v1547 = vpop.f32.mrf.mxu0
    %v1548 = vpop.f32.mrf.mxu0
    %v1549 = vadd.f32 %v1461, %v1548
    %v1550 = vpop.f32.mrf.mxu0
    %1551 = vmatprep.mubr.bf16.mxu0 0
    %1552 = vmatmul.mubr.bf16.gmra.mxu0 %v1425
    %v1553 = vpop.f32.mrf.mxu0
    %v1554 = vadd.f32 %v1461, %v1553
    %v1555 = vpop.f32.mrf.mxu0
    %v1556 = vpop.f32.mrf.mxu0
    %v1557 = vadd.f32 %v1461, %v1556
    %v1558 = vpop.f32.mrf.mxu0
    %1559 = vmatprep.mubr.bf16.mxu0 0
    %1560 = vmatmul.mubr.bf16.gmra.mxu0 %v1426
    %v1561 = vpop.f32.mrf.mxu0
    %v1562 = vadd.f32 %v1461, %v1561
    %v1563 = vpop.f32.mrf.mxu0
    %v1564 = vpop.f32.mrf.mxu0
    %v1565 = vadd.f32 %v1461, %v1564
    %v1566 = vpop.f32.mrf.mxu0
    %1567 = vmatprep.mubr.bf16.mxu0 0
    %1568 = vmatmul.mubr.bf16.gmra.mxu0 %v1427
    %v1569 = vpop.f32.mrf.mxu0
    %v1570 = vadd.f32 %v1461, %v1569
    %v1571 = vpop.f32.mrf.mxu0
    %v1572 = vpop.f32.mrf.mxu0
    %v1573 = vadd.f32 %v1461, %v1572
    %v1574 = vpop.f32.mrf.mxu0
    %1575 = vmatprep.mubr.bf16.mxu0 0
    %1576 = vmatmul.mubr.bf16.gmra.mxu0 %v1428
    %v1577 = vpop.f32.mrf.mxu0
    %v1578 = vadd.f32 %v1461, %v1577
    %v1579 = vpop.f32.mrf.mxu0
    %v1580 = vpop.f32.mrf.mxu0
    %v1581 = vadd.f32 %v1461, %v1580
    %v1582 = vpop.f32.mrf.mxu0
    %1583 = vmatprep.mubr.bf16.mxu0 0
    %1584 = vmatmul.mubr.bf16.gmra.mxu0 %v1429
    %v1585 = vpop.f32.mrf.mxu0
    %v1586 = vadd.f32 %v1461, %v1585
    %v1587 = vpop.f32.mrf.mxu0
    %v1588 = vpop.f32.mrf.mxu0
    %v1589 = vadd.f32 %v1461, %v1588
    %v1590 = vpop.f32.mrf.mxu0
    %1591 = vmatprep.mubr.bf16.mxu0 0
    %1592 = vmatmul.mubr.bf16.gmra.mxu0 %v1430
    %v1593 = vpop.f32.mrf.mxu0
    %v1594 = vadd.f32 %v1461, %v1593
    %v1595 = vpop.f32.mrf.mxu0
    %v1596 = vpop.f32.mrf.mxu0
    %v1597 = vadd.f32 %v1461, %v1596
    %v1598 = vpop.f32.mrf.mxu0
    %1599 = vmatprep.mubr.bf16.mxu0 0
    %1600 = vmatmul.mubr.bf16.gmra.mxu0 %v1431
    %v1601 = vpop.f32.mrf.mxu0
    %v1602 = vadd.f32 %v1461, %v1601
    %v1603 = vpop.f32.mrf.mxu0
    %v1604 = vpop.f32.mrf.mxu0
    %v1605 = vadd.f32 %v1461, %v1604
    %v1606 = vpop.f32.mrf.mxu0
    %1607 = vmatprep.mubr.bf16.mxu0 0
    %1608 = vmatmul.mubr.bf16.gmra.mxu0 %v1432
    %v1609 = vpop.f32.mrf.mxu0
    %v1610 = vadd.f32 %v1461, %v1609
    %v1611 = vpop.f32.mrf.mxu0
    %v1612 = vpop.f32.mrf.mxu0
    %v1613 = vadd.f32 %v1461, %v1612
    %v1614 = vpop.f32.mrf.mxu0
    %1615 = vmatprep.mubr.bf16.mxu0 0
    %1616 = vmatmul.mubr.bf16.gmra.mxu0 %v1433
    %v1617 = vpop.f32.mrf.mxu0
    %v1618 = vadd.f32 %v1461, %v1617
    %v1619 = vpop.f32.mrf.mxu0
    %v1620 = vpop.f32.mrf.mxu0
    %v1621 = vadd.f32 %v1461, %v1620
    %v1622 = vpop.f32.mrf.mxu0
    %1623 = vmatprep.mubr.bf16.mxu0 0
    %1624 = vmatmul.mubr.bf16.gmra.mxu0 %v1434
    %v1625 = vpop.f32.mrf.mxu0
    %v1626 = vadd.f32 %v1461, %v1625
    %v1627 = vpop.f32.mrf.mxu0
    %v1628 = vpop.f32.mrf.mxu0
    %v1629 = vadd.f32 %v1461, %v1628
    %v1630 = vpop.f32.mrf.mxu0
    %1631 = vmatprep.mubr.bf16.mxu0 0
    %1632 = vmatmul.mubr.bf16.gmra.mxu0 %v1435
    %v1633 = vpop.f32.mrf.mxu0
    %v1634 = vadd.f32 %v1461, %v1633
    %v1635 = vpop.f32.mrf.mxu0
    %v1636 = vpop.f32.mrf.mxu0
    %v1637 = vadd.f32 %v1461, %v1636
    %v1638 = vpop.f32.mrf.mxu0
    %1639 = vmatprep.mubr.bf16.mxu0 0
    %1640 = vmatmul.mubr.bf16.gmra.mxu0 %v1436
    %v1641 = vpop.f32.mrf.mxu0
    %v1642 = vadd.f32 %v1461, %v1641
    %v1643 = vpop.f32.mrf.mxu0
    %v1644 = vpop.f32.mrf.mxu0
    %v1645 = vadd.f32 %v1461, %v1644
    %v1646 = vpop.f32.mrf.mxu0
    %1647 = vmatprep.mubr.bf16.mxu0 0
    %1648 = vmatmul.mubr.bf16.gmra.mxu0 %v1437
    %v1649 = vpop.f32.mrf.mxu0
    %v1650 = vadd.f32 %v1461, %v1649
    %v1651 = vpop.f32.mrf.mxu0
    %v1652 = vpop.f32.mrf.mxu0
    %v1653 = vadd.f32 %v1461, %v1652
    %v1654 = vpop.f32.mrf.mxu0
    %1655 = vmatprep.mubr.bf16.mxu0 0
    %1656 = vmatmul.mubr.bf16.gmra.mxu0 %v1438
    %v1657 = vpop.f32.mrf.mxu0
    %v1658 = vadd.f32 %v1461, %v1657
    %v1659 = vpop.f32.mrf.mxu0
    %v1660 = vpop.f32.mrf.mxu0
    %v1661 = vadd.f32 %v1461, %v1660
    %v1662 = vpop.f32.mrf.mxu0
    %1663 = vmatprep.mubr.bf16.mxu0 0
    %1664 = vmatmul.mubr.bf16.gmra.mxu0 %v1439
    %v1665 = vpop.f32.mrf.mxu0
    %v1666 = vadd.f32 %v1461, %v1665
    %v1667 = vpop.f32.mrf.mxu0
    %v1668 = vpop.f32.mrf.mxu0
    %v1669 = vadd.f32 %v1461, %v1668
    %v1670 = vpop.f32.mrf.mxu0
    %1671 = vdwg.mxu0
    %v1672 = vmax.f32 %v1546, 0.0
    %v1673 = vmax.f32 %v1549, 0.0
    %v1674 = vmax.f32 %v1554, 0.0
    %v1675 = vmax.f32 %v1557, 0.0
    %v1676 = vmax.f32 %v1562, 0.0
    %v1677 = vmax.f32 %v1565, 0.0
    %v1678 = vmax.f32 %v1570, 0.0
    %v1679 = vmax.f32 %v1573, 0.0
    %v1680 = vmax.f32 %v1578, 0.0
    %v1681 = vmax.f32 %v1581, 0.0
    %v1682 = vmax.f32 %v1586, 0.0
    %v1683 = vmax.f32 %v1589, 0.0
    %v1684 = vmax.f32 %v1594, 0.0
    %v1685 = vmax.f32 %v1597, 0.0
    %v1686 = vmax.f32 %v1602, 0.0
    %v1687 = vmax.f32 %v1605, 0.0
    %v1688 = vmax.f32 %v1610, 0.0
    %v1689 = vmax.f32 %v1613, 0.0
    %v1690 = vmax.f32 %v1618, 0.0
    %v1691 = vmax.f32 %v1621, 0.0
    %v1692 = vmax.f32 %v1626, 0.0
    %v1693 = vmax.f32 %v1629, 0.0
    %v1694 = vmax.f32 %v1634, 0.0
    %v1695 = vmax.f32 %v1637, 0.0
    %v1696 = vmax.f32 %v1642, 0.0
    %v1697 = vmax.f32 %v1645, 0.0
    %v1698 = vmax.f32 %v1650, 0.0
    %v1699 = vmax.f32 %v1653, 0.0
    %v1700 = vmax.f32 %v1658, 0.0
    %v1701 = vmax.f32 %v1661, 0.0
    %v1702 = vmax.f32 %v1666, 0.0
    %v1703 = vmax.f32 %v1669, 0.0
    %v1704 = vpack.c.bf16 %v1673, %v1672
    %v1705 = vpack.c.bf16 %v1675, %v1674
    %v1706 = vpack.c.bf16 %v1677, %v1676
    %v1707 = vpack.c.bf16 %v1679, %v1678
    %v1708 = vpack.c.bf16 %v1681, %v1680
    %v1709 = vpack.c.bf16 %v1683, %v1682
    %v1710 = vpack.c.bf16 %v1685, %v1684
    %v1711 = vpack.c.bf16 %v1687, %v1686
    %v1712 = vpack.c.bf16 %v1689, %v1688
    %v1713 = vpack.c.bf16 %v1691, %v1690
    %v1714 = vpack.c.bf16 %v1693, %v1692
    %v1715 = vpack.c.bf16 %v1695, %v1694
    %v1716 = vpack.c.bf16 %v1697, %v1696
    %v1717 = vpack.c.bf16 %v1699, %v1698
    %v1718 = vpack.c.bf16 %v1701, %v1700
    %v1719 = vpack.c.bf16 %v1703, %v1702
    %v1720 = vld [vmem:[#allocation5] sm:$0xf]
    %v1721 = vld [vmem:[#allocation5 + $0x4] sm:$0xf]
    %v1722 = vld [vmem:[#allocation5 + $0x8] sm:$0xf]
    %v1723 = vld [vmem:[#allocation5 + $0xc] sm:$0xf]
    %v1724 = vld [vmem:[#allocation5 + $0x10] sm:$0xf]
    %v1725 = vld [vmem:[#allocation5 + $0x14] sm:$0xf]
    %v1726 = vld [vmem:[#allocation5 + $0x18] sm:$0xf]
    %v1727 = vld [vmem:[#allocation5 + $0x1c] sm:$0xf]
    %v1728 = vld [vmem:[#allocation5 + $0x20] sm:$0xf]
    %v1729 = vld [vmem:[#allocation5 + $0x24] sm:$0xf]
    %v1730 = vld [vmem:[#allocation5 + $0x28] sm:$0xf]
    %v1731 = vld [vmem:[#allocation5 + $0x2c] sm:$0xf]
    %v1732 = vld [vmem:[#allocation5 + $0x30] sm:$0xf]
    %v1733 = vld [vmem:[#allocation5 + $0x34] sm:$0xf]
    %v1734 = vld [vmem:[#allocation5 + $0x38] sm:$0xf]
    %v1735 = vld [vmem:[#allocation5 + $0x3c] sm:$0xf]
    %v1736 = vld [vmem:[%s8] sm:$0x1]
    %v1738 = vlaneseq
    %v1739 = vshrl.u32 %v1738, 7
    %v1740 = vsub.s32 0, %v1739
    %v1741 = vrot.slane %v1736, %v1740
    %v1759 = vunpack.c.l.b16 %v1720
    %v1760 = vunpack.c.l.b16 %v1721
    %v1761 = vunpack.c.l.b16 %v1722
    %v1762 = vunpack.c.l.b16 %v1723
    %v1763 = vunpack.c.l.b16 %v1724
    %v1764 = vunpack.c.l.b16 %v1725
    %v1765 = vunpack.c.l.b16 %v1726
    %v1766 = vunpack.c.l.b16 %v1727
    %v1767 = vunpack.c.l.b16 %v1728
    %v1768 = vunpack.c.l.b16 %v1729
    %v1769 = vunpack.c.l.b16 %v1730
    %v1770 = vunpack.c.l.b16 %v1731
    %v1771 = vunpack.c.l.b16 %v1732
    %v1772 = vunpack.c.l.b16 %v1733
    %v1773 = vunpack.c.l.b16 %v1734
    %v1774 = vunpack.c.l.b16 %v1735
    %v1775 = vpack.c.b16 %v1760, %v1759
    %v1776 = vpack.c.b16 %v1762, %v1761
    %v1777 = vpack.c.b16 %v1764, %v1763
    %v1778 = vpack.c.b16 %v1766, %v1765
    %v1779 = vpack.c.b16 %v1768, %v1767
    %v1780 = vpack.c.b16 %v1770, %v1769
    %v1781 = vpack.c.b16 %v1772, %v1771
    %v1782 = vpack.c.b16 %v1774, %v1773
    %1791 = vmatprep.subr.bf16.mxu0 0
    %1792 = vmatpush1.bf16.msra.mxu0 %v1782
    %1793 = vmatprep.subr.bf16.mxu0 0
    %1794 = vmatpush1.bf16.msra.mxu0 %v1781
    %1795 = vmatprep.subr.bf16.mxu0 0
    %1796 = vmatpush1.bf16.msra.mxu0 %v1780
    %1797 = vmatprep.subr.bf16.mxu0 0
    %1798 = vmatpush1.bf16.msra.mxu0 %v1779
    %1799 = vmatprep.subr.bf16.mxu0 0
    %1800 = vmatpush1.bf16.msra.mxu0 %v1778
    %1801 = vmatprep.subr.bf16.mxu0 0
    %1802 = vmatpush1.bf16.msra.mxu0 %v1777
    %1803 = vmatprep.subr.bf16.mxu0 0
    %1804 = vmatpush1.bf16.msra.mxu0 %v1776
    %1805 = vmatprep.subr.bf16.mxu0 0
    %1806 = vmatpush1.bf16.msra.mxu0 %v1775
    %1807 = vmatprep.subr.bf16.mxu0 0
    %1808 = vmatpush2.bf16.msra.mxu0 0
    %1809 = vmatprep.subr.bf16.mxu0 0
    %1810 = vmatpush2.bf16.msra.mxu0 0
    %1811 = vmatprep.subr.bf16.mxu0 0
    %1812 = vmatpush2.bf16.msra.mxu0 0
    %1813 = vmatprep.subr.bf16.mxu0 0
    %1814 = vmatpush2.bf16.msra.mxu0 0
    %1815 = vmatprep.subr.bf16.mxu0 0
    %1816 = vmatpush2.bf16.msra.mxu0 0
    %1817 = vmatprep.subr.bf16.mxu0 0
    %1818 = vmatpush2.bf16.msra.mxu0 0
    %1819 = vmatprep.subr.bf16.mxu0 0
    %1820 = vmatpush2.bf16.msra.mxu0 0
    %1821 = vmatprep.subr.bf16.mxu0 0
    %1822 = vmatpush2.bf16.msra.mxu0 0
    %1823 = vmatprep.mubr.bf16.mxu0 0
    %1824 = vmatmul.mubr.bf16.gmra.mxu0 %v1704
    %v1825 = vpop.f32.mrf.mxu0
    %v1826 = vadd.f32 %v1741, %v1825
    %v1827 = vpop.f32.mrf.mxu0
    %v1828 = vpop.f32.mrf.mxu0
    %v1829 = vadd.f32 %v1741, %v1828
    %v1830 = vpop.f32.mrf.mxu0
    %1831 = vmatprep.mubr.bf16.mxu0 0
    %1832 = vmatmul.mubr.bf16.gmra.mxu0 %v1705
    %v1833 = vpop.f32.mrf.mxu0
    %v1834 = vadd.f32 %v1741, %v1833
    %v1835 = vpop.f32.mrf.mxu0
    %v1836 = vpop.f32.mrf.mxu0
    %v1837 = vadd.f32 %v1741, %v1836
    %v1838 = vpop.f32.mrf.mxu0
    %1839 = vmatprep.mubr.bf16.mxu0 0
    %1840 = vmatmul.mubr.bf16.gmra.mxu0 %v1706
    %v1841 = vpop.f32.mrf.mxu0
    %v1842 = vadd.f32 %v1741, %v1841
    %v1843 = vpop.f32.mrf.mxu0
    %v1844 = vpop.f32.mrf.mxu0
    %v1845 = vadd.f32 %v1741, %v1844
    %v1846 = vpop.f32.mrf.mxu0
    %1847 = vmatprep.mubr.bf16.mxu0 0
    %1848 = vmatmul.mubr.bf16.gmra.mxu0 %v1707
    %v1849 = vpop.f32.mrf.mxu0
    %v1850 = vadd.f32 %v1741, %v1849
    %v1851 = vpop.f32.mrf.mxu0
    %v1852 = vpop.f32.mrf.mxu0
    %v1853 = vadd.f32 %v1741, %v1852
    %v1854 = vpop.f32.mrf.mxu0
    %1855 = vmatprep.mubr.bf16.mxu0 0
    %1856 = vmatmul.mubr.bf16.gmra.mxu0 %v1708
    %v1857 = vpop.f32.mrf.mxu0
    %v1858 = vadd.f32 %v1741, %v1857
    %v1859 = vpop.f32.mrf.mxu0
    %v1860 = vpop.f32.mrf.mxu0
    %v1861 = vadd.f32 %v1741, %v1860
    %v1862 = vpop.f32.mrf.mxu0
    %1863 = vmatprep.mubr.bf16.mxu0 0
    %1864 = vmatmul.mubr.bf16.gmra.mxu0 %v1709
    %v1865 = vpop.f32.mrf.mxu0
    %v1866 = vadd.f32 %v1741, %v1865
    %v1867 = vpop.f32.mrf.mxu0
    %v1868 = vpop.f32.mrf.mxu0
    %v1869 = vadd.f32 %v1741, %v1868
    %v1870 = vpop.f32.mrf.mxu0
    %1871 = vmatprep.mubr.bf16.mxu0 0
    %1872 = vmatmul.mubr.bf16.gmra.mxu0 %v1710
    %v1873 = vpop.f32.mrf.mxu0
    %v1874 = vadd.f32 %v1741, %v1873
    %v1875 = vpop.f32.mrf.mxu0
    %v1876 = vpop.f32.mrf.mxu0
    %v1877 = vadd.f32 %v1741, %v1876
    %v1878 = vpop.f32.mrf.mxu0
    %1879 = vmatprep.mubr.bf16.mxu0 0
    %1880 = vmatmul.mubr.bf16.gmra.mxu0 %v1711
    %v1881 = vpop.f32.mrf.mxu0
    %v1882 = vadd.f32 %v1741, %v1881
    %v1883 = vpop.f32.mrf.mxu0
    %v1884 = vpop.f32.mrf.mxu0
    %v1885 = vadd.f32 %v1741, %v1884
    %v1886 = vpop.f32.mrf.mxu0
    %1887 = vmatprep.mubr.bf16.mxu0 0
    %1888 = vmatmul.mubr.bf16.gmra.mxu0 %v1712
    %v1889 = vpop.f32.mrf.mxu0
    %v1890 = vadd.f32 %v1741, %v1889
    %v1891 = vpop.f32.mrf.mxu0
    %v1892 = vpop.f32.mrf.mxu0
    %v1893 = vadd.f32 %v1741, %v1892
    %v1894 = vpop.f32.mrf.mxu0
    %1895 = vmatprep.mubr.bf16.mxu0 0
    %1896 = vmatmul.mubr.bf16.gmra.mxu0 %v1713
    %v1897 = vpop.f32.mrf.mxu0
    %v1898 = vadd.f32 %v1741, %v1897
    %v1899 = vpop.f32.mrf.mxu0
    %v1900 = vpop.f32.mrf.mxu0
    %v1901 = vadd.f32 %v1741, %v1900
    %v1902 = vpop.f32.mrf.mxu0
    %1903 = vmatprep.mubr.bf16.mxu0 0
    %1904 = vmatmul.mubr.bf16.gmra.mxu0 %v1714
    %v1905 = vpop.f32.mrf.mxu0
    %v1906 = vadd.f32 %v1741, %v1905
    %v1907 = vpop.f32.mrf.mxu0
    %v1908 = vpop.f32.mrf.mxu0
    %v1909 = vadd.f32 %v1741, %v1908
    %v1910 = vpop.f32.mrf.mxu0
    %1911 = vmatprep.mubr.bf16.mxu0 0
    %1912 = vmatmul.mubr.bf16.gmra.mxu0 %v1715
    %v1913 = vpop.f32.mrf.mxu0
    %v1914 = vadd.f32 %v1741, %v1913
    %v1915 = vpop.f32.mrf.mxu0
    %v1916 = vpop.f32.mrf.mxu0
    %v1917 = vadd.f32 %v1741, %v1916
    %v1918 = vpop.f32.mrf.mxu0
    %1919 = vmatprep.mubr.bf16.mxu0 0
    %1920 = vmatmul.mubr.bf16.gmra.mxu0 %v1716
    %v1921 = vpop.f32.mrf.mxu0
    %v1922 = vadd.f32 %v1741, %v1921
    %v1923 = vpop.f32.mrf.mxu0
    %v1924 = vpop.f32.mrf.mxu0
    %v1925 = vadd.f32 %v1741, %v1924
    %v1926 = vpop.f32.mrf.mxu0
    %1927 = vmatprep.mubr.bf16.mxu0 0
    %1928 = vmatmul.mubr.bf16.gmra.mxu0 %v1717
    %v1929 = vpop.f32.mrf.mxu0
    %v1930 = vadd.f32 %v1741, %v1929
    %v1931 = vpop.f32.mrf.mxu0
    %v1932 = vpop.f32.mrf.mxu0
    %v1933 = vadd.f32 %v1741, %v1932
    %v1934 = vpop.f32.mrf.mxu0
    %1935 = vmatprep.mubr.bf16.mxu0 0
    %1936 = vmatmul.mubr.bf16.gmra.mxu0 %v1718
    %v1937 = vpop.f32.mrf.mxu0
    %v1938 = vadd.f32 %v1741, %v1937
    %v1939 = vpop.f32.mrf.mxu0
    %v1940 = vpop.f32.mrf.mxu0
    %v1941 = vadd.f32 %v1741, %v1940
    %v1942 = vpop.f32.mrf.mxu0
    %1943 = vmatprep.mubr.bf16.mxu0 0
    %1944 = vmatmul.mubr.bf16.gmra.mxu0 %v1719
    %v1945 = vpop.f32.mrf.mxu0
    %v1946 = vadd.f32 %v1741, %v1945
    %v1947 = vpop.f32.mrf.mxu0
    %v1948 = vpop.f32.mrf.mxu0
    %v1949 = vadd.f32 %v1741, %v1948
    %v1950 = vpop.f32.mrf.mxu0
    %1951 = vdwg.mxu0
    %v1952 = vpack.c.bf16 %v1829, %v1826
    %v1953 = vpack.c.bf16 %v1837, %v1834
    %v1954 = vpack.c.bf16 %v1845, %v1842
    %v1955 = vpack.c.bf16 %v1853, %v1850
    %v1956 = vpack.c.bf16 %v1861, %v1858
    %v1957 = vpack.c.bf16 %v1869, %v1866
    %v1958 = vpack.c.bf16 %v1877, %v1874
    %v1959 = vpack.c.bf16 %v1885, %v1882
    %v1960 = vpack.c.bf16 %v1893, %v1890
    %v1961 = vpack.c.bf16 %v1901, %v1898
    %v1962 = vpack.c.bf16 %v1909, %v1906
    %v1963 = vpack.c.bf16 %v1917, %v1914
    %v1964 = vpack.c.bf16 %v1925, %v1922
    %v1965 = vpack.c.bf16 %v1933, %v1930
    %v1966 = vpack.c.bf16 %v1941, %v1938
    %v1967 = vpack.c.bf16 %v1949, %v1946
    %v1984 = vunpack.c.l.b16 %v1952
    %v1985 = vunpack.c.h.b16 %v1952
    %v1986 = vunpack.c.l.b16 %v1953
    %v1987 = vunpack.c.h.b16 %v1953
    %v1988 = vunpack.c.l.b16 %v1954
    %v1989 = vunpack.c.h.b16 %v1954
    %v1990 = vunpack.c.l.b16 %v1955
    %v1991 = vunpack.c.h.b16 %v1955
    %v1992 = vunpack.c.l.b16 %v1956
    %v1993 = vunpack.c.h.b16 %v1956
    %v1994 = vunpack.c.l.b16 %v1957
    %v1995 = vunpack.c.h.b16 %v1957
    %v1996 = vunpack.c.l.b16 %v1958
    %v1997 = vunpack.c.h.b16 %v1958
    %v1998 = vunpack.c.l.b16 %v1959
    %v1999 = vunpack.c.h.b16 %v1959
    %v2000 = vunpack.c.l.b16 %v1960
    %v2001 = vunpack.c.h.b16 %v1960
    %v2002 = vunpack.c.l.b16 %v1961
    %v2003 = vunpack.c.h.b16 %v1961
    %v2004 = vunpack.c.l.b16 %v1962
    %v2005 = vunpack.c.h.b16 %v1962
    %v2006 = vunpack.c.l.b16 %v1963
    %v2007 = vunpack.c.h.b16 %v1963
    %v2008 = vunpack.c.l.b16 %v1964
    %v2009 = vunpack.c.h.b16 %v1964
    %v2010 = vunpack.c.l.b16 %v1965
    %v2011 = vunpack.c.h.b16 %v1965
    %v2012 = vunpack.c.l.b16 %v1966
    %v2013 = vunpack.c.h.b16 %v1966
    %v2014 = vunpack.c.l.b16 %v1967
    %v2015 = vunpack.c.h.b16 %v1967
    %v2016 = vpack.c.b16 %v1984, %v1984
    %v2017 = vpack.c.b16 %v1985, %v1985
    %v2018 = vpack.c.b16 %v1986, %v1986
    %v2019 = vpack.c.b16 %v1987, %v1987
    %v2020 = vpack.c.b16 %v1988, %v1988
    %v2021 = vpack.c.b16 %v1989, %v1989
    %v2022 = vpack.c.b16 %v1990, %v1990
    %v2023 = vpack.c.b16 %v1991, %v1991
    %v2024 = vpack.c.b16 %v1992, %v1992
    %v2025 = vpack.c.b16 %v1993, %v1993
    %v2026 = vpack.c.b16 %v1994, %v1994
    %v2027 = vpack.c.b16 %v1995, %v1995
    %v2028 = vpack.c.b16 %v1996, %v1996
    %v2029 = vpack.c.b16 %v1997, %v1997
    %v2030 = vpack.c.b16 %v1998, %v1998
    %v2031 = vpack.c.b16 %v1999, %v1999
    %v2032 = vpack.c.b16 %v2000, %v2000
    %v2033 = vpack.c.b16 %v2001, %v2001
    %v2034 = vpack.c.b16 %v2002, %v2002
    %v2035 = vpack.c.b16 %v2003, %v2003
    %v2036 = vpack.c.b16 %v2004, %v2004
    %v2037 = vpack.c.b16 %v2005, %v2005
    %v2038 = vpack.c.b16 %v2006, %v2006
    %v2039 = vpack.c.b16 %v2007, %v2007
    %v2040 = vpack.c.b16 %v2008, %v2008
    %v2041 = vpack.c.b16 %v2009, %v2009
    %v2042 = vpack.c.b16 %v2010, %v2010
    %v2043 = vpack.c.b16 %v2011, %v2011
    %v2044 = vpack.c.b16 %v2012, %v2012
    %v2045 = vpack.c.b16 %v2013, %v2013
    %v2046 = vpack.c.b16 %v2014, %v2014
    %v2047 = vpack.c.b16 %v2015, %v2015
    %2080 = vst [vmem:[#allocation7] sm:$0xf] %v2016
    %2081 = vst [vmem:[#allocation7 + $0x4] sm:$0xf] %v2017
    %2082 = vst [vmem:[#allocation7 + $0x8] sm:$0xf] %v2018
    %2083 = vst [vmem:[#allocation7 + $0xc] sm:$0xf] %v2019
    %2084 = vst [vmem:[#allocation7 + $0x10] sm:$0xf] %v2020
    %2085 = vst [vmem:[#allocation7 + $0x14] sm:$0xf] %v2021
    %2086 = vst [vmem:[#allocation7 + $0x18] sm:$0xf] %v2022
    %2087 = vst [vmem:[#allocation7 + $0x1c] sm:$0xf] %v2023
    %2088 = vst [vmem:[#allocation7 + $0x20] sm:$0xf] %v2024
    %2089 = vst [vmem:[#allocation7 + $0x24] sm:$0xf] %v2025
    %2090 = vst [vmem:[#allocation7 + $0x28] sm:$0xf] %v2026
    %2091 = vst [vmem:[#allocation7 + $0x2c] sm:$0xf] %v2027
    %2092 = vst [vmem:[#allocation7 + $0x30] sm:$0xf] %v2028
    %2093 = vst [vmem:[#allocation7 + $0x34] sm:$0xf] %v2029
    %2094 = vst [vmem:[#allocation7 + $0x38] sm:$0xf] %v2030
    %2095 = vst [vmem:[#allocation7 + $0x3c] sm:$0xf] %v2031
    %2096 = vst [vmem:[#allocation7 + $0x40] sm:$0xf] %v2032
    %2097 = vst [vmem:[#allocation7 + $0x44] sm:$0xf] %v2033
    %2098 = vst [vmem:[#allocation7 + $0x48] sm:$0xf] %v2034
    %2099 = vst [vmem:[#allocation7 + $0x4c] sm:$0xf] %v2035
    %2100 = vst [vmem:[#allocation7 + $0x50] sm:$0xf] %v2036
    %2101 = vst [vmem:[#allocation7 + $0x54] sm:$0xf] %v2037
    %2102 = vst [vmem:[#allocation7 + $0x58] sm:$0xf] %v2038
    %2103 = vst [vmem:[#allocation7 + $0x5c] sm:$0xf] %v2039
    %2104 = vst [vmem:[#allocation7 + $0x60] sm:$0xf] %v2040
    %2105 = vst [vmem:[#allocation7 + $0x64] sm:$0xf] %v2041
    %2106 = vst [vmem:[#allocation7 + $0x68] sm:$0xf] %v2042
    %2107 = vst [vmem:[#allocation7 + $0x6c] sm:$0xf] %v2043
    %2108 = vst [vmem:[#allocation7 + $0x70] sm:$0xf] %v2044
    %2109 = vst [vmem:[#allocation7 + $0x74] sm:$0xf] %v2045
    %2110 = vst [vmem:[#allocation7 + $0x78] sm:$0xf] %v2046
    %2111 = vst [vmem:[#allocation7 + $0x7c] sm:$0xf] %v2047
    // Predicated region
    $region46: #{tpu_custom_call.1} parent=1 // pred_check
      _
    $region47: #{tpu_custom_call.1} parent=1 // pred_check_branch
      %2113 = sbr.rel (0) target = $region49
    $region48: #{tpu_custom_call.1} parent=1 // pred_region
      %s2115 = ssub.s32 2048, 2048
      %2116 = vsyncadd [#allocation4], %s2115
      %s2117 = sshll.u32 [#allocation7], 4
      %s2118 = int_to_ptr.vmem [resolvable:$true] %s2117
      %2123 = dma.vmem_to_hbm [thread:$0]  %s2118, 2048, %s9, [#allocation4], 64, 64, 4
    $region49: #{tpu_custom_call.1} parent=1 // pred_fallthru
      _
    // Predicated region
    $region50: #{tpu_custom_call.1} parent=1 // pred_check
      _
    $region51: #{tpu_custom_call.1} parent=1 // pred_check_branch
      %2125 = sbr.rel (0) target = $region53
    $region52: #{tpu_custom_call.1} parent=1 // pred_region
      %2126 = dma.done [#allocation4], 2048
    $region53: #{tpu_custom_call.1} parent=1 // pred_fallthru
      _
    %2127 = vsyncpa [#allocation3], 1
    %2128 = vsyncpa [#allocation6], 1
    %2129 = vsyncpa [#allocation4], 1

</llo_original>
